<compile_context>
chip_gen: v7x
topology: tpu7x:2x2x1
jax: 0.10.0
libtpu: 0.0.40
codegen_flags: <defaults>
</compile_context>

<pallas_src>
import functools
import math

import jax
import jax.numpy as jnp
from jax.experimental import pallas as pl
from jax.experimental.pallas import tpu as pltpu


def multihead_kernel(q_ref, k_ref, v_ref, wq_ref, wk_ref, wv_ref, w_ref,
                     o_ref, ctx_ref, *, num_heads, head_dim, approx_recip):
    tb, lq, _ = q_ref.shape
    _, lk, _ = v_ref.shape
    dh = head_dim
    cdt = wq_ref.dtype                         # compute dtype (MXU operands)

    m_q = tb * lq
    m_k = tb * lk

    q2 = q_ref[...].reshape(m_q, q_ref.shape[-1])   # leading-dim flatten only
    k2 = k_ref[...].reshape(m_k, k_ref.shape[-1])
    v2 = v_ref[...].reshape(m_k, v_ref.shape[-1])

    # Q/K/V projections at their true width N = H*dh; the cast to the compute
    # dtype is fused into the matmul epilogue (no f32 copies kept alive).
    qp = jnp.dot(q2, wq_ref[...], preferred_element_type=jnp.float32).astype(cdt)
    kp = jnp.dot(k2, wk_ref[...], preferred_element_type=jnp.float32).astype(cdt)
    vp = jnp.dot(v2, wv_ref[...], preferred_element_type=jnp.float32).astype(cdt)

    # Per-head attention; each head's context goes into the shared ctx slab.
    for h in range(num_heads):
        sl = slice(h * dh, (h + 1) * dh)
        qh = qp[:, sl].reshape(tb, lq, dh)
        kh = kp[:, sl].reshape(tb, lk, dh)
        vh = vp[:, sl].reshape(tb, lk, dh)

        # scores: contract on last dims (transpose consumed by the MXU, no
        # materialized kh.T); 1/sqrt(dh) already folded into the Q weights.
        s = jax.lax.dot_general(
            qh, kh, dimension_numbers=(((2,), (2,)), ((0,), (0,))),
            preferred_element_type=jnp.float32)             # [TB, Lq, Lk] f32

        # numerically stable softmax in f32; divide -> EUP reciprocal
        s = s - jnp.max(s, axis=-1, keepdims=True)
        e = jnp.exp(s)
        p = e * pl.reciprocal(jnp.sum(e, axis=-1, keepdims=True),
                              approx=approx_recip)

        ctx = jax.lax.dot_general(
            p.astype(cdt), vh, dimension_numbers=(((2,), (1,)), ((0,), (0,))),
            preferred_element_type=jnp.float32)             # [TB, Lq, dh]

        ctx_ref[:, sl] = ctx.reshape(m_q, dh).astype(ctx_ref.dtype)

    # Output projection: ONE matmul over the full H*dh contraction, written
    # directly to o_ref (no f32 accumulator scratch, no per-head RMW).
    out = jnp.dot(ctx_ref[...], w_ref[...], preferred_element_type=jnp.float32)
    o_ref[...] = out.reshape(tb, lq, o_ref.shape[-1]).astype(o_ref.dtype)


def _tpu_vmem_and_cores():
    """Physical VMEM bytes and TensorCores per chip (safe defaults)."""
    vmem_bytes = 128 * 1024 * 1024
    num_tc = 1
    try:
        info = pltpu.get_tpu_info()
        vmem_bytes = int(getattr(info, "vmem_capacity_bytes", vmem_bytes))
        for attr in ("num_tensorcores", "tensorcore_count", "num_cores",
                     "core_count"):
            val = getattr(info, attr, None)
            if val:
                num_tc = int(val)
                break
        else:
            # v7x-class parts: 64 MiB VMEM per TensorCore, 2 TensorCores/chip.
            num_tc = 2 if vmem_bytes <= 64 * 1024 * 1024 else 1
    except Exception:
        pass
    return vmem_bytes, num_tc


def _pick_batch_tile(B, Lq, Lk, Fk, Fv, hd, out_f, in_bytes, cd_bytes,
                     out_bytes, vmem_budget, num_tc):
    """Largest divisor of B whose per-step working set fits the VMEM budget.

    Only forces >= num_tc grid steps on parts with more than one TensorCore
    (splitting the grid on a 1-TC part is just a serial loop).
    """
    def estimate(tb):
        m_q, m_k = tb * Lq, tb * Lk
        est = 2 * (m_q * Fk + m_k * Fk + m_k * Fv) * in_bytes   # dbl-buffered inputs
        est += 2 * m_q * out_f * out_bytes                      # dbl-buffered output
        est += (2 * Fk * hd + Fv * hd + hd * out_f) * cd_bytes  # weights (single buf)
        est += (m_q + 2 * m_k) * hd * cd_bytes                  # qp / kp / vp
        est += m_q * hd * cd_bytes                              # ctx slab
        est += 3 * tb * Lq * Lk * 4                             # s / e / p (f32, per head)
        est += m_q * out_f * 4                                  # output-proj f32 result
        return est

    best = 1
    for t in range(1, B + 1):
        if B % t:
            continue
        if num_tc >= 2 and B >= num_tc and B // t < num_tc:
            continue        # keep the 'parallel' axis wide enough for all cores
        if estimate(t) <= vmem_budget:
            best = t
    return best


def multihead_forward(Q, K, V, Wq, Wk, Wv, W, *, num_heads,
                      compute_dtype=jnp.bfloat16, batch_tile=None,
                      approx_reciprocal=True):
    B, Lq, Fk = Q.shape
    _, Lk, _ = K.shape
    Fv = V.shape[-1]
    out_f = W.shape[0]
    assert out_f % num_heads == 0
    dh = out_f // num_heads
    hd = num_heads * dh                 # == out_f; projection width (NOT padded)
    out_dtype = Q.dtype

    vmem_bytes, num_tc = _tpu_vmem_and_cores()
    vmem_limit = int(vmem_bytes * 3 // 4)   # 96 MiB on v5e/v6e, 48 MiB on v7x

    in_bytes = jnp.dtype(compute_dtype).itemsize
    cd_bytes = jnp.dtype(compute_dtype).itemsize
    out_bytes = jnp.dtype(out_dtype).itemsize

    if batch_tile is None:
        batch_tile = _pick_batch_tile(
            B, Lq, Lk, Fk, Fv, hd, out_f, in_bytes, cd_bytes, out_bytes,
            vmem_budget=int(vmem_limit * 3 // 4), num_tc=num_tc)
    assert B % batch_tile == 0
    tb = batch_tile
    grid = (B // tb,)

    scale = 1.0 / math.sqrt(float(dh))

    # One-time parameter prep (cached in a real module): fold 1/sqrt(dh) into
    # the Q projection and cast weights to the compute dtype.
    wq_p = (Wq * scale).astype(compute_dtype)       # [Fk, H*dh]
    wk_p = Wk.astype(compute_dtype)                 # [Fk, H*dh]
    wv_p = Wv.astype(compute_dtype)                 # [Fv, H*dh]
    w_p = W.astype(compute_dtype)                   # [H*dh, out_f]

    qx = Q.astype(compute_dtype)
    kx = K.astype(compute_dtype)
    vx = V.astype(compute_dtype)

    kernel = functools.partial(multihead_kernel, num_heads=num_heads,
                               head_dim=dh, approx_recip=approx_reciprocal)

    def build_and_run(single_buffer_weights):
        def wspec(shape):
            if single_buffer_weights:
                return pl.BlockSpec(shape, lambda b: (0, 0),
                                    pipeline_mode=pl.Buffered(1))
            return pl.BlockSpec(shape, lambda b: (0, 0))

        return pl.pallas_call(
            kernel,
            out_shape=jax.ShapeDtypeStruct((B, Lq, out_f), out_dtype),
            grid=grid,
            in_specs=[
                pl.BlockSpec((tb, Lq, Fk), lambda b: (b, 0, 0)),   # Q
                pl.BlockSpec((tb, Lk, Fk), lambda b: (b, 0, 0)),   # K
                pl.BlockSpec((tb, Lk, Fv), lambda b: (b, 0, 0)),   # V
                wspec((Fk, hd)),                                   # W_Q (pre-scaled)
                wspec((Fk, hd)),                                   # W_K
                wspec((Fv, hd)),                                   # W_V
                wspec((hd, out_f)),                                # W
            ],
            out_specs=pl.BlockSpec((tb, Lq, out_f), lambda b: (b, 0, 0)),
            scratch_shapes=[pltpu.VMEM((tb * Lq, hd), compute_dtype)],  # ctx slab
            compiler_params=pltpu.CompilerParams(
                dimension_semantics=("parallel",),
                vmem_limit_bytes=vmem_limit),
        )(qx, kx, vx, wq_p, wk_p, wv_p, w_p)

    if hasattr(pl, "Buffered"):
        try:
            return build_and_run(True)
        except Exception:
            pass   # fall back to default double-buffered weight blocks
    return build_and_run(False)


def xavier_uniform(key, shape):
    fan_in, fan_out = shape
    bound = math.sqrt(6.0 / (fan_in + fan_out))
    return jax.random.uniform(key, shape, jnp.float32, -bound, bound)


def reference_forward(Q, K, V, Wq, Wk, Wv, W, *, num_heads):
    # Pure-JAX reference mirroring the PyTorch module (f32 end to end).
    B, Lq, _ = Q.shape
    Lk = K.shape[1]
    out_f = W.shape[0]
    dh = out_f // num_heads
    q = (Q @ Wq).reshape(B, Lq, num_heads, dh)
    k = (K @ Wk).reshape(B, Lk, num_heads, dh)
    v = (V @ Wv).reshape(B, Lk, num_heads, dh)
    a = jnp.einsum('bqhf,bkhf->bqhk', q, k)
    a = jax.nn.softmax(a / dh ** 0.5, axis=-1)
    a = jnp.einsum('bqhk,bkhf->bqhf', a, v)
    return a.reshape(B, Lq, out_f) @ W


if __name__ == "__main__":
    # Small deterministic config.
    num_heads = 4
    out_features = 32
    key_features = 16
    value_features = 24
    B, Lq, Lk = 2, 8, 8

    root = jax.random.PRNGKey(0)
    kW, kQ, kK, kV, kq, kk, kv = jax.random.split(root, 7)

    # Parameters (xavier_uniform, deterministic).
    W_param = xavier_uniform(kW, (out_features, out_features))
    Q_param = xavier_uniform(kQ, (key_features, out_features))
    K_param = xavier_uniform(kK, (key_features, out_features))
    V_param = xavier_uniform(kV, (value_features, out_features))

    # Inputs.
    Qx = jax.random.normal(kq, (B, Lq, key_features), jnp.float32)
    Kx = jax.random.normal(kk, (B, Lk, key_features), jnp.float32)
    Vx = jax.random.normal(kv, (B, Lk, value_features), jnp.float32)

    ref = reference_forward(Qx, Kx, Vx, Q_param, K_param, V_param, W_param,
                            num_heads=num_heads)

    # f32 operand path with exact softmax reciprocal (strict check).
    out_f32 = multihead_forward(Qx, Kx, Vx, Q_param, K_param, V_param, W_param,
                                num_heads=num_heads, compute_dtype=jnp.float32,
                                approx_reciprocal=False)
    out_f32 = jax.block_until_ready(out_f32)
    assert out_f32.shape == (B, Lq, out_features)
    assert jnp.allclose(out_f32, ref, atol=5e-3, rtol=5e-3), "f32 mismatch vs reference"

    # bf16 operand path (default, full-rate MXU; looser tolerance).
    out_bf16 = multihead_forward(Qx, Kx, Vx, Q_param, K_param, V_param, W_param,
                                 num_heads=num_heads, compute_dtype=jnp.bfloat16)
    out_bf16 = jax.block_until_ready(out_bf16)
    assert out_bf16.shape == (B, Lq, out_features)
    assert jnp.allclose(out_bf16, ref, atol=8e-2, rtol=8e-2), "bf16 mismatch vs reference"

    print("KERNEL_OK")
</pallas_src>

<mosaic_0001>
module attributes {stable_mosaic.version = 11 : i64} {
  func.func @multihead_kernel(%arg0: i32, %arg1: memref<2x8x16xf32, #tpu.memory_space<vmem>>, %arg2: memref<2x8x16xf32, #tpu.memory_space<vmem>>, %arg3: memref<2x8x24xf32, #tpu.memory_space<vmem>>, %arg4: memref<16x32xf32, #tpu.memory_space<vmem>>, %arg5: memref<16x32xf32, #tpu.memory_space<vmem>>, %arg6: memref<24x32xf32, #tpu.memory_space<vmem>>, %arg7: memref<32x32xf32, #tpu.memory_space<vmem>>, %arg8: memref<2x8x32xf32, #tpu.memory_space<vmem>>, %arg9: memref<16x32xf32, #tpu.memory_space<vmem>>) attributes {dimension_semantics = [#tpu.dimension_semantics<parallel>], iteration_bounds = array<i64: 1>, scalar_prefetch = 0 : i64, scratch_operands = 1 : i64, tpu.core_type = #tpu.core_type<tc>, window_params = [{transform_indices = @transform_0, window_bounds = array<i64: 2, 8, 16>}, {transform_indices = @transform_1, window_bounds = array<i64: 2, 8, 16>}, {transform_indices = @transform_2, window_bounds = array<i64: 2, 8, 24>}, {pipeline_mode = #tpu.pipeline_mode<synchronous>, transform_indices = @transform_3, window_bounds = array<i64: 16, 32>}, {pipeline_mode = #tpu.pipeline_mode<synchronous>, transform_indices = @transform_4, window_bounds = array<i64: 16, 32>}, {pipeline_mode = #tpu.pipeline_mode<synchronous>, transform_indices = @transform_5, window_bounds = array<i64: 24, 32>}, {pipeline_mode = #tpu.pipeline_mode<synchronous>, transform_indices = @transform_6, window_bounds = array<i64: 32, 32>}, {transform_indices = @transform_7, window_bounds = array<i64: 2, 8, 32>}]} {
    %c0 = arith.constant 0 : index
    %c0_0 = arith.constant 0 : index
    %c0_1 = arith.constant 0 : index
    %0 = vector.load %arg1[%c0, %c0_0, %c0_1] : memref<2x8x16xf32, #tpu.memory_space<vmem>>, vector<2x8x16xf32>
    %1 = vector.shape_cast %0 : vector<2x8x16xf32> to vector<16x16xf32>
    %c0_2 = arith.constant 0 : index
    %c0_3 = arith.constant 0 : index
    %c0_4 = arith.constant 0 : index
    %2 = vector.load %arg2[%c0_2, %c0_3, %c0_4] : memref<2x8x16xf32, #tpu.memory_space<vmem>>, vector<2x8x16xf32>
    %3 = vector.shape_cast %2 : vector<2x8x16xf32> to vector<16x16xf32>
    %c0_5 = arith.constant 0 : index
    %c0_6 = arith.constant 0 : index
    %c0_7 = arith.constant 0 : index
    %4 = vector.load %arg3[%c0_5, %c0_6, %c0_7] : memref<2x8x24xf32, #tpu.memory_space<vmem>>, vector<2x8x24xf32>
    %5 = vector.shape_cast %4 : vector<2x8x24xf32> to vector<16x24xf32>
    %c0_8 = arith.constant 0 : index
    %c0_9 = arith.constant 0 : index
    %6 = vector.load %arg4[%c0_8, %c0_9] : memref<16x32xf32, #tpu.memory_space<vmem>>, vector<16x32xf32>
    %cst = arith.constant dense<0.000000e+00> : vector<16x32xf32>
    %7 = tpu.matmul %1, %6, %cst {dimension_numbers = #tpu.dot_dimension_numbers<[1], [0], [0], [1], [0, 0, 1, 1], [], []>} : vector<16x16xf32>, vector<16x32xf32>, vector<16x32xf32> -> vector<16x32xf32>
    %c0_10 = arith.constant 0 : index
    %c0_11 = arith.constant 0 : index
    %8 = vector.load %arg5[%c0_10, %c0_11] : memref<16x32xf32, #tpu.memory_space<vmem>>, vector<16x32xf32>
    %cst_12 = arith.constant dense<0.000000e+00> : vector<16x32xf32>
    %9 = tpu.matmul %3, %8, %cst_12 {dimension_numbers = #tpu.dot_dimension_numbers<[1], [0], [0], [1], [0, 0, 1, 1], [], []>} : vector<16x16xf32>, vector<16x32xf32>, vector<16x32xf32> -> vector<16x32xf32>
    %c0_13 = arith.constant 0 : index
    %c0_14 = arith.constant 0 : index
    %10 = vector.load %arg6[%c0_13, %c0_14] : memref<24x32xf32, #tpu.memory_space<vmem>>, vector<24x32xf32>
    %cst_15 = arith.constant dense<0.000000e+00> : vector<16x32xf32>
    %11 = tpu.matmul %5, %10, %cst_15 {dimension_numbers = #tpu.dot_dimension_numbers<[1], [0], [0], [1], [0, 0, 1, 1], [], []>} : vector<16x24xf32>, vector<24x32xf32>, vector<16x32xf32> -> vector<16x32xf32>
    %12 = vector.extract_strided_slice %7 {offsets = [0, 0], sizes = [16, 8], strides = [1, 1]} : vector<16x32xf32> to vector<16x8xf32>
    %13 = vector.shape_cast %12 : vector<16x8xf32> to vector<2x8x8xf32>
    %14 = vector.extract_strided_slice %9 {offsets = [0, 0], sizes = [16, 8], strides = [1, 1]} : vector<16x32xf32> to vector<16x8xf32>
    %15 = vector.shape_cast %14 : vector<16x8xf32> to vector<2x8x8xf32>
    %16 = vector.extract_strided_slice %11 {offsets = [0, 0], sizes = [16, 8], strides = [1, 1]} : vector<16x32xf32> to vector<16x8xf32>
    %17 = vector.shape_cast %16 : vector<16x8xf32> to vector<2x8x8xf32>
    %cst_16 = arith.constant dense<0.000000e+00> : vector<2x8x8xf32>
    %18 = tpu.matmul %13, %15, %cst_16 {dimension_numbers = #tpu.dot_dimension_numbers<[2], [2], [1], [1], [0, 0, 0, 1, 1, 1], [0], [0]>} : vector<2x8x8xf32>, vector<2x8x8xf32>, vector<2x8x8xf32> -> vector<2x8x8xf32>
    %cst_17 = arith.constant dense<0xFF800000> : vector<2x8xf32>
    %19 = vector.multi_reduction <maximumf>, %18, %cst_17 [2] : vector<2x8x8xf32> to vector<2x8xf32>
    %20 = vector.shape_cast %19 : vector<2x8xf32> to vector<2x8x1xf32>
    %21 = vector.broadcast %20 : vector<2x8x1xf32> to vector<2x8x8xf32>
    %22 = arith.subf %18, %21 : vector<2x8x8xf32>
    %23 = math.exp %22 : vector<2x8x8xf32>
    %cst_18 = arith.constant dense<0.000000e+00> : vector<2x8xf32>
    %24 = vector.multi_reduction <add>, %23, %cst_18 [2] : vector<2x8x8xf32> to vector<2x8xf32>
    %25 = vector.shape_cast %24 : vector<2x8xf32> to vector<2x8x1xf32>
    %26 = tpu.reciprocal %25 : vector<2x8x1xf32> -> vector<2x8x1xf32>
    %27 = vector.broadcast %26 : vector<2x8x1xf32> to vector<2x8x8xf32>
    %28 = arith.mulf %23, %27 : vector<2x8x8xf32>
    %cst_19 = arith.constant dense<0.000000e+00> : vector<2x8x8xf32>
    %29 = tpu.matmul %28, %17, %cst_19 {dimension_numbers = #tpu.dot_dimension_numbers<[2], [1], [1], [2], [0, 0, 0, 1, 1, 2], [0], [0]>} : vector<2x8x8xf32>, vector<2x8x8xf32>, vector<2x8x8xf32> -> vector<2x8x8xf32>
    %30 = vector.shape_cast %29 : vector<2x8x8xf32> to vector<16x8xf32>
    %c0_20 = arith.constant 0 : index
    %c0_21 = arith.constant 0 : index
    %31 = vector.load %arg9[%c0_20, %c0_21] : memref<16x32xf32, #tpu.memory_space<vmem>>, vector<16x8xf32>
    tpu.vector_store %arg9[%c0_20, %c0_21], %30 {strides = array<i32>} : memref<16x32xf32, #tpu.memory_space<vmem>>, vector<16x8xf32>,
    %32 = vector.extract_strided_slice %7 {offsets = [0, 8], sizes = [16, 8], strides = [1, 1]} : vector<16x32xf32> to vector<16x8xf32>
    %33 = vector.shape_cast %32 : vector<16x8xf32> to vector<2x8x8xf32>
    %34 = vector.extract_strided_slice %9 {offsets = [0, 8], sizes = [16, 8], strides = [1, 1]} : vector<16x32xf32> to vector<16x8xf32>
    %35 = vector.shape_cast %34 : vector<16x8xf32> to vector<2x8x8xf32>
    %36 = vector.extract_strided_slice %11 {offsets = [0, 8], sizes = [16, 8], strides = [1, 1]} : vector<16x32xf32> to vector<16x8xf32>
    %37 = vector.shape_cast %36 : vector<16x8xf32> to vector<2x8x8xf32>
    %cst_22 = arith.constant dense<0.000000e+00> : vector<2x8x8xf32>
    %38 = tpu.matmul %33, %35, %cst_22 {dimension_numbers = #tpu.dot_dimension_numbers<[2], [2], [1], [1], [0, 0, 0, 1, 1, 1], [0], [0]>} : vector<2x8x8xf32>, vector<2x8x8xf32>, vector<2x8x8xf32> -> vector<2x8x8xf32>
    %cst_23 = arith.constant dense<0xFF800000> : vector<2x8xf32>
    %39 = vector.multi_reduction <maximumf>, %38, %cst_23 [2] : vector<2x8x8xf32> to vector<2x8xf32>
    %40 = vector.shape_cast %39 : vector<2x8xf32> to vector<2x8x1xf32>
    %41 = vector.broadcast %40 : vector<2x8x1xf32> to vector<2x8x8xf32>
    %42 = arith.subf %38, %41 : vector<2x8x8xf32>
    %43 = math.exp %42 : vector<2x8x8xf32>
    %cst_24 = arith.constant dense<0.000000e+00> : vector<2x8xf32>
    %44 = vector.multi_reduction <add>, %43, %cst_24 [2] : vector<2x8x8xf32> to vector<2x8xf32>
    %45 = vector.shape_cast %44 : vector<2x8xf32> to vector<2x8x1xf32>
    %46 = tpu.reciprocal %45 : vector<2x8x1xf32> -> vector<2x8x1xf32>
    %47 = vector.broadcast %46 : vector<2x8x1xf32> to vector<2x8x8xf32>
    %48 = arith.mulf %43, %47 : vector<2x8x8xf32>
    %cst_25 = arith.constant dense<0.000000e+00> : vector<2x8x8xf32>
    %49 = tpu.matmul %48, %37, %cst_25 {dimension_numbers = #tpu.dot_dimension_numbers<[2], [1], [1], [2], [0, 0, 0, 1, 1, 2], [0], [0]>} : vector<2x8x8xf32>, vector<2x8x8xf32>, vector<2x8x8xf32> -> vector<2x8x8xf32>
    %50 = vector.shape_cast %49 : vector<2x8x8xf32> to vector<16x8xf32>
    %c0_26 = arith.constant 0 : index
    %c8 = arith.constant 8 : index
    %51 = vector.load %arg9[%c0_26, %c8] : memref<16x32xf32, #tpu.memory_space<vmem>>, vector<16x8xf32>
    tpu.vector_store %arg9[%c0_26, %c8], %50 {strides = array<i32>} : memref<16x32xf32, #tpu.memory_space<vmem>>, vector<16x8xf32>,
    %52 = vector.extract_strided_slice %7 {offsets = [0, 16], sizes = [16, 8], strides = [1, 1]} : vector<16x32xf32> to vector<16x8xf32>
    %53 = vector.shape_cast %52 : vector<16x8xf32> to vector<2x8x8xf32>
    %54 = vector.extract_strided_slice %9 {offsets = [0, 16], sizes = [16, 8], strides = [1, 1]} : vector<16x32xf32> to vector<16x8xf32>
    %55 = vector.shape_cast %54 : vector<16x8xf32> to vector<2x8x8xf32>
    %56 = vector.extract_strided_slice %11 {offsets = [0, 16], sizes = [16, 8], strides = [1, 1]} : vector<16x32xf32> to vector<16x8xf32>
    %57 = vector.shape_cast %56 : vector<16x8xf32> to vector<2x8x8xf32>
    %cst_27 = arith.constant dense<0.000000e+00> : vector<2x8x8xf32>
    %58 = tpu.matmul %53, %55, %cst_27 {dimension_numbers = #tpu.dot_dimension_numbers<[2], [2], [1], [1], [0, 0, 0, 1, 1, 1], [0], [0]>} : vector<2x8x8xf32>, vector<2x8x8xf32>, vector<2x8x8xf32> -> vector<2x8x8xf32>
    %cst_28 = arith.constant dense<0xFF800000> : vector<2x8xf32>
    %59 = vector.multi_reduction <maximumf>, %58, %cst_28 [2] : vector<2x8x8xf32> to vector<2x8xf32>
    %60 = vector.shape_cast %59 : vector<2x8xf32> to vector<2x8x1xf32>
    %61 = vector.broadcast %60 : vector<2x8x1xf32> to vector<2x8x8xf32>
    %62 = arith.subf %58, %61 : vector<2x8x8xf32>
    %63 = math.exp %62 : vector<2x8x8xf32>
    %cst_29 = arith.constant dense<0.000000e+00> : vector<2x8xf32>
    %64 = vector.multi_reduction <add>, %63, %cst_29 [2] : vector<2x8x8xf32> to vector<2x8xf32>
    %65 = vector.shape_cast %64 : vector<2x8xf32> to vector<2x8x1xf32>
    %66 = tpu.reciprocal %65 : vector<2x8x1xf32> -> vector<2x8x1xf32>
    %67 = vector.broadcast %66 : vector<2x8x1xf32> to vector<2x8x8xf32>
    %68 = arith.mulf %63, %67 : vector<2x8x8xf32>
    %cst_30 = arith.constant dense<0.000000e+00> : vector<2x8x8xf32>
    %69 = tpu.matmul %68, %57, %cst_30 {dimension_numbers = #tpu.dot_dimension_numbers<[2], [1], [1], [2], [0, 0, 0, 1, 1, 2], [0], [0]>} : vector<2x8x8xf32>, vector<2x8x8xf32>, vector<2x8x8xf32> -> vector<2x8x8xf32>
    %70 = vector.shape_cast %69 : vector<2x8x8xf32> to vector<16x8xf32>
    %c0_31 = arith.constant 0 : index
    %c16 = arith.constant 16 : index
    %71 = vector.load %arg9[%c0_31, %c16] : memref<16x32xf32, #tpu.memory_space<vmem>>, vector<16x8xf32>
    tpu.vector_store %arg9[%c0_31, %c16], %70 {strides = array<i32>} : memref<16x32xf32, #tpu.memory_space<vmem>>, vector<16x8xf32>,
    %72 = vector.extract_strided_slice %7 {offsets = [0, 24], sizes = [16, 8], strides = [1, 1]} : vector<16x32xf32> to vector<16x8xf32>
    %73 = vector.shape_cast %72 : vector<16x8xf32> to vector<2x8x8xf32>
    %74 = vector.extract_strided_slice %9 {offsets = [0, 24], sizes = [16, 8], strides = [1, 1]} : vector<16x32xf32> to vector<16x8xf32>
    %75 = vector.shape_cast %74 : vector<16x8xf32> to vector<2x8x8xf32>
    %76 = vector.extract_strided_slice %11 {offsets = [0, 24], sizes = [16, 8], strides = [1, 1]} : vector<16x32xf32> to vector<16x8xf32>
    %77 = vector.shape_cast %76 : vector<16x8xf32> to vector<2x8x8xf32>
    %cst_32 = arith.constant dense<0.000000e+00> : vector<2x8x8xf32>
    %78 = tpu.matmul %73, %75, %cst_32 {dimension_numbers = #tpu.dot_dimension_numbers<[2], [2], [1], [1], [0, 0, 0, 1, 1, 1], [0], [0]>} : vector<2x8x8xf32>, vector<2x8x8xf32>, vector<2x8x8xf32> -> vector<2x8x8xf32>
    %cst_33 = arith.constant dense<0xFF800000> : vector<2x8xf32>
    %79 = vector.multi_reduction <maximumf>, %78, %cst_33 [2] : vector<2x8x8xf32> to vector<2x8xf32>
    %80 = vector.shape_cast %79 : vector<2x8xf32> to vector<2x8x1xf32>
    %81 = vector.broadcast %80 : vector<2x8x1xf32> to vector<2x8x8xf32>
    %82 = arith.subf %78, %81 : vector<2x8x8xf32>
    %83 = math.exp %82 : vector<2x8x8xf32>
    %cst_34 = arith.constant dense<0.000000e+00> : vector<2x8xf32>
    %84 = vector.multi_reduction <add>, %83, %cst_34 [2] : vector<2x8x8xf32> to vector<2x8xf32>
    %85 = vector.shape_cast %84 : vector<2x8xf32> to vector<2x8x1xf32>
    %86 = tpu.reciprocal %85 : vector<2x8x1xf32> -> vector<2x8x1xf32>
    %87 = vector.broadcast %86 : vector<2x8x1xf32> to vector<2x8x8xf32>
    %88 = arith.mulf %83, %87 : vector<2x8x8xf32>
    %cst_35 = arith.constant dense<0.000000e+00> : vector<2x8x8xf32>
    %89 = tpu.matmul %88, %77, %cst_35 {dimension_numbers = #tpu.dot_dimension_numbers<[2], [1], [1], [2], [0, 0, 0, 1, 1, 2], [0], [0]>} : vector<2x8x8xf32>, vector<2x8x8xf32>, vector<2x8x8xf32> -> vector<2x8x8xf32>
    %90 = vector.shape_cast %89 : vector<2x8x8xf32> to vector<16x8xf32>
    %c0_36 = arith.constant 0 : index
    %c24 = arith.constant 24 : index
    %91 = vector.load %arg9[%c0_36, %c24] : memref<16x32xf32, #tpu.memory_space<vmem>>, vector<16x8xf32>
    tpu.vector_store %arg9[%c0_36, %c24], %90 {strides = array<i32>} : memref<16x32xf32, #tpu.memory_space<vmem>>, vector<16x8xf32>,
    %c0_37 = arith.constant 0 : index
    %c0_38 = arith.constant 0 : index
    %92 = vector.load %arg9[%c0_37, %c0_38] : memref<16x32xf32, #tpu.memory_space<vmem>>, vector<16x32xf32>
    %c0_39 = arith.constant 0 : index
    %c0_40 = arith.constant 0 : index
    %93 = vector.load %arg7[%c0_39, %c0_40] : memref<32x32xf32, #tpu.memory_space<vmem>>, vector<32x32xf32>
    %cst_41 = arith.constant dense<0.000000e+00> : vector<16x32xf32>
    %94 = tpu.matmul %92, %93, %cst_41 {dimension_numbers = #tpu.dot_dimension_numbers<[1], [0], [0], [1], [0, 0, 1, 1], [], []>} : vector<16x32xf32>, vector<32x32xf32>, vector<16x32xf32> -> vector<16x32xf32>
    %95 = vector.shape_cast %94 : vector<16x32xf32> to vector<2x8x32xf32>
    %c0_42 = arith.constant 0 : index
    %c0_43 = arith.constant 0 : index
    %c0_44 = arith.constant 0 : index
    %96 = vector.load %arg8[%c0_42, %c0_43, %c0_44] : memref<2x8x32xf32, #tpu.memory_space<vmem>>, vector<2x8x32xf32>
    tpu.vector_store %arg8[%c0_42, %c0_43, %c0_44], %95 {strides = array<i32>} : memref<2x8x32xf32, #tpu.memory_space<vmem>>, vector<2x8x32xf32>,
    return
  }
  func.func @transform_0(%arg0: i32) -> (i32, i32, i32) {
    %c0_i32 = arith.constant 0 : i32
    %c0_i32_0 = arith.constant 0 : i32
    %c0_i32_1 = arith.constant 0 : i32
    return %arg0, %c0_i32, %c0_i32_0 : i32, i32, i32
  }
  func.func @transform_1(%arg0: i32) -> (i32, i32, i32) {
    %c0_i32 = arith.constant 0 : i32
    %c0_i32_0 = arith.constant 0 : i32
    %c0_i32_1 = arith.constant 0 : i32
    return %arg0, %c0_i32, %c0_i32_0 : i32, i32, i32
  }
  func.func @transform_2(%arg0: i32) -> (i32, i32, i32) {
    %c0_i32 = arith.constant 0 : i32
    %c0_i32_0 = arith.constant 0 : i32
    %c0_i32_1 = arith.constant 0 : i32
    return %arg0, %c0_i32, %c0_i32_0 : i32, i32, i32
  }
  func.func @transform_3(%arg0: i32) -> (i32, i32) {
    %c0_i32 = arith.constant 0 : i32
    %c0_i32_0 = arith.constant 0 : i32
    %c0_i32_1 = arith.constant 0 : i32
    return %c0_i32, %c0_i32_0 : i32, i32
  }
  func.func @transform_4(%arg0: i32) -> (i32, i32) {
    %c0_i32 = arith.constant 0 : i32
    %c0_i32_0 = arith.constant 0 : i32
    %c0_i32_1 = arith.constant 0 : i32
    return %c0_i32, %c0_i32_0 : i32, i32
  }
  func.func @transform_5(%arg0: i32) -> (i32, i32) {
    %c0_i32 = arith.constant 0 : i32
    %c0_i32_0 = arith.constant 0 : i32
    %c0_i32_1 = arith.constant 0 : i32
    return %c0_i32, %c0_i32_0 : i32, i32
  }
  func.func @transform_6(%arg0: i32) -> (i32, i32) {
    %c0_i32 = arith.constant 0 : i32
    %c0_i32_0 = arith.constant 0 : i32
    %c0_i32_1 = arith.constant 0 : i32
    return %c0_i32, %c0_i32_0 : i32, i32
  }
  func.func @transform_7(%arg0: i32) -> (i32, i32, i32) {
    %c0_i32 = arith.constant 0 : i32
    %c0_i32_0 = arith.constant 0 : i32
    %c0_i32_1 = arith.constant 0 : i32
    return %arg0, %c0_i32, %c0_i32_0 : i32, i32, i32
  }
}

module attributes {stable_mosaic.version = 11 : i64} {
  func.func @multihead_kernel(%arg0: i32, %arg1: memref<2x8x16xf32, #tpu.memory_space<vmem>>, %arg2: memref<2x8x16xf32, #tpu.memory_space<vmem>>, %arg3: memref<2x8x24xf32, #tpu.memory_space<vmem>>, %arg4: memref<16x32xf32, #tpu.memory_space<vmem>>, %arg5: memref<16x32xf32, #tpu.memory_space<vmem>>, %arg6: memref<24x32xf32, #tpu.memory_space<vmem>>, %arg7: memref<32x32xf32, #tpu.memory_space<vmem>>, %arg8: memref<2x8x32xf32, #tpu.memory_space<vmem>>, %arg9: memref<16x32xf32, #tpu.memory_space<vmem>>) attributes {dimension_semantics = [#tpu.dimension_semantics<parallel>], iteration_bounds = array<i64: 1>, scalar_prefetch = 0 : i64, scratch_operands = 1 : i64, tpu.core_type = #tpu.core_type<tc>, window_params = [{transform_indices = @transform_0, window_bounds = array<i64: 2, 8, 16>}, {transform_indices = @transform_1, window_bounds = array<i64: 2, 8, 16>}, {transform_indices = @transform_2, window_bounds = array<i64: 2, 8, 24>}, {pipeline_mode = #tpu.pipeline_mode<synchronous>, transform_indices = @transform_3, window_bounds = array<i64: 16, 32>}, {pipeline_mode = #tpu.pipeline_mode<synchronous>, transform_indices = @transform_4, window_bounds = array<i64: 16, 32>}, {pipeline_mode = #tpu.pipeline_mode<synchronous>, transform_indices = @transform_5, window_bounds = array<i64: 24, 32>}, {pipeline_mode = #tpu.pipeline_mode<synchronous>, transform_indices = @transform_6, window_bounds = array<i64: 32, 32>}, {transform_indices = @transform_7, window_bounds = array<i64: 2, 8, 32>}]} {
    %c0 = arith.constant 0 : index
    %c0_0 = arith.constant 0 : index
    %c0_1 = arith.constant 0 : index
    %0 = vector.load %arg1[%c0, %c0_0, %c0_1] : memref<2x8x16xf32, #tpu.memory_space<vmem>>, vector<2x8x16xf32>
    %1 = vector.shape_cast %0 : vector<2x8x16xf32> to vector<16x16xf32>
    %c0_2 = arith.constant 0 : index
    %c0_3 = arith.constant 0 : index
    %c0_4 = arith.constant 0 : index
    %2 = vector.load %arg2[%c0_2, %c0_3, %c0_4] : memref<2x8x16xf32, #tpu.memory_space<vmem>>, vector<2x8x16xf32>
    %3 = vector.shape_cast %2 : vector<2x8x16xf32> to vector<16x16xf32>
    %c0_5 = arith.constant 0 : index
    %c0_6 = arith.constant 0 : index
    %c0_7 = arith.constant 0 : index
    %4 = vector.load %arg3[%c0_5, %c0_6, %c0_7] : memref<2x8x24xf32, #tpu.memory_space<vmem>>, vector<2x8x24xf32>
    %5 = vector.shape_cast %4 : vector<2x8x24xf32> to vector<16x24xf32>
    %c0_8 = arith.constant 0 : index
    %c0_9 = arith.constant 0 : index
    %6 = vector.load %arg4[%c0_8, %c0_9] : memref<16x32xf32, #tpu.memory_space<vmem>>, vector<16x32xf32>
    %cst = arith.constant dense<0.000000e+00> : vector<16x32xf32>
    %7 = tpu.matmul %1, %6, %cst {dimension_numbers = #tpu.dot_dimension_numbers<[1], [0], [0], [1], [0, 0, 1, 1], [], []>} : vector<16x16xf32>, vector<16x32xf32>, vector<16x32xf32> -> vector<16x32xf32>
    %c0_10 = arith.constant 0 : index
    %c0_11 = arith.constant 0 : index
    %8 = vector.load %arg5[%c0_10, %c0_11] : memref<16x32xf32, #tpu.memory_space<vmem>>, vector<16x32xf32>
    %cst_12 = arith.constant dense<0.000000e+00> : vector<16x32xf32>
    %9 = tpu.matmul %3, %8, %cst_12 {dimension_numbers = #tpu.dot_dimension_numbers<[1], [0], [0], [1], [0, 0, 1, 1], [], []>} : vector<16x16xf32>, vector<16x32xf32>, vector<16x32xf32> -> vector<16x32xf32>
    %c0_13 = arith.constant 0 : index
    %c0_14 = arith.constant 0 : index
    %10 = vector.load %arg6[%c0_13, %c0_14] : memref<24x32xf32, #tpu.memory_space<vmem>>, vector<24x32xf32>
    %cst_15 = arith.constant dense<0.000000e+00> : vector<16x32xf32>
    %11 = tpu.matmul %5, %10, %cst_15 {dimension_numbers = #tpu.dot_dimension_numbers<[1], [0], [0], [1], [0, 0, 1, 1], [], []>} : vector<16x24xf32>, vector<24x32xf32>, vector<16x32xf32> -> vector<16x32xf32>
    %12 = vector.extract_strided_slice %7 {offsets = [0, 0], sizes = [16, 8], strides = [1, 1]} : vector<16x32xf32> to vector<16x8xf32>
    %13 = vector.shape_cast %12 : vector<16x8xf32> to vector<2x8x8xf32>
    %14 = vector.extract_strided_slice %9 {offsets = [0, 0], sizes = [16, 8], strides = [1, 1]} : vector<16x32xf32> to vector<16x8xf32>
    %15 = vector.shape_cast %14 : vector<16x8xf32> to vector<2x8x8xf32>
    %16 = vector.extract_strided_slice %11 {offsets = [0, 0], sizes = [16, 8], strides = [1, 1]} : vector<16x32xf32> to vector<16x8xf32>
    %17 = vector.shape_cast %16 : vector<16x8xf32> to vector<2x8x8xf32>
    %cst_16 = arith.constant dense<0.000000e+00> : vector<2x8x8xf32>
    %18 = tpu.matmul %13, %15, %cst_16 {dimension_numbers = #tpu.dot_dimension_numbers<[2], [2], [1], [1], [0, 0, 0, 1, 1, 1], [0], [0]>} : vector<2x8x8xf32>, vector<2x8x8xf32>, vector<2x8x8xf32> -> vector<2x8x8xf32>
    %cst_17 = arith.constant dense<0xFF800000> : vector<2x8xf32>
    %19 = vector.multi_reduction <maximumf>, %18, %cst_17 [2] : vector<2x8x8xf32> to vector<2x8xf32>
    %20 = vector.shape_cast %19 : vector<2x8xf32> to vector<2x8x1xf32>
    %21 = vector.broadcast %20 : vector<2x8x1xf32> to vector<2x8x8xf32>
    %22 = arith.subf %18, %21 : vector<2x8x8xf32>
    %23 = math.exp %22 : vector<2x8x8xf32>
    %cst_18 = arith.constant dense<0.000000e+00> : vector<2x8xf32>
    %24 = vector.multi_reduction <add>, %23, %cst_18 [2] : vector<2x8x8xf32> to vector<2x8xf32>
    %25 = vector.shape_cast %24 : vector<2x8xf32> to vector<2x8x1xf32>
    %26 = tpu.reciprocal %25 : vector<2x8x1xf32> -> vector<2x8x1xf32>
    %27 = vector.broadcast %26 : vector<2x8x1xf32> to vector<2x8x8xf32>
    %28 = arith.mulf %23, %27 : vector<2x8x8xf32>
    %cst_19 = arith.constant dense<0.000000e+00> : vector<2x8x8xf32>
    %29 = tpu.matmul %28, %17, %cst_19 {dimension_numbers = #tpu.dot_dimension_numbers<[2], [1], [1], [2], [0, 0, 0, 1, 1, 2], [0], [0]>} : vector<2x8x8xf32>, vector<2x8x8xf32>, vector<2x8x8xf32> -> vector<2x8x8xf32>
    %30 = vector.shape_cast %29 : vector<2x8x8xf32> to vector<16x8xf32>
    %c0_20 = arith.constant 0 : index
    %c0_21 = arith.constant 0 : index
    %31 = vector.load %arg9[%c0_20, %c0_21] : memref<16x32xf32, #tpu.memory_space<vmem>>, vector<16x8xf32>
    tpu.vector_store %arg9[%c0_20, %c0_21], %30 {strides = array<i32>} : memref<16x32xf32, #tpu.memory_space<vmem>>, vector<16x8xf32>,
    %32 = vector.extract_strided_slice %7 {offsets = [0, 8], sizes = [16, 8], strides = [1, 1]} : vector<16x32xf32> to vector<16x8xf32>
    %33 = vector.shape_cast %32 : vector<16x8xf32> to vector<2x8x8xf32>
    %34 = vector.extract_strided_slice %9 {offsets = [0, 8], sizes = [16, 8], strides = [1, 1]} : vector<16x32xf32> to vector<16x8xf32>
    %35 = vector.shape_cast %34 : vector<16x8xf32> to vector<2x8x8xf32>
    %36 = vector.extract_strided_slice %11 {offsets = [0, 8], sizes = [16, 8], strides = [1, 1]} : vector<16x32xf32> to vector<16x8xf32>
    %37 = vector.shape_cast %36 : vector<16x8xf32> to vector<2x8x8xf32>
    %cst_22 = arith.constant dense<0.000000e+00> : vector<2x8x8xf32>
    %38 = tpu.matmul %33, %35, %cst_22 {dimension_numbers = #tpu.dot_dimension_numbers<[2], [2], [1], [1], [0, 0, 0, 1, 1, 1], [0], [0]>} : vector<2x8x8xf32>, vector<2x8x8xf32>, vector<2x8x8xf32> -> vector<2x8x8xf32>
    %cst_23 = arith.constant dense<0xFF800000> : vector<2x8xf32>
    %39 = vector.multi_reduction <maximumf>, %38, %cst_23 [2] : vector<2x8x8xf32> to vector<2x8xf32>
    %40 = vector.shape_cast %39 : vector<2x8xf32> to vector<2x8x1xf32>
    %41 = vector.broadcast %40 : vector<2x8x1xf32> to vector<2x8x8xf32>
    %42 = arith.subf %38, %41 : vector<2x8x8xf32>
    %43 = math.exp %42 : vector<2x8x8xf32>
    %cst_24 = arith.constant dense<0.000000e+00> : vector<2x8xf32>
    %44 = vector.multi_reduction <add>, %43, %cst_24 [2] : vector<2x8x8xf32> to vector<2x8xf32>
    %45 = vector.shape_cast %44 : vector<2x8xf32> to vector<2x8x1xf32>
    %46 = tpu.reciprocal %45 : vector<2x8x1xf32> -> vector<2x8x1xf32>
    %47 = vector.broadcast %46 : vector<2x8x1xf32> to vector<2x8x8xf32>
    %48 = arith.mulf %43, %47 : vector<2x8x8xf32>
    %cst_25 = arith.constant dense<0.000000e+00> : vector<2x8x8xf32>
    %49 = tpu.matmul %48, %37, %cst_25 {dimension_numbers = #tpu.dot_dimension_numbers<[2], [1], [1], [2], [0, 0, 0, 1, 1, 2], [0], [0]>} : vector<2x8x8xf32>, vector<2x8x8xf32>, vector<2x8x8xf32> -> vector<2x8x8xf32>
    %50 = vector.shape_cast %49 : vector<2x8x8xf32> to vector<16x8xf32>
    %c0_26 = arith.constant 0 : index
    %c8 = arith.constant 8 : index
    %51 = vector.load %arg9[%c0_26, %c8] : memref<16x32xf32, #tpu.memory_space<vmem>>, vector<16x8xf32>
    tpu.vector_store %arg9[%c0_26, %c8], %50 {strides = array<i32>} : memref<16x32xf32, #tpu.memory_space<vmem>>, vector<16x8xf32>,
    %52 = vector.extract_strided_slice %7 {offsets = [0, 16], sizes = [16, 8], strides = [1, 1]} : vector<16x32xf32> to vector<16x8xf32>
    %53 = vector.shape_cast %52 : vector<16x8xf32> to vector<2x8x8xf32>
    %54 = vector.extract_strided_slice %9 {offsets = [0, 16], sizes = [16, 8], strides = [1, 1]} : vector<16x32xf32> to vector<16x8xf32>
    %55 = vector.shape_cast %54 : vector<16x8xf32> to vector<2x8x8xf32>
    %56 = vector.extract_strided_slice %11 {offsets = [0, 16], sizes = [16, 8], strides = [1, 1]} : vector<16x32xf32> to vector<16x8xf32>
    %57 = vector.shape_cast %56 : vector<16x8xf32> to vector<2x8x8xf32>
    %cst_27 = arith.constant dense<0.000000e+00> : vector<2x8x8xf32>
    %58 = tpu.matmul %53, %55, %cst_27 {dimension_numbers = #tpu.dot_dimension_numbers<[2], [2], [1], [1], [0, 0, 0, 1, 1, 1], [0], [0]>} : vector<2x8x8xf32>, vector<2x8x8xf32>, vector<2x8x8xf32> -> vector<2x8x8xf32>
    %cst_28 = arith.constant dense<0xFF800000> : vector<2x8xf32>
    %59 = vector.multi_reduction <maximumf>, %58, %cst_28 [2] : vector<2x8x8xf32> to vector<2x8xf32>
    %60 = vector.shape_cast %59 : vector<2x8xf32> to vector<2x8x1xf32>
    %61 = vector.broadcast %60 : vector<2x8x1xf32> to vector<2x8x8xf32>
    %62 = arith.subf %58, %61 : vector<2x8x8xf32>
    %63 = math.exp %62 : vector<2x8x8xf32>
    %cst_29 = arith.constant dense<0.000000e+00> : vector<2x8xf32>
    %64 = vector.multi_reduction <add>, %63, %cst_29 [2] : vector<2x8x8xf32> to vector<2x8xf32>
    %65 = vector.shape_cast %64 : vector<2x8xf32> to vector<2x8x1xf32>
    %66 = tpu.reciprocal %65 : vector<2x8x1xf32> -> vector<2x8x1xf32>
    %67 = vector.broadcast %66 : vector<2x8x1xf32> to vector<2x8x8xf32>
    %68 = arith.mulf %63, %67 : vector<2x8x8xf32>
    %cst_30 = arith.constant dense<0.000000e+00> : vector<2x8x8xf32>
    %69 = tpu.matmul %68, %57, %cst_30 {dimension_numbers = #tpu.dot_dimension_numbers<[2], [1], [1], [2], [0, 0, 0, 1, 1, 2], [0], [0]>} : vector<2x8x8xf32>, vector<2x8x8xf32>, vector<2x8x8xf32> -> vector<2x8x8xf32>
    %70 = vector.shape_cast %69 : vector<2x8x8xf32> to vector<16x8xf32>
    %c0_31 = arith.constant 0 : index
    %c16 = arith.constant 16 : index
    %71 = vector.load %arg9[%c0_31, %c16] : memref<16x32xf32, #tpu.memory_space<vmem>>, vector<16x8xf32>
    tpu.vector_store %arg9[%c0_31, %c16], %70 {strides = array<i32>} : memref<16x32xf32, #tpu.memory_space<vmem>>, vector<16x8xf32>,
    %72 = vector.extract_strided_slice %7 {offsets = [0, 24], sizes = [16, 8], strides = [1, 1]} : vector<16x32xf32> to vector<16x8xf32>
    %73 = vector.shape_cast %72 : vector<16x8xf32> to vector<2x8x8xf32>
    %74 = vector.extract_strided_slice %9 {offsets = [0, 24], sizes = [16, 8], strides = [1, 1]} : vector<16x32xf32> to vector<16x8xf32>
    %75 = vector.shape_cast %74 : vector<16x8xf32> to vector<2x8x8xf32>
    %76 = vector.extract_strided_slice %11 {offsets = [0, 24], sizes = [16, 8], strides = [1, 1]} : vector<16x32xf32> to vector<16x8xf32>
    %77 = vector.shape_cast %76 : vector<16x8xf32> to vector<2x8x8xf32>
    %cst_32 = arith.constant dense<0.000000e+00> : vector<2x8x8xf32>
    %78 = tpu.matmul %73, %75, %cst_32 {dimension_numbers = #tpu.dot_dimension_numbers<[2], [2], [1], [1], [0, 0, 0, 1, 1, 1], [0], [0]>} : vector<2x8x8xf32>, vector<2x8x8xf32>, vector<2x8x8xf32> -> vector<2x8x8xf32>
    %cst_33 = arith.constant dense<0xFF800000> : vector<2x8xf32>
    %79 = vector.multi_reduction <maximumf>, %78, %cst_33 [2] : vector<2x8x8xf32> to vector<2x8xf32>
    %80 = vector.shape_cast %79 : vector<2x8xf32> to vector<2x8x1xf32>
    %81 = vector.broadcast %80 : vector<2x8x1xf32> to vector<2x8x8xf32>
    %82 = arith.subf %78, %81 : vector<2x8x8xf32>
    %83 = math.exp %82 : vector<2x8x8xf32>
    %cst_34 = arith.constant dense<0.000000e+00> : vector<2x8xf32>
    %84 = vector.multi_reduction <add>, %83, %cst_34 [2] : vector<2x8x8xf32> to vector<2x8xf32>
    %85 = vector.shape_cast %84 : vector<2x8xf32> to vector<2x8x1xf32>
    %86 = tpu.reciprocal %85 : vector<2x8x1xf32> -> vector<2x8x1xf32>
    %87 = vector.broadcast %86 : vector<2x8x1xf32> to vector<2x8x8xf32>
    %88 = arith.mulf %83, %87 : vector<2x8x8xf32>
    %cst_35 = arith.constant dense<0.000000e+00> : vector<2x8x8xf32>
    %89 = tpu.matmul %88, %77, %cst_35 {dimension_numbers = #tpu.dot_dimension_numbers<[2], [1], [1], [2], [0, 0, 0, 1, 1, 2], [0], [0]>} : vector<2x8x8xf32>, vector<2x8x8xf32>, vector<2x8x8xf32> -> vector<2x8x8xf32>
    %90 = vector.shape_cast %89 : vector<2x8x8xf32> to vector<16x8xf32>
    %c0_36 = arith.constant 0 : index
    %c24 = arith.constant 24 : index
    %91 = vector.load %arg9[%c0_36, %c24] : memref<16x32xf32, #tpu.memory_space<vmem>>, vector<16x8xf32>
    tpu.vector_store %arg9[%c0_36, %c24], %90 {strides = array<i32>} : memref<16x32xf32, #tpu.memory_space<vmem>>, vector<16x8xf32>,
    %c0_37 = arith.constant 0 : index
    %c0_38 = arith.constant 0 : index
    %92 = vector.load %arg9[%c0_37, %c0_38] : memref<16x32xf32, #tpu.memory_space<vmem>>, vector<16x32xf32>
    %c0_39 = arith.constant 0 : index
    %c0_40 = arith.constant 0 : index
    %93 = vector.load %arg7[%c0_39, %c0_40] : memref<32x32xf32, #tpu.memory_space<vmem>>, vector<32x32xf32>
    %cst_41 = arith.constant dense<0.000000e+00> : vector<16x32xf32>
    %94 = tpu.matmul %92, %93, %cst_41 {dimension_numbers = #tpu.dot_dimension_numbers<[1], [0], [0], [1], [0, 0, 1, 1], [], []>} : vector<16x32xf32>, vector<32x32xf32>, vector<16x32xf32> -> vector<16x32xf32>
    %95 = vector.shape_cast %94 : vector<16x32xf32> to vector<2x8x32xf32>
    %c0_42 = arith.constant 0 : index
    %c0_43 = arith.constant 0 : index
    %c0_44 = arith.constant 0 : index
    %96 = vector.load %arg8[%c0_42, %c0_43, %c0_44] : memref<2x8x32xf32, #tpu.memory_space<vmem>>, vector<2x8x32xf32>
    tpu.vector_store %arg8[%c0_42, %c0_43, %c0_44], %95 {strides = array<i32>} : memref<2x8x32xf32, #tpu.memory_space<vmem>>, vector<2x8x32xf32>,
    return
  }
  func.func @transform_0(%arg0: i32) -> (i32, i32, i32) {
    %c0_i32 = arith.constant 0 : i32
    %c0_i32_0 = arith.constant 0 : i32
    %c0_i32_1 = arith.constant 0 : i32
    return %arg0, %c0_i32, %c0_i32_0 : i32, i32, i32
  }
  func.func @transform_1(%arg0: i32) -> (i32, i32, i32) {
    %c0_i32 = arith.constant 0 : i32
    %c0_i32_0 = arith.constant 0 : i32
    %c0_i32_1 = arith.constant 0 : i32
    return %arg0, %c0_i32, %c0_i32_0 : i32, i32, i32
  }
  func.func @transform_2(%arg0: i32) -> (i32, i32, i32) {
    %c0_i32 = arith.constant 0 : i32
    %c0_i32_0 = arith.constant 0 : i32
    %c0_i32_1 = arith.constant 0 : i32
    return %arg0, %c0_i32, %c0_i32_0 : i32, i32, i32
  }
  func.func @transform_3(%arg0: i32) -> (i32, i32) {
    %c0_i32 = arith.constant 0 : i32
    %c0_i32_0 = arith.constant 0 : i32
    %c0_i32_1 = arith.constant 0 : i32
    return %c0_i32, %c0_i32_0 : i32, i32
  }
  func.func @transform_4(%arg0: i32) -> (i32, i32) {
    %c0_i32 = arith.constant 0 : i32
    %c0_i32_0 = arith.constant 0 : i32
    %c0_i32_1 = arith.constant 0 : i32
    return %c0_i32, %c0_i32_0 : i32, i32
  }
  func.func @transform_5(%arg0: i32) -> (i32, i32) {
    %c0_i32 = arith.constant 0 : i32
    %c0_i32_0 = arith.constant 0 : i32
    %c0_i32_1 = arith.constant 0 : i32
    return %c0_i32, %c0_i32_0 : i32, i32
  }
  func.func @transform_6(%arg0: i32) -> (i32, i32) {
    %c0_i32 = arith.constant 0 : i32
    %c0_i32_0 = arith.constant 0 : i32
    %c0_i32_1 = arith.constant 0 : i32
    return %c0_i32, %c0_i32_0 : i32, i32
  }
  func.func @transform_7(%arg0: i32) -> (i32, i32, i32) {
    %c0_i32 = arith.constant 0 : i32
    %c0_i32_0 = arith.constant 0 : i32
    %c0_i32_1 = arith.constant 0 : i32
    return %arg0, %c0_i32, %c0_i32_0 : i32, i32, i32
  }
}

</mosaic_0001>

<llo_original>
// kernel: tpu_custom_call.1
$region0: #{tpu_custom_call.1}
  #allocation0 [shape = 'u32[]', space=smem, size = 0x4, offset = 0x4, fixed_abs, tag = 'smem constant byte address 0x4 - core index']
  #allocation1 [shape = 'u32[144,128]{1,0:T(1,128)}', space=vmem, size = 0x12000, scoped, tag = 'internal scratch']
  #allocation2 [shape = 'f32[16,32]{1,0:T(8,128)}', space=vmem, size = 0x2000, scoped, tag = 'scratch operand']
  %s0 = inlined_call_operand.hbm [shape: f32[2,8,16], index: 0, kind: input, shape index: {}]
  %s1 = inlined_call_operand.hbm [shape: f32[2,8,16], index: 1, kind: input, shape index: {}]
  %s2 = inlined_call_operand.hbm [shape: f32[2,8,24], index: 2, kind: input, shape index: {}]
  %s3 = inlined_call_operand.hbm [shape: f32[16,32], index: 3, kind: input, shape index: {}]
  %s4 = inlined_call_operand.hbm [shape: f32[16,32], index: 4, kind: input, shape index: {}]
  %s5 = inlined_call_operand.hbm [shape: f32[24,32], index: 5, kind: input, shape index: {}]
  %s6 = inlined_call_operand.hbm [shape: f32[32,32], index: 6, kind: input, shape index: {}]
  %s7 = inlined_call_operand.hbm [shape: f32[2,8,32], index: 7, kind: output, shape index: {}]
  %s8 = sld [smem:[#allocation0]]
  $region66: #{tpu_custom_call.1} parent=0
    _
  %s10 = ssub.s32 1, %s8
  %s11 = scalar_select 0, %s10, %s8
  $region1: #{tpu_custom_call.1} parent=0
    #allocation3 [shape = 'u8[8192]{0}', space=vmem, size = 0x2000, scoped, tag = 'input window, operand 0, single buffered']
    #allocation4 [shape = 's32[1]{0}', space=sflag, size = 0x4, scoped, tag = 'scoped memory for tpu_custom_call.1']
    #allocation5 [shape = 's32[1]{0}', space=sflag, size = 0x4, scoped, tag = 'scoped memory for tpu_custom_call.1']
    #allocation6 [shape = 'u8[8192]{0}', space=vmem, size = 0x2000, scoped, tag = 'input window, operand 1, single buffered']
    #allocation7 [shape = 's32[1]{0}', space=sflag, size = 0x4, scoped, tag = 'scoped memory for tpu_custom_call.1']
    #allocation8 [shape = 'u8[8192]{0}', space=vmem, size = 0x2000, scoped, tag = 'input window, operand 2, single buffered']
    #allocation9 [shape = 'u8[8192]{0}', space=vmem, size = 0x2000, scoped, tag = 'input window, operand 3, single buffered']
    #allocation10 [shape = 's32[1]{0}', space=sflag, size = 0x4, scoped, tag = 'scoped memory for tpu_custom_call.1']
    #allocation11 [shape = 'u8[8192]{0}', space=vmem, size = 0x2000, scoped, tag = 'input window, operand 4, single buffered']
    #allocation12 [shape = 'u8[12288]{0}', space=vmem, size = 0x3000, scoped, tag = 'input window, operand 5, single buffered']
    #allocation13 [shape = 's32[1]{0}', space=sflag, size = 0x4, scoped, tag = 'scoped memory for tpu_custom_call.1']
    #allocation14 [shape = 'u8[16384]{0}', space=vmem, size = 0x4000, scoped, tag = 'input window, operand 6, single buffered']
    #allocation15 [shape = 'u8[8192]{0}', space=vmem, size = 0x2000, scoped, tag = 'output window, operand 0, single buffered']
    %12 = vsyncpa [#allocation4], 0
    %13 = vsyncpa [#allocation7], 0
    %14 = vsyncpa [#allocation10], 0
    %15 = vsyncpa [#allocation13], 0
    %16 = vsyncpa [#allocation5], 0
    // Predicated region
    $region2: #{tpu_custom_call.1} parent=1 // pred_check
      _
    $region3: #{tpu_custom_call.1} parent=1 // pred_check_branch
      %18 = sbr.rel (0) target = $region5
    $region4: #{tpu_custom_call.1} parent=1 // pred_region
      %s20 = ssub.s32 256, 256
      %21 = vsyncadd [#allocation4], %s20
      %s22 = sshll.u32 [#allocation3], 4
      %s23 = int_to_ptr.vmem [resolvable:$true] %s22
      %28 = dma.hbm_to_vmem [thread:$0]  %s0, 256, %s23, [#allocation4], 128, 128, 8
    $region5: #{tpu_custom_call.1} parent=1 // pred_fallthru
      _
    // Predicated region
    $region6: #{tpu_custom_call.1} parent=1 // pred_check
      _
    $region7: #{tpu_custom_call.1} parent=1 // pred_check_branch
      %30 = sbr.rel (0) target = $region9
    $region8: #{tpu_custom_call.1} parent=1 // pred_region
      %s32 = ssub.s32 256, 256
      %33 = vsyncadd [#allocation7], %s32
      %s34 = sshll.u32 [#allocation6], 4
      %s35 = int_to_ptr.vmem [resolvable:$true] %s34
      %40 = dma.hbm_to_vmem [thread:$0]  %s1, 256, %s35, [#allocation7], 128, 128, 8
    $region9: #{tpu_custom_call.1} parent=1 // pred_fallthru
      _
    // Predicated region
    $region10: #{tpu_custom_call.1} parent=1 // pred_check
      _
    $region11: #{tpu_custom_call.1} parent=1 // pred_check_branch
      %42 = sbr.rel (0) target = $region13
    $region12: #{tpu_custom_call.1} parent=1 // pred_region
      %s44 = ssub.s32 256, 256
      %45 = vsyncadd [#allocation7], %s44
      %s46 = sshll.u32 [#allocation8], 4
      %s47 = int_to_ptr.vmem [resolvable:$true] %s46
      %52 = dma.hbm_to_vmem [thread:$0]  %s2, 256, %s47, [#allocation7], 128, 128, 8
    $region13: #{tpu_custom_call.1} parent=1 // pred_fallthru
      _
    // Predicated region
    $region14: #{tpu_custom_call.1} parent=1 // pred_check
      _
    $region15: #{tpu_custom_call.1} parent=1 // pred_check_branch
      %54 = sbr.rel (0) target = $region17
    $region16: #{tpu_custom_call.1} parent=1 // pred_region
      %s56 = ssub.s32 256, 256
      %57 = vsyncadd [#allocation10], %s56
      %s58 = sshll.u32 [#allocation9], 4
      %s59 = int_to_ptr.vmem [resolvable:$true] %s58
      %64 = dma.hbm_to_vmem [thread:$0]  %s3, 256, %s59, [#allocation10], 128, 128, 8
    $region17: #{tpu_custom_call.1} parent=1 // pred_fallthru
      _
    // Predicated region
    $region18: #{tpu_custom_call.1} parent=1 // pred_check
      _
    $region19: #{tpu_custom_call.1} parent=1 // pred_check_branch
      %66 = sbr.rel (0) target = $region21
    $region20: #{tpu_custom_call.1} parent=1 // pred_region
      %s68 = ssub.s32 256, 256
      %69 = vsyncadd [#allocation10], %s68
      %s70 = sshll.u32 [#allocation11], 4
      %s71 = int_to_ptr.vmem [resolvable:$true] %s70
      %76 = dma.hbm_to_vmem [thread:$0]  %s4, 256, %s71, [#allocation10], 128, 128, 8
    $region21: #{tpu_custom_call.1} parent=1 // pred_fallthru
      _
    // Predicated region
    $region22: #{tpu_custom_call.1} parent=1 // pred_check
      _
    $region23: #{tpu_custom_call.1} parent=1 // pred_check_branch
      %78 = sbr.rel (0) target = $region25
    $region24: #{tpu_custom_call.1} parent=1 // pred_region
      %s80 = ssub.s32 384, 384
      %81 = vsyncadd [#allocation13], %s80
      %s82 = sshll.u32 [#allocation12], 4
      %s83 = int_to_ptr.vmem [resolvable:$true] %s82
      %88 = dma.hbm_to_vmem [thread:$0]  %s5, 384, %s83, [#allocation13], 128, 128, 8
    $region25: #{tpu_custom_call.1} parent=1 // pred_fallthru
      _
    // Predicated region
    $region26: #{tpu_custom_call.1} parent=1 // pred_check
      _
    $region27: #{tpu_custom_call.1} parent=1 // pred_check_branch
      %90 = sbr.rel (0) target = $region29
    $region28: #{tpu_custom_call.1} parent=1 // pred_region
      %s92 = ssub.s32 512, 512
      %93 = vsyncadd [#allocation13], %s92
      %s94 = sshll.u32 [#allocation14], 4
      %s95 = int_to_ptr.vmem [resolvable:$true] %s94
      %100 = dma.hbm_to_vmem [thread:$0]  %s6, 512, %s95, [#allocation13], 128, 128, 8
    $region29: #{tpu_custom_call.1} parent=1 // pred_fallthru
      _
    // Predicated region
    $region30: #{tpu_custom_call.1} parent=1 // pred_check
      _
    $region31: #{tpu_custom_call.1} parent=1 // pred_check_branch
      %102 = sbr.rel (0) target = $region33
    $region32: #{tpu_custom_call.1} parent=1 // pred_region
      %103 = dma.done [#allocation4], 256
    $region33: #{tpu_custom_call.1} parent=1 // pred_fallthru
      _
    // Predicated region
    $region34: #{tpu_custom_call.1} parent=1 // pred_check
      _
    $region35: #{tpu_custom_call.1} parent=1 // pred_check_branch
      %105 = sbr.rel (0) target = $region37
    $region36: #{tpu_custom_call.1} parent=1 // pred_region
      %106 = dma.done [#allocation7], 256
    $region37: #{tpu_custom_call.1} parent=1 // pred_fallthru
      _
    // Predicated region
    $region38: #{tpu_custom_call.1} parent=1 // pred_check
      _
    $region39: #{tpu_custom_call.1} parent=1 // pred_check_branch
      %108 = sbr.rel (0) target = $region41
    $region40: #{tpu_custom_call.1} parent=1 // pred_region
      %109 = dma.done [#allocation7], 256
    $region41: #{tpu_custom_call.1} parent=1 // pred_fallthru
      _
    // Predicated region
    $region42: #{tpu_custom_call.1} parent=1 // pred_check
      _
    $region43: #{tpu_custom_call.1} parent=1 // pred_check_branch
      %111 = sbr.rel (0) target = $region45
    $region44: #{tpu_custom_call.1} parent=1 // pred_region
      %112 = dma.done [#allocation10], 256
    $region45: #{tpu_custom_call.1} parent=1 // pred_fallthru
      _
    // Predicated region
    $region46: #{tpu_custom_call.1} parent=1 // pred_check
      _
    $region47: #{tpu_custom_call.1} parent=1 // pred_check_branch
      %114 = sbr.rel (0) target = $region49
    $region48: #{tpu_custom_call.1} parent=1 // pred_region
      %115 = dma.done [#allocation10], 256
    $region49: #{tpu_custom_call.1} parent=1 // pred_fallthru
      _
    // Predicated region
    $region50: #{tpu_custom_call.1} parent=1 // pred_check
      _
    $region51: #{tpu_custom_call.1} parent=1 // pred_check_branch
      %117 = sbr.rel (0) target = $region53
    $region52: #{tpu_custom_call.1} parent=1 // pred_region
      %118 = dma.done [#allocation13], 384
    $region53: #{tpu_custom_call.1} parent=1 // pred_fallthru
      _
    // Predicated region
    $region54: #{tpu_custom_call.1} parent=1 // pred_check
      _
    $region55: #{tpu_custom_call.1} parent=1 // pred_check_branch
      %120 = sbr.rel (0) target = $region57
    $region56: #{tpu_custom_call.1} parent=1 // pred_region
      %121 = dma.done [#allocation13], 512
    $region57: #{tpu_custom_call.1} parent=1 // pred_fallthru
      _
    %v122 = vld [vmem:[#allocation3] sm:$0xff]
    %v123 = vld [vmem:[#allocation3 + $0x8] sm:$0xff]
    %v124 = vld [vmem:[#allocation6] sm:$0xff]
    %v125 = vld [vmem:[#allocation6 + $0x8] sm:$0xff]
    %v126 = vld [vmem:[#allocation8] sm:$0xff]
    %v127 = vld [vmem:[#allocation8 + $0x8] sm:$0xff]
    %v128 = vld [vmem:[#allocation9] sm:$0xff]
    %v129 = vld [vmem:[#allocation9 + $0x8] sm:$0xff]
    %vm130 = vcmask 130048
    %v132 = vsel %vm130, %v122, 0
    %v135 = vsel %vm130, %v123, 0
    %137 = vmatprep.subr.mxu0 0.0
    %138 = vmatpush1.msra.mxu0 %v128
    %139 = vmatprep.subr.mxu0 0.0
    %140 = vmatpush1.msra.mxu0 %v129
    %141 = vmatprep.subr.mxu0 0.0
    %142 = vmatpush1.msra.mxu0 0.0
    %143 = vmatprep.subr.mxu0 0.0
    %144 = vmatpush1.msra.mxu0 0.0
    %145 = vmatprep.subr.mxu0 0.0
    %146 = vmatpush1.msra.mxu0 0.0
    %147 = vmatprep.subr.mxu0 0.0
    %148 = vmatpush1.msra.mxu0 0.0
    %149 = vmatprep.subr.mxu0 0.0
    %150 = vmatpush1.msra.mxu0 0.0
    %151 = vmatprep.subr.mxu0 0.0
    %152 = vmatpush1.msra.mxu0 0.0
    %153 = vmatprep.subr.mxu0 0.0
    %154 = vmatpush1.msra.mxu0 0.0
    %155 = vmatprep.subr.mxu0 0.0
    %156 = vmatpush1.msra.mxu0 0.0
    %157 = vmatprep.subr.mxu0 0.0
    %158 = vmatpush1.msra.mxu0 0.0
    %159 = vmatprep.subr.mxu0 0.0
    %160 = vmatpush1.msra.mxu0 0.0
    %161 = vmatprep.subr.mxu0 0.0
    %162 = vmatpush1.msra.mxu0 0.0
    %163 = vmatprep.subr.mxu0 0.0
    %164 = vmatpush1.msra.mxu0 0.0
    %165 = vmatprep.subr.mxu0 0.0
    %166 = vmatpush1.msra.mxu0 0.0
    %167 = vmatprep.subr.mxu0 0.0
    %168 = vmatpush1.msra.mxu0 0.0
    %169 = vmatprep.subr.mxu0 0.0
    %170 = vmatpush1.msra.mxu0 0.0
    %171 = vmatprep.subr.mxu0 0.0
    %172 = vmatpush1.msra.mxu0 0.0
    %173 = vmatprep.subr.mxu0 0.0
    %174 = vmatpush1.msra.mxu0 0.0
    %175 = vmatprep.subr.mxu0 0.0
    %176 = vmatpush1.msra.mxu0 0.0
    %177 = vmatprep.subr.mxu0 0.0
    %178 = vmatpush1.msra.mxu0 0.0
    %179 = vmatprep.subr.mxu0 0.0
    %180 = vmatpush1.msra.mxu0 0.0
    %181 = vmatprep.subr.mxu0 0.0
    %182 = vmatpush1.msra.mxu0 0.0
    %183 = vmatprep.subr.mxu0 0.0
    %184 = vmatpush1.msra.mxu0 0.0
    %185 = vmatprep.subr.mxu0 0.0
    %186 = vmatpush1.msra.mxu0 0.0
    %187 = vmatprep.subr.mxu0 0.0
    %188 = vmatpush1.msra.mxu0 0.0
    %189 = vmatprep.subr.mxu0 0.0
    %190 = vmatpush1.msra.mxu0 0.0
    %191 = vmatprep.subr.mxu0 0.0
    %192 = vmatpush1.msra.mxu0 0.0
    %193 = vmatprep.subr.mxu0 0.0
    %194 = vmatpush1.msra.mxu0 0.0
    %195 = vmatprep.subr.mxu0 0.0
    %196 = vmatpush1.msra.mxu0 0.0
    %197 = vmatprep.subr.mxu0 0.0
    %198 = vmatpush1.msra.mxu0 0.0
    %199 = vmatprep.subr.mxu0 0.0
    %200 = vmatpush1.msra.mxu0 0.0
    %201 = vmatprep.mubr.f32.mxu0 0.0
    %202 = vmatmul.mubr.f32.gmra.mrb[0].mxu0 %v132
    %v203 = vpop.f32.mrb[0].mxu0
    %v204 = vadd.f32 0.0, %v203
    %v205 = vpop.f32.mrb[0].mxu0
    %206 = vmatprep.mubr.f32.mxu0 0.0
    %207 = vmatmul.mubr.f32.gmra.mrb[0].mxu0 %v135
    %v208 = vpop.f32.mrb[0].mxu0
    %v209 = vadd.f32 0.0, %v208
    %v210 = vpop.f32.mrb[0].mxu0
    %211 = vdwg.mxu0
    %v212 = vld [vmem:[#allocation11] sm:$0xff]
    %v213 = vld [vmem:[#allocation11 + $0x8] sm:$0xff]
    %v215 = vsel %vm130, %v124, 0
    %v218 = vsel %vm130, %v125, 0
    %220 = vmatprep.subr.mxu0 0.0
    %221 = vmatpush1.msra.mxu0 %v212
    %222 = vmatprep.subr.mxu0 0.0
    %223 = vmatpush1.msra.mxu0 %v213
    %224 = vmatprep.subr.mxu0 0.0
    %225 = vmatpush1.msra.mxu0 0.0
    %226 = vmatprep.subr.mxu0 0.0
    %227 = vmatpush1.msra.mxu0 0.0
    %228 = vmatprep.subr.mxu0 0.0
    %229 = vmatpush1.msra.mxu0 0.0
    %230 = vmatprep.subr.mxu0 0.0
    %231 = vmatpush1.msra.mxu0 0.0
    %232 = vmatprep.subr.mxu0 0.0
    %233 = vmatpush1.msra.mxu0 0.0
    %234 = vmatprep.subr.mxu0 0.0
    %235 = vmatpush1.msra.mxu0 0.0
    %236 = vmatprep.subr.mxu0 0.0
    %237 = vmatpush1.msra.mxu0 0.0
    %238 = vmatprep.subr.mxu0 0.0
    %239 = vmatpush1.msra.mxu0 0.0
    %240 = vmatprep.subr.mxu0 0.0
    %241 = vmatpush1.msra.mxu0 0.0
    %242 = vmatprep.subr.mxu0 0.0
    %243 = vmatpush1.msra.mxu0 0.0
    %244 = vmatprep.subr.mxu0 0.0
    %245 = vmatpush1.msra.mxu0 0.0
    %246 = vmatprep.subr.mxu0 0.0
    %247 = vmatpush1.msra.mxu0 0.0
    %248 = vmatprep.subr.mxu0 0.0
    %249 = vmatpush1.msra.mxu0 0.0
    %250 = vmatprep.subr.mxu0 0.0
    %251 = vmatpush1.msra.mxu0 0.0
    %252 = vmatprep.subr.mxu0 0.0
    %253 = vmatpush1.msra.mxu0 0.0
    %254 = vmatprep.subr.mxu0 0.0
    %255 = vmatpush1.msra.mxu0 0.0
    %256 = vmatprep.subr.mxu0 0.0
    %257 = vmatpush1.msra.mxu0 0.0
    %258 = vmatprep.subr.mxu0 0.0
    %259 = vmatpush1.msra.mxu0 0.0
    %260 = vmatprep.subr.mxu0 0.0
    %261 = vmatpush1.msra.mxu0 0.0
    %262 = vmatprep.subr.mxu0 0.0
    %263 = vmatpush1.msra.mxu0 0.0
    %264 = vmatprep.subr.mxu0 0.0
    %265 = vmatpush1.msra.mxu0 0.0
    %266 = vmatprep.subr.mxu0 0.0
    %267 = vmatpush1.msra.mxu0 0.0
    %268 = vmatprep.subr.mxu0 0.0
    %269 = vmatpush1.msra.mxu0 0.0
    %270 = vmatprep.subr.mxu0 0.0
    %271 = vmatpush1.msra.mxu0 0.0
    %272 = vmatprep.subr.mxu0 0.0
    %273 = vmatpush1.msra.mxu0 0.0
    %274 = vmatprep.subr.mxu0 0.0
    %275 = vmatpush1.msra.mxu0 0.0
    %276 = vmatprep.subr.mxu0 0.0
    %277 = vmatpush1.msra.mxu0 0.0
    %278 = vmatprep.subr.mxu0 0.0
    %279 = vmatpush1.msra.mxu0 0.0
    %280 = vmatprep.subr.mxu0 0.0
    %281 = vmatpush1.msra.mxu0 0.0
    %282 = vmatprep.subr.mxu0 0.0
    %283 = vmatpush1.msra.mxu0 0.0
    %284 = vmatprep.mubr.f32.mxu0 0.0
    %285 = vmatmul.mubr.f32.gmra.mrb[0].mxu0 %v215
    %v286 = vpop.f32.mrb[0].mxu0
    %v287 = vadd.f32 0.0, %v286
    %v288 = vpop.f32.mrb[0].mxu0
    %289 = vmatprep.mubr.f32.mxu0 0.0
    %290 = vmatmul.mubr.f32.gmra.mrb[0].mxu0 %v218
    %v291 = vpop.f32.mrb[0].mxu0
    %v292 = vadd.f32 0.0, %v291
    %v293 = vpop.f32.mrb[0].mxu0
    %294 = vdwg.mxu0
    %v295 = vld [vmem:[#allocation12] sm:$0xff]
    %v296 = vld [vmem:[#allocation12 + $0x8] sm:$0xff]
    %v297 = vld [vmem:[#allocation12 + $0x10] sm:$0xff]
    %vm298 = vcmask 195584
    %v300 = vsel %vm298, %v126, 0
    %v303 = vsel %vm298, %v127, 0
    %305 = vmatprep.subr.mxu0 0.0
    %306 = vmatpush1.msra.mxu0 %v295
    %307 = vmatprep.subr.mxu0 0.0
    %308 = vmatpush1.msra.mxu0 %v296
    %309 = vmatprep.subr.mxu0 0.0
    %310 = vmatpush1.msra.mxu0 %v297
    %311 = vmatprep.subr.mxu0 0.0
    %312 = vmatpush1.msra.mxu0 0.0
    %313 = vmatprep.subr.mxu0 0.0
    %314 = vmatpush1.msra.mxu0 0.0
    %315 = vmatprep.subr.mxu0 0.0
    %316 = vmatpush1.msra.mxu0 0.0
    %317 = vmatprep.subr.mxu0 0.0
    %318 = vmatpush1.msra.mxu0 0.0
    %319 = vmatprep.subr.mxu0 0.0
    %320 = vmatpush1.msra.mxu0 0.0
    %321 = vmatprep.subr.mxu0 0.0
    %322 = vmatpush1.msra.mxu0 0.0
    %323 = vmatprep.subr.mxu0 0.0
    %324 = vmatpush1.msra.mxu0 0.0
    %325 = vmatprep.subr.mxu0 0.0
    %326 = vmatpush1.msra.mxu0 0.0
    %327 = vmatprep.subr.mxu0 0.0
    %328 = vmatpush1.msra.mxu0 0.0
    %329 = vmatprep.subr.mxu0 0.0
    %330 = vmatpush1.msra.mxu0 0.0
    %331 = vmatprep.subr.mxu0 0.0
    %332 = vmatpush1.msra.mxu0 0.0
    %333 = vmatprep.subr.mxu0 0.0
    %334 = vmatpush1.msra.mxu0 0.0
    %335 = vmatprep.subr.mxu0 0.0
    %336 = vmatpush1.msra.mxu0 0.0
    %337 = vmatprep.subr.mxu0 0.0
    %338 = vmatpush1.msra.mxu0 0.0
    %339 = vmatprep.subr.mxu0 0.0
    %340 = vmatpush1.msra.mxu0 0.0
    %341 = vmatprep.subr.mxu0 0.0
    %342 = vmatpush1.msra.mxu0 0.0
    %343 = vmatprep.subr.mxu0 0.0
    %344 = vmatpush1.msra.mxu0 0.0
    %345 = vmatprep.subr.mxu0 0.0
    %346 = vmatpush1.msra.mxu0 0.0
    %347 = vmatprep.subr.mxu0 0.0
    %348 = vmatpush1.msra.mxu0 0.0
    %349 = vmatprep.subr.mxu0 0.0
    %350 = vmatpush1.msra.mxu0 0.0
    %351 = vmatprep.subr.mxu0 0.0
    %352 = vmatpush1.msra.mxu0 0.0
    %353 = vmatprep.subr.mxu0 0.0
    %354 = vmatpush1.msra.mxu0 0.0
    %355 = vmatprep.subr.mxu0 0.0
    %356 = vmatpush1.msra.mxu0 0.0
    %357 = vmatprep.subr.mxu0 0.0
    %358 = vmatpush1.msra.mxu0 0.0
    %359 = vmatprep.subr.mxu0 0.0
    %360 = vmatpush1.msra.mxu0 0.0
    %361 = vmatprep.subr.mxu0 0.0
    %362 = vmatpush1.msra.mxu0 0.0
    %363 = vmatprep.subr.mxu0 0.0
    %364 = vmatpush1.msra.mxu0 0.0
    %365 = vmatprep.subr.mxu0 0.0
    %366 = vmatpush1.msra.mxu0 0.0
    %367 = vmatprep.subr.mxu0 0.0
    %368 = vmatpush1.msra.mxu0 0.0
    %369 = vmatprep.mubr.f32.mxu0 0.0
    %370 = vmatmul.mubr.f32.gmra.mrb[0].mxu0 %v300
    %v371 = vpop.f32.mrb[0].mxu0
    %v372 = vadd.f32 0.0, %v371
    %v373 = vpop.f32.mrb[0].mxu0
    %374 = vmatprep.mubr.f32.mxu0 0.0
    %375 = vmatmul.mubr.f32.gmra.mrb[0].mxu0 %v303
    %v376 = vpop.f32.mrb[0].mxu0
    %v377 = vadd.f32 0.0, %v376
    %v378 = vpop.f32.mrb[0].mxu0
    %379 = vdwg.mxu0
    %vm380 = vcmask 64512
    %v382 = vsel %vm380, %v204, 0
    %v385 = vsel %vm380, %v287, 0
    %387 = vmatprep.subr.mxu0 0.0
    %388 = vmatpush1.xpose.msra.mxu0 %v385
    %389 = vmatprep.subr.mxu0 0.0
    %390 = vmatpush1.xpose.msra.mxu0 0.0
    %391 = vmatprep.subr.mxu0 0.0
    %392 = vmatpush1.xpose.msra.mxu0 0.0
    %393 = vmatprep.subr.mxu0 0.0
    %394 = vmatpush1.xpose.msra.mxu0 0.0
    %395 = vmatprep.subr.mxu0 0.0
    %396 = vmatpush1.xpose.msra.mxu0 0.0
    %397 = vmatprep.subr.mxu0 0.0
    %398 = vmatpush1.xpose.msra.mxu0 0.0
    %399 = vmatprep.subr.mxu0 0.0
    %400 = vmatpush1.xpose.msra.mxu0 0.0
    %401 = vmatprep.subr.mxu0 0.0
    %402 = vmatpush1.xpose.msra.mxu0 0.0
    %403 = vmatprep.subr.mxu0 0.0
    %404 = vmatpush1.xpose.msra.mxu0 0.0
    %405 = vmatprep.subr.mxu0 0.0
    %406 = vmatpush1.xpose.msra.mxu0 0.0
    %407 = vmatprep.subr.mxu0 0.0
    %408 = vmatpush1.xpose.msra.mxu0 0.0
    %409 = vmatprep.subr.mxu0 0.0
    %410 = vmatpush1.xpose.msra.mxu0 0.0
    %411 = vmatprep.subr.mxu0 0.0
    %412 = vmatpush1.xpose.msra.mxu0 0.0
    %413 = vmatprep.subr.mxu0 0.0
    %414 = vmatpush1.xpose.msra.mxu0 0.0
    %415 = vmatprep.subr.mxu0 0.0
    %416 = vmatpush1.xpose.msra.mxu0 0.0
    %417 = vmatprep.subr.mxu0 0.0
    %418 = vmatpush1.xpose.msra.mxu0 0.0
    %419 = vmatprep.subr.mxu0 0.0
    %420 = vmatpush1.xpose.msra.mxu0 0.0
    %421 = vmatprep.subr.mxu0 0.0
    %422 = vmatpush1.xpose.msra.mxu0 0.0
    %423 = vmatprep.subr.mxu0 0.0
    %424 = vmatpush1.xpose.msra.mxu0 0.0
    %425 = vmatprep.subr.mxu0 0.0
    %426 = vmatpush1.xpose.msra.mxu0 0.0
    %427 = vmatprep.subr.mxu0 0.0
    %428 = vmatpush1.xpose.msra.mxu0 0.0
    %429 = vmatprep.subr.mxu0 0.0
    %430 = vmatpush1.xpose.msra.mxu0 0.0
    %431 = vmatprep.subr.mxu0 0.0
    %432 = vmatpush1.xpose.msra.mxu0 0.0
    %433 = vmatprep.subr.mxu0 0.0
    %434 = vmatpush1.xpose.msra.mxu0 0.0
    %435 = vmatprep.subr.mxu0 0.0
    %436 = vmatpush1.xpose.msra.mxu0 0.0
    %437 = vmatprep.subr.mxu0 0.0
    %438 = vmatpush1.xpose.msra.mxu0 0.0
    %439 = vmatprep.subr.mxu0 0.0
    %440 = vmatpush1.xpose.msra.mxu0 0.0
    %441 = vmatprep.subr.mxu0 0.0
    %442 = vmatpush1.xpose.msra.mxu0 0.0
    %443 = vmatprep.subr.mxu0 0.0
    %444 = vmatpush1.xpose.msra.mxu0 0.0
    %445 = vmatprep.subr.mxu0 0.0
    %446 = vmatpush1.xpose.msra.mxu0 0.0
    %447 = vmatprep.subr.mxu0 0.0
    %448 = vmatpush1.xpose.msra.mxu0 0.0
    %449 = vmatprep.subr.mxu0 0.0
    %450 = vmatpush1.xpose.msra.mxu0 0.0
    %451 = vmatprep.mubr.f32.mxu0 0.0
    %452 = vmatmul.mubr.f32.gmra.mrb[0].mxu0 %v382
    %v453 = vpop.f32.mrb[0].mxu0
    %v454 = vadd.f32 0.0, %v453
    %v455 = vpop.f32.mrb[0].mxu0
    %456 = vdwg.mxu0
    %v458 = vsel %vm380, %v209, 0
    %v461 = vsel %vm380, %v292, 0
    %463 = vmatprep.subr.mxu0 0.0
    %464 = vmatpush1.xpose.msra.mxu0 %v461
    %465 = vmatprep.subr.mxu0 0.0
    %466 = vmatpush1.xpose.msra.mxu0 0.0
    %467 = vmatprep.subr.mxu0 0.0
    %468 = vmatpush1.xpose.msra.mxu0 0.0
    %469 = vmatprep.subr.mxu0 0.0
    %470 = vmatpush1.xpose.msra.mxu0 0.0
    %471 = vmatprep.subr.mxu0 0.0
    %472 = vmatpush1.xpose.msra.mxu0 0.0
    %473 = vmatprep.subr.mxu0 0.0
    %474 = vmatpush1.xpose.msra.mxu0 0.0
    %475 = vmatprep.subr.mxu0 0.0
    %476 = vmatpush1.xpose.msra.mxu0 0.0
    %477 = vmatprep.subr.mxu0 0.0
    %478 = vmatpush1.xpose.msra.mxu0 0.0
    %479 = vmatprep.subr.mxu0 0.0
    %480 = vmatpush1.xpose.msra.mxu0 0.0
    %481 = vmatprep.subr.mxu0 0.0
    %482 = vmatpush1.xpose.msra.mxu0 0.0
    %483 = vmatprep.subr.mxu0 0.0
    %484 = vmatpush1.xpose.msra.mxu0 0.0
    %485 = vmatprep.subr.mxu0 0.0
    %486 = vmatpush1.xpose.msra.mxu0 0.0
    %487 = vmatprep.subr.mxu0 0.0
    %488 = vmatpush1.xpose.msra.mxu0 0.0
    %489 = vmatprep.subr.mxu0 0.0
    %490 = vmatpush1.xpose.msra.mxu0 0.0
    %491 = vmatprep.subr.mxu0 0.0
    %492 = vmatpush1.xpose.msra.mxu0 0.0
    %493 = vmatprep.subr.mxu0 0.0
    %494 = vmatpush1.xpose.msra.mxu0 0.0
    %495 = vmatprep.subr.mxu0 0.0
    %496 = vmatpush1.xpose.msra.mxu0 0.0
    %497 = vmatprep.subr.mxu0 0.0
    %498 = vmatpush1.xpose.msra.mxu0 0.0
    %499 = vmatprep.subr.mxu0 0.0
    %500 = vmatpush1.xpose.msra.mxu0 0.0
    %501 = vmatprep.subr.mxu0 0.0
    %502 = vmatpush1.xpose.msra.mxu0 0.0
    %503 = vmatprep.subr.mxu0 0.0
    %504 = vmatpush1.xpose.msra.mxu0 0.0
    %505 = vmatprep.subr.mxu0 0.0
    %506 = vmatpush1.xpose.msra.mxu0 0.0
    %507 = vmatprep.subr.mxu0 0.0
    %508 = vmatpush1.xpose.msra.mxu0 0.0
    %509 = vmatprep.subr.mxu0 0.0
    %510 = vmatpush1.xpose.msra.mxu0 0.0
    %511 = vmatprep.subr.mxu0 0.0
    %512 = vmatpush1.xpose.msra.mxu0 0.0
    %513 = vmatprep.subr.mxu0 0.0
    %514 = vmatpush1.xpose.msra.mxu0 0.0
    %515 = vmatprep.subr.mxu0 0.0
    %516 = vmatpush1.xpose.msra.mxu0 0.0
    %517 = vmatprep.subr.mxu0 0.0
    %518 = vmatpush1.xpose.msra.mxu0 0.0
    %519 = vmatprep.subr.mxu0 0.0
    %520 = vmatpush1.xpose.msra.mxu0 0.0
    %521 = vmatprep.subr.mxu0 0.0
    %522 = vmatpush1.xpose.msra.mxu0 0.0
    %523 = vmatprep.subr.mxu0 0.0
    %524 = vmatpush1.xpose.msra.mxu0 0.0
    %525 = vmatprep.subr.mxu0 0.0
    %526 = vmatpush1.xpose.msra.mxu0 0.0
    %527 = vmatprep.mubr.f32.mxu0 0.0
    %528 = vmatmul.mubr.f32.gmra.mrb[0].mxu0 %v458
    %v529 = vpop.f32.mrb[0].mxu0
    %v530 = vadd.f32 0.0, %v529
    %v531 = vpop.f32.mrb[0].mxu0
    %532 = vdwg.mxu0
    %v533 = vsel %vm380, %v454, -inf
    %534 = vmax.xlane.f32.xlu0 %v533
    %v535 = vpop.xlane.xlu0 %534
    %v536 = vsel %vm380, %v530, -inf
    %537 = vmax.xlane.f32.xlu0 %v536
    %v538 = vpop.xlane.xlu0 %537
    %v539 = vsub.f32 %v454, %v535
    %v540 = vsub.f32 %v530, %v538
    %v541 = vmul.f32 %v539, 1.442695
    %v542 = vpow.pop %v541
    %v543 = vmul.f32 %v540, 1.442695
    %v544 = vpow.pop %v543
    %v545 = vsel %vm380, %v542, 0.0
    %546 = vadd.xlane.f32.xlu0 %v545
    %v547 = vpop.xlane.xlu0 %546
    %v548 = vsel %vm380, %v544, 0.0
    %549 = vadd.xlane.f32.xlu0 %v548
    %v550 = vpop.xlane.xlu0 %549
    %v551 = vrcp.pop %v547
    %v552 = vrcp.pop %v550
    %v553 = vmul.f32 %v542, %v551
    %v554 = vmul.f32 %v544, %v552
    %v556 = vsel %vm380, %v553, 0
    %558 = vmatprep.subr.mxu0 0.0
    %559 = vmatpush1.msra.mxu0 %v372
    %560 = vmatprep.subr.mxu0 0.0
    %561 = vmatpush1.msra.mxu0 0.0
    %562 = vmatprep.subr.mxu0 0.0
    %563 = vmatpush1.msra.mxu0 0.0
    %564 = vmatprep.subr.mxu0 0.0
    %565 = vmatpush1.msra.mxu0 0.0
    %566 = vmatprep.subr.mxu0 0.0
    %567 = vmatpush1.msra.mxu0 0.0
    %568 = vmatprep.subr.mxu0 0.0
    %569 = vmatpush1.msra.mxu0 0.0
    %570 = vmatprep.subr.mxu0 0.0
    %571 = vmatpush1.msra.mxu0 0.0
    %572 = vmatprep.subr.mxu0 0.0
    %573 = vmatpush1.msra.mxu0 0.0
    %574 = vmatprep.subr.mxu0 0.0
    %575 = vmatpush1.msra.mxu0 0.0
    %576 = vmatprep.subr.mxu0 0.0
    %577 = vmatpush1.msra.mxu0 0.0
    %578 = vmatprep.subr.mxu0 0.0
    %579 = vmatpush1.msra.mxu0 0.0
    %580 = vmatprep.subr.mxu0 0.0
    %581 = vmatpush1.msra.mxu0 0.0
    %582 = vmatprep.subr.mxu0 0.0
    %583 = vmatpush1.msra.mxu0 0.0
    %584 = vmatprep.subr.mxu0 0.0
    %585 = vmatpush1.msra.mxu0 0.0
    %586 = vmatprep.subr.mxu0 0.0
    %587 = vmatpush1.msra.mxu0 0.0
    %588 = vmatprep.subr.mxu0 0.0
    %589 = vmatpush1.msra.mxu0 0.0
    %590 = vmatprep.subr.mxu0 0.0
    %591 = vmatpush1.msra.mxu0 0.0
    %592 = vmatprep.subr.mxu0 0.0
    %593 = vmatpush1.msra.mxu0 0.0
    %594 = vmatprep.subr.mxu0 0.0
    %595 = vmatpush1.msra.mxu0 0.0
    %596 = vmatprep.subr.mxu0 0.0
    %597 = vmatpush1.msra.mxu0 0.0
    %598 = vmatprep.subr.mxu0 0.0
    %599 = vmatpush1.msra.mxu0 0.0
    %600 = vmatprep.subr.mxu0 0.0
    %601 = vmatpush1.msra.mxu0 0.0
    %602 = vmatprep.subr.mxu0 0.0
    %603 = vmatpush1.msra.mxu0 0.0
    %604 = vmatprep.subr.mxu0 0.0
    %605 = vmatpush1.msra.mxu0 0.0
    %606 = vmatprep.subr.mxu0 0.0
    %607 = vmatpush1.msra.mxu0 0.0
    %608 = vmatprep.subr.mxu0 0.0
    %609 = vmatpush1.msra.mxu0 0.0
    %610 = vmatprep.subr.mxu0 0.0
    %611 = vmatpush1.msra.mxu0 0.0
    %612 = vmatprep.subr.mxu0 0.0
    %613 = vmatpush1.msra.mxu0 0.0
    %614 = vmatprep.subr.mxu0 0.0
    %615 = vmatpush1.msra.mxu0 0.0
    %616 = vmatprep.subr.mxu0 0.0
    %617 = vmatpush1.msra.mxu0 0.0
    %618 = vmatprep.subr.mxu0 0.0
    %619 = vmatpush1.msra.mxu0 0.0
    %620 = vmatprep.subr.mxu0 0.0
    %621 = vmatpush1.msra.mxu0 0.0
    %622 = vmatprep.mubr.f32.mxu0 0.0
    %623 = vmatmul.mubr.f32.gmra.mrb[0].mxu0 %v556
    %v624 = vpop.f32.mrb[0].mxu0
    %v625 = vadd.f32 0.0, %v624
    %v626 = vpop.f32.mrb[0].mxu0
    %627 = vdwg.mxu0
    %v629 = vsel %vm380, %v554, 0
    %631 = vmatprep.subr.mxu0 0.0
    %632 = vmatpush1.msra.mxu0 %v377
    %633 = vmatprep.subr.mxu0 0.0
    %634 = vmatpush1.msra.mxu0 0.0
    %635 = vmatprep.subr.mxu0 0.0
    %636 = vmatpush1.msra.mxu0 0.0
    %637 = vmatprep.subr.mxu0 0.0
    %638 = vmatpush1.msra.mxu0 0.0
    %639 = vmatprep.subr.mxu0 0.0
    %640 = vmatpush1.msra.mxu0 0.0
    %641 = vmatprep.subr.mxu0 0.0
    %642 = vmatpush1.msra.mxu0 0.0
    %643 = vmatprep.subr.mxu0 0.0
    %644 = vmatpush1.msra.mxu0 0.0
    %645 = vmatprep.subr.mxu0 0.0
    %646 = vmatpush1.msra.mxu0 0.0
    %647 = vmatprep.subr.mxu0 0.0
    %648 = vmatpush1.msra.mxu0 0.0
    %649 = vmatprep.subr.mxu0 0.0
    %650 = vmatpush1.msra.mxu0 0.0
    %651 = vmatprep.subr.mxu0 0.0
    %652 = vmatpush1.msra.mxu0 0.0
    %653 = vmatprep.subr.mxu0 0.0
    %654 = vmatpush1.msra.mxu0 0.0
    %655 = vmatprep.subr.mxu0 0.0
    %656 = vmatpush1.msra.mxu0 0.0
    %657 = vmatprep.subr.mxu0 0.0
    %658 = vmatpush1.msra.mxu0 0.0
    %659 = vmatprep.subr.mxu0 0.0
    %660 = vmatpush1.msra.mxu0 0.0
    %661 = vmatprep.subr.mxu0 0.0
    %662 = vmatpush1.msra.mxu0 0.0
    %663 = vmatprep.subr.mxu0 0.0
    %664 = vmatpush1.msra.mxu0 0.0
    %665 = vmatprep.subr.mxu0 0.0
    %666 = vmatpush1.msra.mxu0 0.0
    %667 = vmatprep.subr.mxu0 0.0
    %668 = vmatpush1.msra.mxu0 0.0
    %669 = vmatprep.subr.mxu0 0.0
    %670 = vmatpush1.msra.mxu0 0.0
    %671 = vmatprep.subr.mxu0 0.0
    %672 = vmatpush1.msra.mxu0 0.0
    %673 = vmatprep.subr.mxu0 0.0
    %674 = vmatpush1.msra.mxu0 0.0
    %675 = vmatprep.subr.mxu0 0.0
    %676 = vmatpush1.msra.mxu0 0.0
    %677 = vmatprep.subr.mxu0 0.0
    %678 = vmatpush1.msra.mxu0 0.0
    %679 = vmatprep.subr.mxu0 0.0
    %680 = vmatpush1.msra.mxu0 0.0
    %681 = vmatprep.subr.mxu0 0.0
    %682 = vmatpush1.msra.mxu0 0.0
    %683 = vmatprep.subr.mxu0 0.0
    %684 = vmatpush1.msra.mxu0 0.0
    %685 = vmatprep.subr.mxu0 0.0
    %686 = vmatpush1.msra.mxu0 0.0
    %687 = vmatprep.subr.mxu0 0.0
    %688 = vmatpush1.msra.mxu0 0.0
    %689 = vmatprep.subr.mxu0 0.0
    %690 = vmatpush1.msra.mxu0 0.0
    %691 = vmatprep.subr.mxu0 0.0
    %692 = vmatpush1.msra.mxu0 0.0
    %693 = vmatprep.subr.mxu0 0.0
    %694 = vmatpush1.msra.mxu0 0.0
    %695 = vmatprep.mubr.f32.mxu0 0.0
    %696 = vmatmul.mubr.f32.gmra.mrb[0].mxu0 %v629
    %v697 = vpop.f32.mrb[0].mxu0
    %v698 = vadd.f32 0.0, %v697
    %v699 = vpop.f32.mrb[0].mxu0
    %700 = vdwg.mxu0
    %701 = vst.msk [vmem:[#allocation2] sm:$0xff] %vm380, %v625
    %702 = vst.msk [vmem:[#allocation2 + $0x8] sm:$0xff] %vm380, %v698
    %703 = vrot.lane.b32.xlu0 %v204, 120
    %v704 = vpop.permute.xlu0 %703
    %705 = vrot.lane.b32.xlu0 %v287, 120
    %v706 = vpop.permute.xlu0 %705
    %v707 = vsel %vm380, %v704, 0
    %v709 = vsel %vm380, %v706, 0
    %711 = vmatprep.subr.mxu0 0.0
    %712 = vmatpush1.xpose.msra.mxu0 %v709
    %713 = vmatprep.subr.mxu0 0.0
    %714 = vmatpush1.xpose.msra.mxu0 0.0
    %715 = vmatprep.subr.mxu0 0.0
    %716 = vmatpush1.xpose.msra.mxu0 0.0
    %717 = vmatprep.subr.mxu0 0.0
    %718 = vmatpush1.xpose.msra.mxu0 0.0
    %719 = vmatprep.subr.mxu0 0.0
    %720 = vmatpush1.xpose.msra.mxu0 0.0
    %721 = vmatprep.subr.mxu0 0.0
    %722 = vmatpush1.xpose.msra.mxu0 0.0
    %723 = vmatprep.subr.mxu0 0.0
    %724 = vmatpush1.xpose.msra.mxu0 0.0
    %725 = vmatprep.subr.mxu0 0.0
    %726 = vmatpush1.xpose.msra.mxu0 0.0
    %727 = vmatprep.subr.mxu0 0.0
    %728 = vmatpush1.xpose.msra.mxu0 0.0
    %729 = vmatprep.subr.mxu0 0.0
    %730 = vmatpush1.xpose.msra.mxu0 0.0
    %731 = vmatprep.subr.mxu0 0.0
    %732 = vmatpush1.xpose.msra.mxu0 0.0
    %733 = vmatprep.subr.mxu0 0.0
    %734 = vmatpush1.xpose.msra.mxu0 0.0
    %735 = vmatprep.subr.mxu0 0.0
    %736 = vmatpush1.xpose.msra.mxu0 0.0
    %737 = vmatprep.subr.mxu0 0.0
    %738 = vmatpush1.xpose.msra.mxu0 0.0
    %739 = vmatprep.subr.mxu0 0.0
    %740 = vmatpush1.xpose.msra.mxu0 0.0
    %741 = vmatprep.subr.mxu0 0.0
    %742 = vmatpush1.xpose.msra.mxu0 0.0
    %743 = vmatprep.subr.mxu0 0.0
    %744 = vmatpush1.xpose.msra.mxu0 0.0
    %745 = vmatprep.subr.mxu0 0.0
    %746 = vmatpush1.xpose.msra.mxu0 0.0
    %747 = vmatprep.subr.mxu0 0.0
    %748 = vmatpush1.xpose.msra.mxu0 0.0
    %749 = vmatprep.subr.mxu0 0.0
    %750 = vmatpush1.xpose.msra.mxu0 0.0
    %751 = vmatprep.subr.mxu0 0.0
    %752 = vmatpush1.xpose.msra.mxu0 0.0
    %753 = vmatprep.subr.mxu0 0.0
    %754 = vmatpush1.xpose.msra.mxu0 0.0
    %755 = vmatprep.subr.mxu0 0.0
    %756 = vmatpush1.xpose.msra.mxu0 0.0
    %757 = vmatprep.subr.mxu0 0.0
    %758 = vmatpush1.xpose.msra.mxu0 0.0
    %759 = vmatprep.subr.mxu0 0.0
    %760 = vmatpush1.xpose.msra.mxu0 0.0
    %761 = vmatprep.subr.mxu0 0.0
    %762 = vmatpush1.xpose.msra.mxu0 0.0
    %763 = vmatprep.subr.mxu0 0.0
    %764 = vmatpush1.xpose.msra.mxu0 0.0
    %765 = vmatprep.subr.mxu0 0.0
    %766 = vmatpush1.xpose.msra.mxu0 0.0
    %767 = vmatprep.subr.mxu0 0.0
    %768 = vmatpush1.xpose.msra.mxu0 0.0
    %769 = vmatprep.subr.mxu0 0.0
    %770 = vmatpush1.xpose.msra.mxu0 0.0
    %771 = vmatprep.subr.mxu0 0.0
    %772 = vmatpush1.xpose.msra.mxu0 0.0
    %773 = vmatprep.subr.mxu0 0.0
    %774 = vmatpush1.xpose.msra.mxu0 0.0
    %775 = vmatprep.mubr.f32.mxu0 0.0
    %776 = vmatmul.mubr.f32.gmra.mrb[0].mxu0 %v707
    %v777 = vpop.f32.mrb[0].mxu0
    %v778 = vadd.f32 0.0, %v777
    %v779 = vpop.f32.mrb[0].mxu0
    %780 = vdwg.mxu0
    %781 = vrot.lane.b32.xlu0 %v209, 120
    %v782 = vpop.permute.xlu0 %781
    %783 = vrot.lane.b32.xlu0 %v292, 120
    %v784 = vpop.permute.xlu0 %783
    %v785 = vsel %vm380, %v782, 0
    %v787 = vsel %vm380, %v784, 0
    %789 = vmatprep.subr.mxu0 0.0
    %790 = vmatpush1.xpose.msra.mxu0 %v787
    %791 = vmatprep.subr.mxu0 0.0
    %792 = vmatpush1.xpose.msra.mxu0 0.0
    %793 = vmatprep.subr.mxu0 0.0
    %794 = vmatpush1.xpose.msra.mxu0 0.0
    %795 = vmatprep.subr.mxu0 0.0
    %796 = vmatpush1.xpose.msra.mxu0 0.0
    %797 = vmatprep.subr.mxu0 0.0
    %798 = vmatpush1.xpose.msra.mxu0 0.0
    %799 = vmatprep.subr.mxu0 0.0
    %800 = vmatpush1.xpose.msra.mxu0 0.0
    %801 = vmatprep.subr.mxu0 0.0
    %802 = vmatpush1.xpose.msra.mxu0 0.0
    %803 = vmatprep.subr.mxu0 0.0
    %804 = vmatpush1.xpose.msra.mxu0 0.0
    %805 = vmatprep.subr.mxu0 0.0
    %806 = vmatpush1.xpose.msra.mxu0 0.0
    %807 = vmatprep.subr.mxu0 0.0
    %808 = vmatpush1.xpose.msra.mxu0 0.0
    %809 = vmatprep.subr.mxu0 0.0
    %810 = vmatpush1.xpose.msra.mxu0 0.0
    %811 = vmatprep.subr.mxu0 0.0
    %812 = vmatpush1.xpose.msra.mxu0 0.0
    %813 = vmatprep.subr.mxu0 0.0
    %814 = vmatpush1.xpose.msra.mxu0 0.0
    %815 = vmatprep.subr.mxu0 0.0
    %816 = vmatpush1.xpose.msra.mxu0 0.0
    %817 = vmatprep.subr.mxu0 0.0
    %818 = vmatpush1.xpose.msra.mxu0 0.0
    %819 = vmatprep.subr.mxu0 0.0
    %820 = vmatpush1.xpose.msra.mxu0 0.0
    %821 = vmatprep.subr.mxu0 0.0
    %822 = vmatpush1.xpose.msra.mxu0 0.0
    %823 = vmatprep.subr.mxu0 0.0
    %824 = vmatpush1.xpose.msra.mxu0 0.0
    %825 = vmatprep.subr.mxu0 0.0
    %826 = vmatpush1.xpose.msra.mxu0 0.0
    %827 = vmatprep.subr.mxu0 0.0
    %828 = vmatpush1.xpose.msra.mxu0 0.0
    %829 = vmatprep.subr.mxu0 0.0
    %830 = vmatpush1.xpose.msra.mxu0 0.0
    %831 = vmatprep.subr.mxu0 0.0
    %832 = vmatpush1.xpose.msra.mxu0 0.0
    %833 = vmatprep.subr.mxu0 0.0
    %834 = vmatpush1.xpose.msra.mxu0 0.0
    %835 = vmatprep.subr.mxu0 0.0
    %836 = vmatpush1.xpose.msra.mxu0 0.0
    %837 = vmatprep.subr.mxu0 0.0
    %838 = vmatpush1.xpose.msra.mxu0 0.0
    %839 = vmatprep.subr.mxu0 0.0
    %840 = vmatpush1.xpose.msra.mxu0 0.0
    %841 = vmatprep.subr.mxu0 0.0
    %842 = vmatpush1.xpose.msra.mxu0 0.0
    %843 = vmatprep.subr.mxu0 0.0
    %844 = vmatpush1.xpose.msra.mxu0 0.0
    %845 = vmatprep.subr.mxu0 0.0
    %846 = vmatpush1.xpose.msra.mxu0 0.0
    %847 = vmatprep.subr.mxu0 0.0
    %848 = vmatpush1.xpose.msra.mxu0 0.0
    %849 = vmatprep.subr.mxu0 0.0
    %850 = vmatpush1.xpose.msra.mxu0 0.0
    %851 = vmatprep.subr.mxu0 0.0
    %852 = vmatpush1.xpose.msra.mxu0 0.0
    %853 = vmatprep.mubr.f32.mxu0 0.0
    %854 = vmatmul.mubr.f32.gmra.mrb[0].mxu0 %v785
    %v855 = vpop.f32.mrb[0].mxu0
    %v856 = vadd.f32 0.0, %v855
    %v857 = vpop.f32.mrb[0].mxu0
    %858 = vdwg.mxu0
    %v859 = vsel %vm380, %v778, -inf
    %860 = vmax.xlane.f32.xlu0 %v859
    %v861 = vpop.xlane.xlu0 %860
    %v862 = vsel %vm380, %v856, -inf
    %863 = vmax.xlane.f32.xlu0 %v862
    %v864 = vpop.xlane.xlu0 %863
    %v865 = vsub.f32 %v778, %v861
    %v866 = vsub.f32 %v856, %v864
    %v867 = vmul.f32 %v865, 1.442695
    %v868 = vpow.pop %v867
    %v869 = vmul.f32 %v866, 1.442695
    %v870 = vpow.pop %v869
    %v871 = vsel %vm380, %v868, 0.0
    %872 = vadd.xlane.f32.xlu0 %v871
    %v873 = vpop.xlane.xlu0 %872
    %v874 = vsel %vm380, %v870, 0.0
    %875 = vadd.xlane.f32.xlu0 %v874
    %v876 = vpop.xlane.xlu0 %875
    %v877 = vrcp.pop %v873
    %v878 = vrcp.pop %v876
    %v879 = vmul.f32 %v868, %v877
    %v880 = vmul.f32 %v870, %v878
    %882 = vrot.lane.b32.xlu0 %v372, 120
    %v883 = vpop.permute.xlu0 %882
    %v886 = vsel %vm380, %v879, 0
    %888 = vmatprep.subr.mxu0 0.0
    %889 = vmatpush1.msra.mxu0 %v883
    %890 = vmatprep.subr.mxu0 0.0
    %891 = vmatpush1.msra.mxu0 0.0
    %892 = vmatprep.subr.mxu0 0.0
    %893 = vmatpush1.msra.mxu0 0.0
    %894 = vmatprep.subr.mxu0 0.0
    %895 = vmatpush1.msra.mxu0 0.0
    %896 = vmatprep.subr.mxu0 0.0
    %897 = vmatpush1.msra.mxu0 0.0
    %898 = vmatprep.subr.mxu0 0.0
    %899 = vmatpush1.msra.mxu0 0.0
    %900 = vmatprep.subr.mxu0 0.0
    %901 = vmatpush1.msra.mxu0 0.0
    %902 = vmatprep.subr.mxu0 0.0
    %903 = vmatpush1.msra.mxu0 0.0
    %904 = vmatprep.subr.mxu0 0.0
    %905 = vmatpush1.msra.mxu0 0.0
    %906 = vmatprep.subr.mxu0 0.0
    %907 = vmatpush1.msra.mxu0 0.0
    %908 = vmatprep.subr.mxu0 0.0
    %909 = vmatpush1.msra.mxu0 0.0
    %910 = vmatprep.subr.mxu0 0.0
    %911 = vmatpush1.msra.mxu0 0.0
    %912 = vmatprep.subr.mxu0 0.0
    %913 = vmatpush1.msra.mxu0 0.0
    %914 = vmatprep.subr.mxu0 0.0
    %915 = vmatpush1.msra.mxu0 0.0
    %916 = vmatprep.subr.mxu0 0.0
    %917 = vmatpush1.msra.mxu0 0.0
    %918 = vmatprep.subr.mxu0 0.0
    %919 = vmatpush1.msra.mxu0 0.0
    %920 = vmatprep.subr.mxu0 0.0
    %921 = vmatpush1.msra.mxu0 0.0
    %922 = vmatprep.subr.mxu0 0.0
    %923 = vmatpush1.msra.mxu0 0.0
    %924 = vmatprep.subr.mxu0 0.0
    %925 = vmatpush1.msra.mxu0 0.0
    %926 = vmatprep.subr.mxu0 0.0
    %927 = vmatpush1.msra.mxu0 0.0
    %928 = vmatprep.subr.mxu0 0.0
    %929 = vmatpush1.msra.mxu0 0.0
    %930 = vmatprep.subr.mxu0 0.0
    %931 = vmatpush1.msra.mxu0 0.0
    %932 = vmatprep.subr.mxu0 0.0
    %933 = vmatpush1.msra.mxu0 0.0
    %934 = vmatprep.subr.mxu0 0.0
    %935 = vmatpush1.msra.mxu0 0.0
    %936 = vmatprep.subr.mxu0 0.0
    %937 = vmatpush1.msra.mxu0 0.0
    %938 = vmatprep.subr.mxu0 0.0
    %939 = vmatpush1.msra.mxu0 0.0
    %940 = vmatprep.subr.mxu0 0.0
    %941 = vmatpush1.msra.mxu0 0.0
    %942 = vmatprep.subr.mxu0 0.0
    %943 = vmatpush1.msra.mxu0 0.0
    %944 = vmatprep.subr.mxu0 0.0
    %945 = vmatpush1.msra.mxu0 0.0
    %946 = vmatprep.subr.mxu0 0.0
    %947 = vmatpush1.msra.mxu0 0.0
    %948 = vmatprep.subr.mxu0 0.0
    %949 = vmatpush1.msra.mxu0 0.0
    %950 = vmatprep.subr.mxu0 0.0
    %951 = vmatpush1.msra.mxu0 0.0
    %952 = vmatprep.mubr.f32.mxu0 0.0
    %953 = vmatmul.mubr.f32.gmra.mrb[0].mxu0 %v886
    %v954 = vpop.f32.mrb[0].mxu0
    %v955 = vadd.f32 0.0, %v954
    %v956 = vpop.f32.mrb[0].mxu0
    %957 = vdwg.mxu0
    %959 = vrot.lane.b32.xlu0 %v377, 120
    %v960 = vpop.permute.xlu0 %959
    %v963 = vsel %vm380, %v880, 0
    %965 = vmatprep.subr.mxu0 0.0
    %966 = vmatpush1.msra.mxu0 %v960
    %967 = vmatprep.subr.mxu0 0.0
    %968 = vmatpush1.msra.mxu0 0.0
    %969 = vmatprep.subr.mxu0 0.0
    %970 = vmatpush1.msra.mxu0 0.0
    %971 = vmatprep.subr.mxu0 0.0
    %972 = vmatpush1.msra.mxu0 0.0
    %973 = vmatprep.subr.mxu0 0.0
    %974 = vmatpush1.msra.mxu0 0.0
    %975 = vmatprep.subr.mxu0 0.0
    %976 = vmatpush1.msra.mxu0 0.0
    %977 = vmatprep.subr.mxu0 0.0
    %978 = vmatpush1.msra.mxu0 0.0
    %979 = vmatprep.subr.mxu0 0.0
    %980 = vmatpush1.msra.mxu0 0.0
    %981 = vmatprep.subr.mxu0 0.0
    %982 = vmatpush1.msra.mxu0 0.0
    %983 = vmatprep.subr.mxu0 0.0
    %984 = vmatpush1.msra.mxu0 0.0
    %985 = vmatprep.subr.mxu0 0.0
    %986 = vmatpush1.msra.mxu0 0.0
    %987 = vmatprep.subr.mxu0 0.0
    %988 = vmatpush1.msra.mxu0 0.0
    %989 = vmatprep.subr.mxu0 0.0
    %990 = vmatpush1.msra.mxu0 0.0
    %991 = vmatprep.subr.mxu0 0.0
    %992 = vmatpush1.msra.mxu0 0.0
    %993 = vmatprep.subr.mxu0 0.0
    %994 = vmatpush1.msra.mxu0 0.0
    %995 = vmatprep.subr.mxu0 0.0
    %996 = vmatpush1.msra.mxu0 0.0
    %997 = vmatprep.subr.mxu0 0.0
    %998 = vmatpush1.msra.mxu0 0.0
    %999 = vmatprep.subr.mxu0 0.0
    %1000 = vmatpush1.msra.mxu0 0.0
    %1001 = vmatprep.subr.mxu0 0.0
    %1002 = vmatpush1.msra.mxu0 0.0
    %1003 = vmatprep.subr.mxu0 0.0
    %1004 = vmatpush1.msra.mxu0 0.0
    %1005 = vmatprep.subr.mxu0 0.0
    %1006 = vmatpush1.msra.mxu0 0.0
    %1007 = vmatprep.subr.mxu0 0.0
    %1008 = vmatpush1.msra.mxu0 0.0
    %1009 = vmatprep.subr.mxu0 0.0
    %1010 = vmatpush1.msra.mxu0 0.0
    %1011 = vmatprep.subr.mxu0 0.0
    %1012 = vmatpush1.msra.mxu0 0.0
    %1013 = vmatprep.subr.mxu0 0.0
    %1014 = vmatpush1.msra.mxu0 0.0
    %1015 = vmatprep.subr.mxu0 0.0
    %1016 = vmatpush1.msra.mxu0 0.0
    %1017 = vmatprep.subr.mxu0 0.0
    %1018 = vmatpush1.msra.mxu0 0.0
    %1019 = vmatprep.subr.mxu0 0.0
    %1020 = vmatpush1.msra.mxu0 0.0
    %1021 = vmatprep.subr.mxu0 0.0
    %1022 = vmatpush1.msra.mxu0 0.0
    %1023 = vmatprep.subr.mxu0 0.0
    %1024 = vmatpush1.msra.mxu0 0.0
    %1025 = vmatprep.subr.mxu0 0.0
    %1026 = vmatpush1.msra.mxu0 0.0
    %1027 = vmatprep.subr.mxu0 0.0
    %1028 = vmatpush1.msra.mxu0 0.0
    %1029 = vmatprep.mubr.f32.mxu0 0.0
    %1030 = vmatmul.mubr.f32.gmra.mrb[0].mxu0 %v963
    %v1031 = vpop.f32.mrb[0].mxu0
    %v1032 = vadd.f32 0.0, %v1031
    %v1033 = vpop.f32.mrb[0].mxu0
    %1034 = vdwg.mxu0
    %1037 = vrot.lane.b32.xlu0 %v955, 8
    %v1038 = vpop.permute.xlu0 %1037
    %1039 = vrot.lane.b32.xlu0 %v1032, 8
    %v1040 = vpop.permute.xlu0 %1039
    %vm1043 = vcmask 130112
    %1044 = vst.msk [vmem:[#allocation2] sm:$0xff] %vm1043, %v1038
    %1045 = vst.msk [vmem:[#allocation2 + $0x8] sm:$0xff] %vm1043, %v1040
    %1046 = vrot.lane.b32.xlu0 %v204, 112
    %v1047 = vpop.permute.xlu0 %1046
    %1048 = vrot.lane.b32.xlu0 %v287, 112
    %v1049 = vpop.permute.xlu0 %1048
    %v1050 = vsel %vm380, %v1047, 0
    %v1052 = vsel %vm380, %v1049, 0
    %1054 = vmatprep.subr.mxu0 0.0
    %1055 = vmatpush1.xpose.msra.mxu0 %v1052
    %1056 = vmatprep.subr.mxu0 0.0
    %1057 = vmatpush1.xpose.msra.mxu0 0.0
    %1058 = vmatprep.subr.mxu0 0.0
    %1059 = vmatpush1.xpose.msra.mxu0 0.0
    %1060 = vmatprep.subr.mxu0 0.0
    %1061 = vmatpush1.xpose.msra.mxu0 0.0
    %1062 = vmatprep.subr.mxu0 0.0
    %1063 = vmatpush1.xpose.msra.mxu0 0.0
    %1064 = vmatprep.subr.mxu0 0.0
    %1065 = vmatpush1.xpose.msra.mxu0 0.0
    %1066 = vmatprep.subr.mxu0 0.0
    %1067 = vmatpush1.xpose.msra.mxu0 0.0
    %1068 = vmatprep.subr.mxu0 0.0
    %1069 = vmatpush1.xpose.msra.mxu0 0.0
    %1070 = vmatprep.subr.mxu0 0.0
    %1071 = vmatpush1.xpose.msra.mxu0 0.0
    %1072 = vmatprep.subr.mxu0 0.0
    %1073 = vmatpush1.xpose.msra.mxu0 0.0
    %1074 = vmatprep.subr.mxu0 0.0
    %1075 = vmatpush1.xpose.msra.mxu0 0.0
    %1076 = vmatprep.subr.mxu0 0.0
    %1077 = vmatpush1.xpose.msra.mxu0 0.0
    %1078 = vmatprep.subr.mxu0 0.0
    %1079 = vmatpush1.xpose.msra.mxu0 0.0
    %1080 = vmatprep.subr.mxu0 0.0
    %1081 = vmatpush1.xpose.msra.mxu0 0.0
    %1082 = vmatprep.subr.mxu0 0.0
    %1083 = vmatpush1.xpose.msra.mxu0 0.0
    %1084 = vmatprep.subr.mxu0 0.0
    %1085 = vmatpush1.xpose.msra.mxu0 0.0
    %1086 = vmatprep.subr.mxu0 0.0
    %1087 = vmatpush1.xpose.msra.mxu0 0.0
    %1088 = vmatprep.subr.mxu0 0.0
    %1089 = vmatpush1.xpose.msra.mxu0 0.0
    %1090 = vmatprep.subr.mxu0 0.0
    %1091 = vmatpush1.xpose.msra.mxu0 0.0
    %1092 = vmatprep.subr.mxu0 0.0
    %1093 = vmatpush1.xpose.msra.mxu0 0.0
    %1094 = vmatprep.subr.mxu0 0.0
    %1095 = vmatpush1.xpose.msra.mxu0 0.0
    %1096 = vmatprep.subr.mxu0 0.0
    %1097 = vmatpush1.xpose.msra.mxu0 0.0
    %1098 = vmatprep.subr.mxu0 0.0
    %1099 = vmatpush1.xpose.msra.mxu0 0.0
    %1100 = vmatprep.subr.mxu0 0.0
    %1101 = vmatpush1.xpose.msra.mxu0 0.0
    %1102 = vmatprep.subr.mxu0 0.0
    %1103 = vmatpush1.xpose.msra.mxu0 0.0
    %1104 = vmatprep.subr.mxu0 0.0
    %1105 = vmatpush1.xpose.msra.mxu0 0.0
    %1106 = vmatprep.subr.mxu0 0.0
    %1107 = vmatpush1.xpose.msra.mxu0 0.0
    %1108 = vmatprep.subr.mxu0 0.0
    %1109 = vmatpush1.xpose.msra.mxu0 0.0
    %1110 = vmatprep.subr.mxu0 0.0
    %1111 = vmatpush1.xpose.msra.mxu0 0.0
    %1112 = vmatprep.subr.mxu0 0.0
    %1113 = vmatpush1.xpose.msra.mxu0 0.0
    %1114 = vmatprep.subr.mxu0 0.0
    %1115 = vmatpush1.xpose.msra.mxu0 0.0
    %1116 = vmatprep.subr.mxu0 0.0
    %1117 = vmatpush1.xpose.msra.mxu0 0.0
    %1118 = vmatprep.mubr.f32.mxu0 0.0
    %1119 = vmatmul.mubr.f32.gmra.mrb[0].mxu0 %v1050
    %v1120 = vpop.f32.mrb[0].mxu0
    %v1121 = vadd.f32 0.0, %v1120
    %v1122 = vpop.f32.mrb[0].mxu0
    %1123 = vdwg.mxu0
    %1124 = vrot.lane.b32.xlu0 %v209, 112
    %v1125 = vpop.permute.xlu0 %1124
    %1126 = vrot.lane.b32.xlu0 %v292, 112
    %v1127 = vpop.permute.xlu0 %1126
    %v1128 = vsel %vm380, %v1125, 0
    %v1130 = vsel %vm380, %v1127, 0
    %1132 = vmatprep.subr.mxu0 0.0
    %1133 = vmatpush1.xpose.msra.mxu0 %v1130
    %1134 = vmatprep.subr.mxu0 0.0
    %1135 = vmatpush1.xpose.msra.mxu0 0.0
    %1136 = vmatprep.subr.mxu0 0.0
    %1137 = vmatpush1.xpose.msra.mxu0 0.0
    %1138 = vmatprep.subr.mxu0 0.0
    %1139 = vmatpush1.xpose.msra.mxu0 0.0
    %1140 = vmatprep.subr.mxu0 0.0
    %1141 = vmatpush1.xpose.msra.mxu0 0.0
    %1142 = vmatprep.subr.mxu0 0.0
    %1143 = vmatpush1.xpose.msra.mxu0 0.0
    %1144 = vmatprep.subr.mxu0 0.0
    %1145 = vmatpush1.xpose.msra.mxu0 0.0
    %1146 = vmatprep.subr.mxu0 0.0
    %1147 = vmatpush1.xpose.msra.mxu0 0.0
    %1148 = vmatprep.subr.mxu0 0.0
    %1149 = vmatpush1.xpose.msra.mxu0 0.0
    %1150 = vmatprep.subr.mxu0 0.0
    %1151 = vmatpush1.xpose.msra.mxu0 0.0
    %1152 = vmatprep.subr.mxu0 0.0
    %1153 = vmatpush1.xpose.msra.mxu0 0.0
    %1154 = vmatprep.subr.mxu0 0.0
    %1155 = vmatpush1.xpose.msra.mxu0 0.0
    %1156 = vmatprep.subr.mxu0 0.0
    %1157 = vmatpush1.xpose.msra.mxu0 0.0
    %1158 = vmatprep.subr.mxu0 0.0
    %1159 = vmatpush1.xpose.msra.mxu0 0.0
    %1160 = vmatprep.subr.mxu0 0.0
    %1161 = vmatpush1.xpose.msra.mxu0 0.0
    %1162 = vmatprep.subr.mxu0 0.0
    %1163 = vmatpush1.xpose.msra.mxu0 0.0
    %1164 = vmatprep.subr.mxu0 0.0
    %1165 = vmatpush1.xpose.msra.mxu0 0.0
    %1166 = vmatprep.subr.mxu0 0.0
    %1167 = vmatpush1.xpose.msra.mxu0 0.0
    %1168 = vmatprep.subr.mxu0 0.0
    %1169 = vmatpush1.xpose.msra.mxu0 0.0
    %1170 = vmatprep.subr.mxu0 0.0
    %1171 = vmatpush1.xpose.msra.mxu0 0.0
    %1172 = vmatprep.subr.mxu0 0.0
    %1173 = vmatpush1.xpose.msra.mxu0 0.0
    %1174 = vmatprep.subr.mxu0 0.0
    %1175 = vmatpush1.xpose.msra.mxu0 0.0
    %1176 = vmatprep.subr.mxu0 0.0
    %1177 = vmatpush1.xpose.msra.mxu0 0.0
    %1178 = vmatprep.subr.mxu0 0.0
    %1179 = vmatpush1.xpose.msra.mxu0 0.0
    %1180 = vmatprep.subr.mxu0 0.0
    %1181 = vmatpush1.xpose.msra.mxu0 0.0
    %1182 = vmatprep.subr.mxu0 0.0
    %1183 = vmatpush1.xpose.msra.mxu0 0.0
    %1184 = vmatprep.subr.mxu0 0.0
    %1185 = vmatpush1.xpose.msra.mxu0 0.0
    %1186 = vmatprep.subr.mxu0 0.0
    %1187 = vmatpush1.xpose.msra.mxu0 0.0
    %1188 = vmatprep.subr.mxu0 0.0
    %1189 = vmatpush1.xpose.msra.mxu0 0.0
    %1190 = vmatprep.subr.mxu0 0.0
    %1191 = vmatpush1.xpose.msra.mxu0 0.0
    %1192 = vmatprep.subr.mxu0 0.0
    %1193 = vmatpush1.xpose.msra.mxu0 0.0
    %1194 = vmatprep.subr.mxu0 0.0
    %1195 = vmatpush1.xpose.msra.mxu0 0.0
    %1196 = vmatprep.mubr.f32.mxu0 0.0
    %1197 = vmatmul.mubr.f32.gmra.mrb[0].mxu0 %v1128
    %v1198 = vpop.f32.mrb[0].mxu0
    %v1199 = vadd.f32 0.0, %v1198
    %v1200 = vpop.f32.mrb[0].mxu0
    %1201 = vdwg.mxu0
    %v1202 = vsel %vm380, %v1121, -inf
    %1203 = vmax.xlane.f32.xlu0 %v1202
    %v1204 = vpop.xlane.xlu0 %1203
    %v1205 = vsel %vm380, %v1199, -inf
    %1206 = vmax.xlane.f32.xlu0 %v1205
    %v1207 = vpop.xlane.xlu0 %1206
    %v1208 = vsub.f32 %v1121, %v1204
    %v1209 = vsub.f32 %v1199, %v1207
    %v1210 = vmul.f32 %v1208, 1.442695
    %v1211 = vpow.pop %v1210
    %v1212 = vmul.f32 %v1209, 1.442695
    %v1213 = vpow.pop %v1212
    %v1214 = vsel %vm380, %v1211, 0.0
    %1215 = vadd.xlane.f32.xlu0 %v1214
    %v1216 = vpop.xlane.xlu0 %1215
    %v1217 = vsel %vm380, %v1213, 0.0
    %1218 = vadd.xlane.f32.xlu0 %v1217
    %v1219 = vpop.xlane.xlu0 %1218
    %v1220 = vrcp.pop %v1216
    %v1221 = vrcp.pop %v1219
    %v1222 = vmul.f32 %v1211, %v1220
    %v1223 = vmul.f32 %v1213, %v1221
    %1224 = vrot.lane.b32.xlu0 %v372, 112
    %v1225 = vpop.permute.xlu0 %1224
    %v1228 = vsel %vm380, %v1222, 0
    %1230 = vmatprep.subr.mxu0 0.0
    %1231 = vmatpush1.msra.mxu0 %v1225
    %1232 = vmatprep.subr.mxu0 0.0
    %1233 = vmatpush1.msra.mxu0 0.0
    %1234 = vmatprep.subr.mxu0 0.0
    %1235 = vmatpush1.msra.mxu0 0.0
    %1236 = vmatprep.subr.mxu0 0.0
    %1237 = vmatpush1.msra.mxu0 0.0
    %1238 = vmatprep.subr.mxu0 0.0
    %1239 = vmatpush1.msra.mxu0 0.0
    %1240 = vmatprep.subr.mxu0 0.0
    %1241 = vmatpush1.msra.mxu0 0.0
    %1242 = vmatprep.subr.mxu0 0.0
    %1243 = vmatpush1.msra.mxu0 0.0
    %1244 = vmatprep.subr.mxu0 0.0
    %1245 = vmatpush1.msra.mxu0 0.0
    %1246 = vmatprep.subr.mxu0 0.0
    %1247 = vmatpush1.msra.mxu0 0.0
    %1248 = vmatprep.subr.mxu0 0.0
    %1249 = vmatpush1.msra.mxu0 0.0
    %1250 = vmatprep.subr.mxu0 0.0
    %1251 = vmatpush1.msra.mxu0 0.0
    %1252 = vmatprep.subr.mxu0 0.0
    %1253 = vmatpush1.msra.mxu0 0.0
    %1254 = vmatprep.subr.mxu0 0.0
    %1255 = vmatpush1.msra.mxu0 0.0
    %1256 = vmatprep.subr.mxu0 0.0
    %1257 = vmatpush1.msra.mxu0 0.0
    %1258 = vmatprep.subr.mxu0 0.0
    %1259 = vmatpush1.msra.mxu0 0.0
    %1260 = vmatprep.subr.mxu0 0.0
    %1261 = vmatpush1.msra.mxu0 0.0
    %1262 = vmatprep.subr.mxu0 0.0
    %1263 = vmatpush1.msra.mxu0 0.0
    %1264 = vmatprep.subr.mxu0 0.0
    %1265 = vmatpush1.msra.mxu0 0.0
    %1266 = vmatprep.subr.mxu0 0.0
    %1267 = vmatpush1.msra.mxu0 0.0
    %1268 = vmatprep.subr.mxu0 0.0
    %1269 = vmatpush1.msra.mxu0 0.0
    %1270 = vmatprep.subr.mxu0 0.0
    %1271 = vmatpush1.msra.mxu0 0.0
    %1272 = vmatprep.subr.mxu0 0.0
    %1273 = vmatpush1.msra.mxu0 0.0
    %1274 = vmatprep.subr.mxu0 0.0
    %1275 = vmatpush1.msra.mxu0 0.0
    %1276 = vmatprep.subr.mxu0 0.0
    %1277 = vmatpush1.msra.mxu0 0.0
    %1278 = vmatprep.subr.mxu0 0.0
    %1279 = vmatpush1.msra.mxu0 0.0
    %1280 = vmatprep.subr.mxu0 0.0
    %1281 = vmatpush1.msra.mxu0 0.0
    %1282 = vmatprep.subr.mxu0 0.0
    %1283 = vmatpush1.msra.mxu0 0.0
    %1284 = vmatprep.subr.mxu0 0.0
    %1285 = vmatpush1.msra.mxu0 0.0
    %1286 = vmatprep.subr.mxu0 0.0
    %1287 = vmatpush1.msra.mxu0 0.0
    %1288 = vmatprep.subr.mxu0 0.0
    %1289 = vmatpush1.msra.mxu0 0.0
    %1290 = vmatprep.subr.mxu0 0.0
    %1291 = vmatpush1.msra.mxu0 0.0
    %1292 = vmatprep.subr.mxu0 0.0
    %1293 = vmatpush1.msra.mxu0 0.0
    %1294 = vmatprep.mubr.f32.mxu0 0.0
    %1295 = vmatmul.mubr.f32.gmra.mrb[0].mxu0 %v1228
    %v1296 = vpop.f32.mrb[0].mxu0
    %v1297 = vadd.f32 0.0, %v1296
    %v1298 = vpop.f32.mrb[0].mxu0
    %1299 = vdwg.mxu0
    %1300 = vrot.lane.b32.xlu0 %v377, 112
    %v1301 = vpop.permute.xlu0 %1300
    %v1304 = vsel %vm380, %v1223, 0
    %1306 = vmatprep.subr.mxu0 0.0
    %1307 = vmatpush1.msra.mxu0 %v1301
    %1308 = vmatprep.subr.mxu0 0.0
    %1309 = vmatpush1.msra.mxu0 0.0
    %1310 = vmatprep.subr.mxu0 0.0
    %1311 = vmatpush1.msra.mxu0 0.0
    %1312 = vmatprep.subr.mxu0 0.0
    %1313 = vmatpush1.msra.mxu0 0.0
    %1314 = vmatprep.subr.mxu0 0.0
    %1315 = vmatpush1.msra.mxu0 0.0
    %1316 = vmatprep.subr.mxu0 0.0
    %1317 = vmatpush1.msra.mxu0 0.0
    %1318 = vmatprep.subr.mxu0 0.0
    %1319 = vmatpush1.msra.mxu0 0.0
    %1320 = vmatprep.subr.mxu0 0.0
    %1321 = vmatpush1.msra.mxu0 0.0
    %1322 = vmatprep.subr.mxu0 0.0
    %1323 = vmatpush1.msra.mxu0 0.0
    %1324 = vmatprep.subr.mxu0 0.0
    %1325 = vmatpush1.msra.mxu0 0.0
    %1326 = vmatprep.subr.mxu0 0.0
    %1327 = vmatpush1.msra.mxu0 0.0
    %1328 = vmatprep.subr.mxu0 0.0
    %1329 = vmatpush1.msra.mxu0 0.0
    %1330 = vmatprep.subr.mxu0 0.0
    %1331 = vmatpush1.msra.mxu0 0.0
    %1332 = vmatprep.subr.mxu0 0.0
    %1333 = vmatpush1.msra.mxu0 0.0
    %1334 = vmatprep.subr.mxu0 0.0
    %1335 = vmatpush1.msra.mxu0 0.0
    %1336 = vmatprep.subr.mxu0 0.0
    %1337 = vmatpush1.msra.mxu0 0.0
    %1338 = vmatprep.subr.mxu0 0.0
    %1339 = vmatpush1.msra.mxu0 0.0
    %1340 = vmatprep.subr.mxu0 0.0
    %1341 = vmatpush1.msra.mxu0 0.0
    %1342 = vmatprep.subr.mxu0 0.0
    %1343 = vmatpush1.msra.mxu0 0.0
    %1344 = vmatprep.subr.mxu0 0.0
    %1345 = vmatpush1.msra.mxu0 0.0
    %1346 = vmatprep.subr.mxu0 0.0
    %1347 = vmatpush1.msra.mxu0 0.0
    %1348 = vmatprep.subr.mxu0 0.0
    %1349 = vmatpush1.msra.mxu0 0.0
    %1350 = vmatprep.subr.mxu0 0.0
    %1351 = vmatpush1.msra.mxu0 0.0
    %1352 = vmatprep.subr.mxu0 0.0
    %1353 = vmatpush1.msra.mxu0 0.0
    %1354 = vmatprep.subr.mxu0 0.0
    %1355 = vmatpush1.msra.mxu0 0.0
    %1356 = vmatprep.subr.mxu0 0.0
    %1357 = vmatpush1.msra.mxu0 0.0
    %1358 = vmatprep.subr.mxu0 0.0
    %1359 = vmatpush1.msra.mxu0 0.0
    %1360 = vmatprep.subr.mxu0 0.0
    %1361 = vmatpush1.msra.mxu0 0.0
    %1362 = vmatprep.subr.mxu0 0.0
    %1363 = vmatpush1.msra.mxu0 0.0
    %1364 = vmatprep.subr.mxu0 0.0
    %1365 = vmatpush1.msra.mxu0 0.0
    %1366 = vmatprep.subr.mxu0 0.0
    %1367 = vmatpush1.msra.mxu0 0.0
    %1368 = vmatprep.subr.mxu0 0.0
    %1369 = vmatpush1.msra.mxu0 0.0
    %1370 = vmatprep.mubr.f32.mxu0 0.0
    %1371 = vmatmul.mubr.f32.gmra.mrb[0].mxu0 %v1304
    %v1372 = vpop.f32.mrb[0].mxu0
    %v1373 = vadd.f32 0.0, %v1372
    %v1374 = vpop.f32.mrb[0].mxu0
    %1375 = vdwg.mxu0
    %1378 = vrot.lane.b32.xlu0 %v1297, 16
    %v1379 = vpop.permute.xlu0 %1378
    %1380 = vrot.lane.b32.xlu0 %v1373, 16
    %v1381 = vpop.permute.xlu0 %1380
    %vm1384 = vcmask 195712
    %1385 = vst.msk [vmem:[#allocation2] sm:$0xff] %vm1384, %v1379
    %1386 = vst.msk [vmem:[#allocation2 + $0x8] sm:$0xff] %vm1384, %v1381
    %1387 = vrot.lane.b32.xlu0 %v204, 104
    %v1388 = vpop.permute.xlu0 %1387
    %1389 = vrot.lane.b32.xlu0 %v287, 104
    %v1390 = vpop.permute.xlu0 %1389
    %v1391 = vsel %vm380, %v1388, 0
    %v1393 = vsel %vm380, %v1390, 0
    %1395 = vmatprep.subr.mxu0 0.0
    %1396 = vmatpush1.xpose.msra.mxu0 %v1393
    %1397 = vmatprep.subr.mxu0 0.0
    %1398 = vmatpush1.xpose.msra.mxu0 0.0
    %1399 = vmatprep.subr.mxu0 0.0
    %1400 = vmatpush1.xpose.msra.mxu0 0.0
    %1401 = vmatprep.subr.mxu0 0.0
    %1402 = vmatpush1.xpose.msra.mxu0 0.0
    %1403 = vmatprep.subr.mxu0 0.0
    %1404 = vmatpush1.xpose.msra.mxu0 0.0
    %1405 = vmatprep.subr.mxu0 0.0
    %1406 = vmatpush1.xpose.msra.mxu0 0.0
    %1407 = vmatprep.subr.mxu0 0.0
    %1408 = vmatpush1.xpose.msra.mxu0 0.0
    %1409 = vmatprep.subr.mxu0 0.0
    %1410 = vmatpush1.xpose.msra.mxu0 0.0
    %1411 = vmatprep.subr.mxu0 0.0
    %1412 = vmatpush1.xpose.msra.mxu0 0.0
    %1413 = vmatprep.subr.mxu0 0.0
    %1414 = vmatpush1.xpose.msra.mxu0 0.0
    %1415 = vmatprep.subr.mxu0 0.0
    %1416 = vmatpush1.xpose.msra.mxu0 0.0
    %1417 = vmatprep.subr.mxu0 0.0
    %1418 = vmatpush1.xpose.msra.mxu0 0.0
    %1419 = vmatprep.subr.mxu0 0.0
    %1420 = vmatpush1.xpose.msra.mxu0 0.0
    %1421 = vmatprep.subr.mxu0 0.0
    %1422 = vmatpush1.xpose.msra.mxu0 0.0
    %1423 = vmatprep.subr.mxu0 0.0
    %1424 = vmatpush1.xpose.msra.mxu0 0.0
    %1425 = vmatprep.subr.mxu0 0.0
    %1426 = vmatpush1.xpose.msra.mxu0 0.0
    %1427 = vmatprep.subr.mxu0 0.0
    %1428 = vmatpush1.xpose.msra.mxu0 0.0
    %1429 = vmatprep.subr.mxu0 0.0
    %1430 = vmatpush1.xpose.msra.mxu0 0.0
    %1431 = vmatprep.subr.mxu0 0.0
    %1432 = vmatpush1.xpose.msra.mxu0 0.0
    %1433 = vmatprep.subr.mxu0 0.0
    %1434 = vmatpush1.xpose.msra.mxu0 0.0
    %1435 = vmatprep.subr.mxu0 0.0
    %1436 = vmatpush1.xpose.msra.mxu0 0.0
    %1437 = vmatprep.subr.mxu0 0.0
    %1438 = vmatpush1.xpose.msra.mxu0 0.0
    %1439 = vmatprep.subr.mxu0 0.0
    %1440 = vmatpush1.xpose.msra.mxu0 0.0
    %1441 = vmatprep.subr.mxu0 0.0
    %1442 = vmatpush1.xpose.msra.mxu0 0.0
    %1443 = vmatprep.subr.mxu0 0.0
    %1444 = vmatpush1.xpose.msra.mxu0 0.0
    %1445 = vmatprep.subr.mxu0 0.0
    %1446 = vmatpush1.xpose.msra.mxu0 0.0
    %1447 = vmatprep.subr.mxu0 0.0
    %1448 = vmatpush1.xpose.msra.mxu0 0.0
    %1449 = vmatprep.subr.mxu0 0.0
    %1450 = vmatpush1.xpose.msra.mxu0 0.0
    %1451 = vmatprep.subr.mxu0 0.0
    %1452 = vmatpush1.xpose.msra.mxu0 0.0
    %1453 = vmatprep.subr.mxu0 0.0
    %1454 = vmatpush1.xpose.msra.mxu0 0.0
    %1455 = vmatprep.subr.mxu0 0.0
    %1456 = vmatpush1.xpose.msra.mxu0 0.0
    %1457 = vmatprep.subr.mxu0 0.0
    %1458 = vmatpush1.xpose.msra.mxu0 0.0
    %1459 = vmatprep.mubr.f32.mxu0 0.0
    %1460 = vmatmul.mubr.f32.gmra.mrb[0].mxu0 %v1391
    %v1461 = vpop.f32.mrb[0].mxu0
    %v1462 = vadd.f32 0.0, %v1461
    %v1463 = vpop.f32.mrb[0].mxu0
    %1464 = vdwg.mxu0
    %1465 = vrot.lane.b32.xlu0 %v209, 104
    %v1466 = vpop.permute.xlu0 %1465
    %1467 = vrot.lane.b32.xlu0 %v292, 104
    %v1468 = vpop.permute.xlu0 %1467
    %v1469 = vsel %vm380, %v1466, 0
    %v1471 = vsel %vm380, %v1468, 0
    %1473 = vmatprep.subr.mxu0 0.0
    %1474 = vmatpush1.xpose.msra.mxu0 %v1471
    %1475 = vmatprep.subr.mxu0 0.0
    %1476 = vmatpush1.xpose.msra.mxu0 0.0
    %1477 = vmatprep.subr.mxu0 0.0
    %1478 = vmatpush1.xpose.msra.mxu0 0.0
    %1479 = vmatprep.subr.mxu0 0.0
    %1480 = vmatpush1.xpose.msra.mxu0 0.0
    %1481 = vmatprep.subr.mxu0 0.0
    %1482 = vmatpush1.xpose.msra.mxu0 0.0
    %1483 = vmatprep.subr.mxu0 0.0
    %1484 = vmatpush1.xpose.msra.mxu0 0.0
    %1485 = vmatprep.subr.mxu0 0.0
    %1486 = vmatpush1.xpose.msra.mxu0 0.0
    %1487 = vmatprep.subr.mxu0 0.0
    %1488 = vmatpush1.xpose.msra.mxu0 0.0
    %1489 = vmatprep.subr.mxu0 0.0
    %1490 = vmatpush1.xpose.msra.mxu0 0.0
    %1491 = vmatprep.subr.mxu0 0.0
    %1492 = vmatpush1.xpose.msra.mxu0 0.0
    %1493 = vmatprep.subr.mxu0 0.0
    %1494 = vmatpush1.xpose.msra.mxu0 0.0
    %1495 = vmatprep.subr.mxu0 0.0
    %1496 = vmatpush1.xpose.msra.mxu0 0.0
    %1497 = vmatprep.subr.mxu0 0.0
    %1498 = vmatpush1.xpose.msra.mxu0 0.0
    %1499 = vmatprep.subr.mxu0 0.0
    %1500 = vmatpush1.xpose.msra.mxu0 0.0
    %1501 = vmatprep.subr.mxu0 0.0
    %1502 = vmatpush1.xpose.msra.mxu0 0.0
    %1503 = vmatprep.subr.mxu0 0.0
    %1504 = vmatpush1.xpose.msra.mxu0 0.0
    %1505 = vmatprep.subr.mxu0 0.0
    %1506 = vmatpush1.xpose.msra.mxu0 0.0
    %1507 = vmatprep.subr.mxu0 0.0
    %1508 = vmatpush1.xpose.msra.mxu0 0.0
    %1509 = vmatprep.subr.mxu0 0.0
    %1510 = vmatpush1.xpose.msra.mxu0 0.0
    %1511 = vmatprep.subr.mxu0 0.0
    %1512 = vmatpush1.xpose.msra.mxu0 0.0
    %1513 = vmatprep.subr.mxu0 0.0
    %1514 = vmatpush1.xpose.msra.mxu0 0.0
    %1515 = vmatprep.subr.mxu0 0.0
    %1516 = vmatpush1.xpose.msra.mxu0 0.0
    %1517 = vmatprep.subr.mxu0 0.0
    %1518 = vmatpush1.xpose.msra.mxu0 0.0
    %1519 = vmatprep.subr.mxu0 0.0
    %1520 = vmatpush1.xpose.msra.mxu0 0.0
    %1521 = vmatprep.subr.mxu0 0.0
    %1522 = vmatpush1.xpose.msra.mxu0 0.0
    %1523 = vmatprep.subr.mxu0 0.0
    %1524 = vmatpush1.xpose.msra.mxu0 0.0
    %1525 = vmatprep.subr.mxu0 0.0
    %1526 = vmatpush1.xpose.msra.mxu0 0.0
    %1527 = vmatprep.subr.mxu0 0.0
    %1528 = vmatpush1.xpose.msra.mxu0 0.0
    %1529 = vmatprep.subr.mxu0 0.0
    %1530 = vmatpush1.xpose.msra.mxu0 0.0
    %1531 = vmatprep.subr.mxu0 0.0
    %1532 = vmatpush1.xpose.msra.mxu0 0.0
    %1533 = vmatprep.subr.mxu0 0.0
    %1534 = vmatpush1.xpose.msra.mxu0 0.0
    %1535 = vmatprep.subr.mxu0 0.0
    %1536 = vmatpush1.xpose.msra.mxu0 0.0
    %1537 = vmatprep.mubr.f32.mxu0 0.0
    %1538 = vmatmul.mubr.f32.gmra.mrb[0].mxu0 %v1469
    %v1539 = vpop.f32.mrb[0].mxu0
    %v1540 = vadd.f32 0.0, %v1539
    %v1541 = vpop.f32.mrb[0].mxu0
    %1542 = vdwg.mxu0
    %v1543 = vsel %vm380, %v1462, -inf
    %1544 = vmax.xlane.f32.xlu0 %v1543
    %v1545 = vpop.xlane.xlu0 %1544
    %v1546 = vsel %vm380, %v1540, -inf
    %1547 = vmax.xlane.f32.xlu0 %v1546
    %v1548 = vpop.xlane.xlu0 %1547
    %v1549 = vsub.f32 %v1462, %v1545
    %v1550 = vsub.f32 %v1540, %v1548
    %v1551 = vmul.f32 %v1549, 1.442695
    %v1552 = vpow.pop %v1551
    %v1553 = vmul.f32 %v1550, 1.442695
    %v1554 = vpow.pop %v1553
    %v1555 = vsel %vm380, %v1552, 0.0
    %1556 = vadd.xlane.f32.xlu0 %v1555
    %v1557 = vpop.xlane.xlu0 %1556
    %v1558 = vsel %vm380, %v1554, 0.0
    %1559 = vadd.xlane.f32.xlu0 %v1558
    %v1560 = vpop.xlane.xlu0 %1559
    %v1561 = vrcp.pop %v1557
    %v1562 = vrcp.pop %v1560
    %v1563 = vmul.f32 %v1552, %v1561
    %v1564 = vmul.f32 %v1554, %v1562
    %1565 = vrot.lane.b32.xlu0 %v372, 104
    %v1566 = vpop.permute.xlu0 %1565
    %v1569 = vsel %vm380, %v1563, 0
    %1571 = vmatprep.subr.mxu0 0.0
    %1572 = vmatpush1.msra.mxu0 %v1566
    %1573 = vmatprep.subr.mxu0 0.0
    %1574 = vmatpush1.msra.mxu0 0.0
    %1575 = vmatprep.subr.mxu0 0.0
    %1576 = vmatpush1.msra.mxu0 0.0
    %1577 = vmatprep.subr.mxu0 0.0
    %1578 = vmatpush1.msra.mxu0 0.0
    %1579 = vmatprep.subr.mxu0 0.0
    %1580 = vmatpush1.msra.mxu0 0.0
    %1581 = vmatprep.subr.mxu0 0.0
    %1582 = vmatpush1.msra.mxu0 0.0
    %1583 = vmatprep.subr.mxu0 0.0
    %1584 = vmatpush1.msra.mxu0 0.0
    %1585 = vmatprep.subr.mxu0 0.0
    %1586 = vmatpush1.msra.mxu0 0.0
    %1587 = vmatprep.subr.mxu0 0.0
    %1588 = vmatpush1.msra.mxu0 0.0
    %1589 = vmatprep.subr.mxu0 0.0
    %1590 = vmatpush1.msra.mxu0 0.0
    %1591 = vmatprep.subr.mxu0 0.0
    %1592 = vmatpush1.msra.mxu0 0.0
    %1593 = vmatprep.subr.mxu0 0.0
    %1594 = vmatpush1.msra.mxu0 0.0
    %1595 = vmatprep.subr.mxu0 0.0
    %1596 = vmatpush1.msra.mxu0 0.0
    %1597 = vmatprep.subr.mxu0 0.0
    %1598 = vmatpush1.msra.mxu0 0.0
    %1599 = vmatprep.subr.mxu0 0.0
    %1600 = vmatpush1.msra.mxu0 0.0
    %1601 = vmatprep.subr.mxu0 0.0
    %1602 = vmatpush1.msra.mxu0 0.0
    %1603 = vmatprep.subr.mxu0 0.0
    %1604 = vmatpush1.msra.mxu0 0.0
    %1605 = vmatprep.subr.mxu0 0.0
    %1606 = vmatpush1.msra.mxu0 0.0
    %1607 = vmatprep.subr.mxu0 0.0
    %1608 = vmatpush1.msra.mxu0 0.0
    %1609 = vmatprep.subr.mxu0 0.0
    %1610 = vmatpush1.msra.mxu0 0.0
    %1611 = vmatprep.subr.mxu0 0.0
    %1612 = vmatpush1.msra.mxu0 0.0
    %1613 = vmatprep.subr.mxu0 0.0
    %1614 = vmatpush1.msra.mxu0 0.0
    %1615 = vmatprep.subr.mxu0 0.0
    %1616 = vmatpush1.msra.mxu0 0.0
    %1617 = vmatprep.subr.mxu0 0.0
    %1618 = vmatpush1.msra.mxu0 0.0
    %1619 = vmatprep.subr.mxu0 0.0
    %1620 = vmatpush1.msra.mxu0 0.0
    %1621 = vmatprep.subr.mxu0 0.0
    %1622 = vmatpush1.msra.mxu0 0.0
    %1623 = vmatprep.subr.mxu0 0.0
    %1624 = vmatpush1.msra.mxu0 0.0
    %1625 = vmatprep.subr.mxu0 0.0
    %1626 = vmatpush1.msra.mxu0 0.0
    %1627 = vmatprep.subr.mxu0 0.0
    %1628 = vmatpush1.msra.mxu0 0.0
    %1629 = vmatprep.subr.mxu0 0.0
    %1630 = vmatpush1.msra.mxu0 0.0
    %1631 = vmatprep.subr.mxu0 0.0
    %1632 = vmatpush1.msra.mxu0 0.0
    %1633 = vmatprep.subr.mxu0 0.0
    %1634 = vmatpush1.msra.mxu0 0.0
    %1635 = vmatprep.mubr.f32.mxu0 0.0
    %1636 = vmatmul.mubr.f32.gmra.mrb[0].mxu0 %v1569
    %v1637 = vpop.f32.mrb[0].mxu0
    %v1638 = vadd.f32 0.0, %v1637
    %v1639 = vpop.f32.mrb[0].mxu0
    %1640 = vdwg.mxu0
    %1641 = vrot.lane.b32.xlu0 %v377, 104
    %v1642 = vpop.permute.xlu0 %1641
    %v1645 = vsel %vm380, %v1564, 0
    %1647 = vmatprep.subr.mxu0 0.0
    %1648 = vmatpush1.msra.mxu0 %v1642
    %1649 = vmatprep.subr.mxu0 0.0
    %1650 = vmatpush1.msra.mxu0 0.0
    %1651 = vmatprep.subr.mxu0 0.0
    %1652 = vmatpush1.msra.mxu0 0.0
    %1653 = vmatprep.subr.mxu0 0.0
    %1654 = vmatpush1.msra.mxu0 0.0
    %1655 = vmatprep.subr.mxu0 0.0
    %1656 = vmatpush1.msra.mxu0 0.0
    %1657 = vmatprep.subr.mxu0 0.0
    %1658 = vmatpush1.msra.mxu0 0.0
    %1659 = vmatprep.subr.mxu0 0.0
    %1660 = vmatpush1.msra.mxu0 0.0
    %1661 = vmatprep.subr.mxu0 0.0
    %1662 = vmatpush1.msra.mxu0 0.0
    %1663 = vmatprep.subr.mxu0 0.0
    %1664 = vmatpush1.msra.mxu0 0.0
    %1665 = vmatprep.subr.mxu0 0.0
    %1666 = vmatpush1.msra.mxu0 0.0
    %1667 = vmatprep.subr.mxu0 0.0
    %1668 = vmatpush1.msra.mxu0 0.0
    %1669 = vmatprep.subr.mxu0 0.0
    %1670 = vmatpush1.msra.mxu0 0.0
    %1671 = vmatprep.subr.mxu0 0.0
    %1672 = vmatpush1.msra.mxu0 0.0
    %1673 = vmatprep.subr.mxu0 0.0
    %1674 = vmatpush1.msra.mxu0 0.0
    %1675 = vmatprep.subr.mxu0 0.0
    %1676 = vmatpush1.msra.mxu0 0.0
    %1677 = vmatprep.subr.mxu0 0.0
    %1678 = vmatpush1.msra.mxu0 0.0
    %1679 = vmatprep.subr.mxu0 0.0
    %1680 = vmatpush1.msra.mxu0 0.0
    %1681 = vmatprep.subr.mxu0 0.0
    %1682 = vmatpush1.msra.mxu0 0.0
    %1683 = vmatprep.subr.mxu0 0.0
    %1684 = vmatpush1.msra.mxu0 0.0
    %1685 = vmatprep.subr.mxu0 0.0
    %1686 = vmatpush1.msra.mxu0 0.0
    %1687 = vmatprep.subr.mxu0 0.0
    %1688 = vmatpush1.msra.mxu0 0.0
    %1689 = vmatprep.subr.mxu0 0.0
    %1690 = vmatpush1.msra.mxu0 0.0
    %1691 = vmatprep.subr.mxu0 0.0
    %1692 = vmatpush1.msra.mxu0 0.0
    %1693 = vmatprep.subr.mxu0 0.0
    %1694 = vmatpush1.msra.mxu0 0.0
    %1695 = vmatprep.subr.mxu0 0.0
    %1696 = vmatpush1.msra.mxu0 0.0
    %1697 = vmatprep.subr.mxu0 0.0
    %1698 = vmatpush1.msra.mxu0 0.0
    %1699 = vmatprep.subr.mxu0 0.0
    %1700 = vmatpush1.msra.mxu0 0.0
    %1701 = vmatprep.subr.mxu0 0.0
    %1702 = vmatpush1.msra.mxu0 0.0
    %1703 = vmatprep.subr.mxu0 0.0
    %1704 = vmatpush1.msra.mxu0 0.0
    %1705 = vmatprep.subr.mxu0 0.0
    %1706 = vmatpush1.msra.mxu0 0.0
    %1707 = vmatprep.subr.mxu0 0.0
    %1708 = vmatpush1.msra.mxu0 0.0
    %1709 = vmatprep.subr.mxu0 0.0
    %1710 = vmatpush1.msra.mxu0 0.0
    %1711 = vmatprep.mubr.f32.mxu0 0.0
    %1712 = vmatmul.mubr.f32.gmra.mrb[0].mxu0 %v1645
    %v1713 = vpop.f32.mrb[0].mxu0
    %v1714 = vadd.f32 0.0, %v1713
    %v1715 = vpop.f32.mrb[0].mxu0
    %1716 = vdwg.mxu0
    %1719 = vrot.lane.b32.xlu0 %v1638, 24
    %v1720 = vpop.permute.xlu0 %1719
    %1721 = vrot.lane.b32.xlu0 %v1714, 24
    %v1722 = vpop.permute.xlu0 %1721
    %vm1725 = vcmask 261312
    %1726 = vst.msk [vmem:[#allocation2] sm:$0xff] %vm1725, %v1720
    %1727 = vst.msk [vmem:[#allocation2 + $0x8] sm:$0xff] %vm1725, %v1722
    %v1728 = vld [vmem:[#allocation2] sm:$0xff]
    %v1729 = vld [vmem:[#allocation2 + $0x8] sm:$0xff]
    %v1730 = vld [vmem:[#allocation14] sm:$0xff]
    %v1731 = vld [vmem:[#allocation14 + $0x8] sm:$0xff]
    %v1732 = vld [vmem:[#allocation14 + $0x10] sm:$0xff]
    %v1733 = vld [vmem:[#allocation14 + $0x18] sm:$0xff]
    %vm1734 = vcmask 261120
    %v1736 = vsel %vm1734, %v1728, 0
    %v1739 = vsel %vm1734, %v1729, 0
    %1741 = vmatprep.subr.mxu0 0.0
    %1742 = vmatpush1.msra.mxu0 %v1730
    %1743 = vmatprep.subr.mxu0 0.0
    %1744 = vmatpush1.msra.mxu0 %v1731
    %1745 = vmatprep.subr.mxu0 0.0
    %1746 = vmatpush1.msra.mxu0 %v1732
    %1747 = vmatprep.subr.mxu0 0.0
    %1748 = vmatpush1.msra.mxu0 %v1733
    %1749 = vmatprep.subr.mxu0 0.0
    %1750 = vmatpush1.msra.mxu0 0.0
    %1751 = vmatprep.subr.mxu0 0.0
    %1752 = vmatpush1.msra.mxu0 0.0
    %1753 = vmatprep.subr.mxu0 0.0
    %1754 = vmatpush1.msra.mxu0 0.0
    %1755 = vmatprep.subr.mxu0 0.0
    %1756 = vmatpush1.msra.mxu0 0.0
    %1757 = vmatprep.subr.mxu0 0.0
    %1758 = vmatpush1.msra.mxu0 0.0
    %1759 = vmatprep.subr.mxu0 0.0
    %1760 = vmatpush1.msra.mxu0 0.0
    %1761 = vmatprep.subr.mxu0 0.0
    %1762 = vmatpush1.msra.mxu0 0.0
    %1763 = vmatprep.subr.mxu0 0.0
    %1764 = vmatpush1.msra.mxu0 0.0
    %1765 = vmatprep.subr.mxu0 0.0
    %1766 = vmatpush1.msra.mxu0 0.0
    %1767 = vmatprep.subr.mxu0 0.0
    %1768 = vmatpush1.msra.mxu0 0.0
    %1769 = vmatprep.subr.mxu0 0.0
    %1770 = vmatpush1.msra.mxu0 0.0
    %1771 = vmatprep.subr.mxu0 0.0
    %1772 = vmatpush1.msra.mxu0 0.0
    %1773 = vmatprep.subr.mxu0 0.0
    %1774 = vmatpush1.msra.mxu0 0.0
    %1775 = vmatprep.subr.mxu0 0.0
    %1776 = vmatpush1.msra.mxu0 0.0
    %1777 = vmatprep.subr.mxu0 0.0
    %1778 = vmatpush1.msra.mxu0 0.0
    %1779 = vmatprep.subr.mxu0 0.0
    %1780 = vmatpush1.msra.mxu0 0.0
    %1781 = vmatprep.subr.mxu0 0.0
    %1782 = vmatpush1.msra.mxu0 0.0
    %1783 = vmatprep.subr.mxu0 0.0
    %1784 = vmatpush1.msra.mxu0 0.0
    %1785 = vmatprep.subr.mxu0 0.0
    %1786 = vmatpush1.msra.mxu0 0.0
    %1787 = vmatprep.subr.mxu0 0.0
    %1788 = vmatpush1.msra.mxu0 0.0
    %1789 = vmatprep.subr.mxu0 0.0
    %1790 = vmatpush1.msra.mxu0 0.0
    %1791 = vmatprep.subr.mxu0 0.0
    %1792 = vmatpush1.msra.mxu0 0.0
    %1793 = vmatprep.subr.mxu0 0.0
    %1794 = vmatpush1.msra.mxu0 0.0
    %1795 = vmatprep.subr.mxu0 0.0
    %1796 = vmatpush1.msra.mxu0 0.0
    %1797 = vmatprep.subr.mxu0 0.0
    %1798 = vmatpush1.msra.mxu0 0.0
    %1799 = vmatprep.subr.mxu0 0.0
    %1800 = vmatpush1.msra.mxu0 0.0
    %1801 = vmatprep.subr.mxu0 0.0
    %1802 = vmatpush1.msra.mxu0 0.0
    %1803 = vmatprep.subr.mxu0 0.0
    %1804 = vmatpush1.msra.mxu0 0.0
    %1805 = vmatprep.mubr.f32.mxu0 0.0
    %1806 = vmatmul.mubr.f32.gmra.mrb[0].mxu0 %v1736
    %v1807 = vpop.f32.mrb[0].mxu0
    %v1808 = vadd.f32 0.0, %v1807
    %v1809 = vpop.f32.mrb[0].mxu0
    %1810 = vmatprep.mubr.f32.mxu0 0.0
    %1811 = vmatmul.mubr.f32.gmra.mrb[0].mxu0 %v1739
    %v1812 = vpop.f32.mrb[0].mxu0
    %v1813 = vadd.f32 0.0, %v1812
    %v1814 = vpop.f32.mrb[0].mxu0
    %1815 = vdwg.mxu0
    %1816 = vst.msk [vmem:[#allocation15] sm:$0xff] %vm1734, %v1808
    %1817 = vst.msk [vmem:[#allocation15 + $0x8] sm:$0xff] %vm1734, %v1813
    // Predicated region
    $region58: #{tpu_custom_call.1} parent=1 // pred_check
      _
    $region59: #{tpu_custom_call.1} parent=1 // pred_check_branch
      %1819 = sbr.rel (0) target = $region61
    $region60: #{tpu_custom_call.1} parent=1 // pred_region
      %s1821 = ssub.s32 256, 256
      %1822 = vsyncadd [#allocation5], %s1821
      %s1823 = sshll.u32 [#allocation15], 4
      %s1824 = int_to_ptr.vmem [resolvable:$true] %s1823
      %1829 = dma.vmem_to_hbm [thread:$0]  %s1824, 256, %s7, [#allocation5], 128, 128, 8
    $region61: #{tpu_custom_call.1} parent=1 // pred_fallthru
      _
    // Predicated region
    $region62: #{tpu_custom_call.1} parent=1 // pred_check
      _
    $region63: #{tpu_custom_call.1} parent=1 // pred_check_branch
      %1831 = sbr.rel (0) target = $region65
    $region64: #{tpu_custom_call.1} parent=1 // pred_region
      %1832 = dma.done [#allocation5], 256
    $region65: #{tpu_custom_call.1} parent=1 // pred_fallthru
      _
    %1833 = vsyncpa [#allocation4], 1
    %1834 = vsyncpa [#allocation7], 1
    %1835 = vsyncpa [#allocation10], 1
    %1836 = vsyncpa [#allocation13], 1
    %1837 = vsyncpa [#allocation5], 1

// kernel: tpu_custom_call.1
$region0: #{tpu_custom_call.1}
  #allocation0 [shape = 'u32[]', space=smem, size = 0x4, offset = 0x4, fixed_abs, tag = 'smem constant byte address 0x4 - core index']
  #allocation1 [shape = 'u32[144,128]{1,0:T(1,128)}', space=vmem, size = 0x12000, scoped, tag = 'internal scratch']
  #allocation2 [shape = 'f32[16,32]{1,0:T(8,128)}', space=vmem, size = 0x2000, scoped, tag = 'scratch operand']
  %s0 = inlined_call_operand.hbm [shape: f32[2,8,16], index: 0, kind: input, shape index: {}]
  %s1 = inlined_call_operand.hbm [shape: f32[2,8,16], index: 1, kind: input, shape index: {}]
  %s2 = inlined_call_operand.hbm [shape: f32[2,8,24], index: 2, kind: input, shape index: {}]
  %s3 = inlined_call_operand.hbm [shape: f32[16,32], index: 3, kind: input, shape index: {}]
  %s4 = inlined_call_operand.hbm [shape: f32[16,32], index: 4, kind: input, shape index: {}]
  %s5 = inlined_call_operand.hbm [shape: f32[24,32], index: 5, kind: input, shape index: {}]
  %s6 = inlined_call_operand.hbm [shape: f32[32,32], index: 6, kind: input, shape index: {}]
  %s7 = inlined_call_operand.hbm [shape: f32[2,8,32], index: 7, kind: output, shape index: {}]
  %s8 = sld [smem:[#allocation0]]
  $region66: #{tpu_custom_call.1} parent=0
    _
  %s10 = ssub.s32 1, %s8
  %s11 = scalar_select 0, %s10, %s8
  $region1: #{tpu_custom_call.1} parent=0
    #allocation3 [shape = 'u8[8192]{0}', space=vmem, size = 0x2000, scoped, tag = 'input window, operand 0, single buffered']
    #allocation4 [shape = 's32[1]{0}', space=sflag, size = 0x4, scoped, tag = 'scoped memory for tpu_custom_call.1']
    #allocation5 [shape = 's32[1]{0}', space=sflag, size = 0x4, scoped, tag = 'scoped memory for tpu_custom_call.1']
    #allocation6 [shape = 'u8[8192]{0}', space=vmem, size = 0x2000, scoped, tag = 'input window, operand 1, single buffered']
    #allocation7 [shape = 's32[1]{0}', space=sflag, size = 0x4, scoped, tag = 'scoped memory for tpu_custom_call.1']
    #allocation8 [shape = 'u8[8192]{0}', space=vmem, size = 0x2000, scoped, tag = 'input window, operand 2, single buffered']
    #allocation9 [shape = 'u8[8192]{0}', space=vmem, size = 0x2000, scoped, tag = 'input window, operand 3, single buffered']
    #allocation10 [shape = 's32[1]{0}', space=sflag, size = 0x4, scoped, tag = 'scoped memory for tpu_custom_call.1']
    #allocation11 [shape = 'u8[8192]{0}', space=vmem, size = 0x2000, scoped, tag = 'input window, operand 4, single buffered']
    #allocation12 [shape = 'u8[12288]{0}', space=vmem, size = 0x3000, scoped, tag = 'input window, operand 5, single buffered']
    #allocation13 [shape = 's32[1]{0}', space=sflag, size = 0x4, scoped, tag = 'scoped memory for tpu_custom_call.1']
    #allocation14 [shape = 'u8[16384]{0}', space=vmem, size = 0x4000, scoped, tag = 'input window, operand 6, single buffered']
    #allocation15 [shape = 'u8[8192]{0}', space=vmem, size = 0x2000, scoped, tag = 'output window, operand 0, single buffered']
    %12 = vsyncpa [#allocation4], 0
    %13 = vsyncpa [#allocation7], 0
    %14 = vsyncpa [#allocation10], 0
    %15 = vsyncpa [#allocation13], 0
    %16 = vsyncpa [#allocation5], 0
    // Predicated region
    $region2: #{tpu_custom_call.1} parent=1 // pred_check
      _
    $region3: #{tpu_custom_call.1} parent=1 // pred_check_branch
      %18 = sbr.rel (0) target = $region5
    $region4: #{tpu_custom_call.1} parent=1 // pred_region
      %s20 = ssub.s32 256, 256
      %21 = vsyncadd [#allocation4], %s20
      %s22 = sshll.u32 [#allocation3], 4
      %s23 = int_to_ptr.vmem [resolvable:$true] %s22
      %28 = dma.hbm_to_vmem [thread:$0]  %s0, 256, %s23, [#allocation4], 128, 128, 8
    $region5: #{tpu_custom_call.1} parent=1 // pred_fallthru
      _
    // Predicated region
    $region6: #{tpu_custom_call.1} parent=1 // pred_check
      _
    $region7: #{tpu_custom_call.1} parent=1 // pred_check_branch
      %30 = sbr.rel (0) target = $region9
    $region8: #{tpu_custom_call.1} parent=1 // pred_region
      %s32 = ssub.s32 256, 256
      %33 = vsyncadd [#allocation7], %s32
      %s34 = sshll.u32 [#allocation6], 4
      %s35 = int_to_ptr.vmem [resolvable:$true] %s34
      %40 = dma.hbm_to_vmem [thread:$0]  %s1, 256, %s35, [#allocation7], 128, 128, 8
    $region9: #{tpu_custom_call.1} parent=1 // pred_fallthru
      _
    // Predicated region
    $region10: #{tpu_custom_call.1} parent=1 // pred_check
      _
    $region11: #{tpu_custom_call.1} parent=1 // pred_check_branch
      %42 = sbr.rel (0) target = $region13
    $region12: #{tpu_custom_call.1} parent=1 // pred_region
      %s44 = ssub.s32 256, 256
      %45 = vsyncadd [#allocation7], %s44
      %s46 = sshll.u32 [#allocation8], 4
      %s47 = int_to_ptr.vmem [resolvable:$true] %s46
      %52 = dma.hbm_to_vmem [thread:$0]  %s2, 256, %s47, [#allocation7], 128, 128, 8
    $region13: #{tpu_custom_call.1} parent=1 // pred_fallthru
      _
    // Predicated region
    $region14: #{tpu_custom_call.1} parent=1 // pred_check
      _
    $region15: #{tpu_custom_call.1} parent=1 // pred_check_branch
      %54 = sbr.rel (0) target = $region17
    $region16: #{tpu_custom_call.1} parent=1 // pred_region
      %s56 = ssub.s32 256, 256
      %57 = vsyncadd [#allocation10], %s56
      %s58 = sshll.u32 [#allocation9], 4
      %s59 = int_to_ptr.vmem [resolvable:$true] %s58
      %64 = dma.hbm_to_vmem [thread:$0]  %s3, 256, %s59, [#allocation10], 128, 128, 8
    $region17: #{tpu_custom_call.1} parent=1 // pred_fallthru
      _
    // Predicated region
    $region18: #{tpu_custom_call.1} parent=1 // pred_check
      _
    $region19: #{tpu_custom_call.1} parent=1 // pred_check_branch
      %66 = sbr.rel (0) target = $region21
    $region20: #{tpu_custom_call.1} parent=1 // pred_region
      %s68 = ssub.s32 256, 256
      %69 = vsyncadd [#allocation10], %s68
      %s70 = sshll.u32 [#allocation11], 4
      %s71 = int_to_ptr.vmem [resolvable:$true] %s70
      %76 = dma.hbm_to_vmem [thread:$0]  %s4, 256, %s71, [#allocation10], 128, 128, 8
    $region21: #{tpu_custom_call.1} parent=1 // pred_fallthru
      _
    // Predicated region
    $region22: #{tpu_custom_call.1} parent=1 // pred_check
      _
    $region23: #{tpu_custom_call.1} parent=1 // pred_check_branch
      %78 = sbr.rel (0) target = $region25
    $region24: #{tpu_custom_call.1} parent=1 // pred_region
      %s80 = ssub.s32 384, 384
      %81 = vsyncadd [#allocation13], %s80
      %s82 = sshll.u32 [#allocation12], 4
      %s83 = int_to_ptr.vmem [resolvable:$true] %s82
      %88 = dma.hbm_to_vmem [thread:$0]  %s5, 384, %s83, [#allocation13], 128, 128, 8
    $region25: #{tpu_custom_call.1} parent=1 // pred_fallthru
      _
    // Predicated region
    $region26: #{tpu_custom_call.1} parent=1 // pred_check
      _
    $region27: #{tpu_custom_call.1} parent=1 // pred_check_branch
      %90 = sbr.rel (0) target = $region29
    $region28: #{tpu_custom_call.1} parent=1 // pred_region
      %s92 = ssub.s32 512, 512
      %93 = vsyncadd [#allocation13], %s92
      %s94 = sshll.u32 [#allocation14], 4
      %s95 = int_to_ptr.vmem [resolvable:$true] %s94
      %100 = dma.hbm_to_vmem [thread:$0]  %s6, 512, %s95, [#allocation13], 128, 128, 8
    $region29: #{tpu_custom_call.1} parent=1 // pred_fallthru
      _
    // Predicated region
    $region30: #{tpu_custom_call.1} parent=1 // pred_check
      _
    $region31: #{tpu_custom_call.1} parent=1 // pred_check_branch
      %102 = sbr.rel (0) target = $region33
    $region32: #{tpu_custom_call.1} parent=1 // pred_region
      %103 = dma.done [#allocation4], 256
    $region33: #{tpu_custom_call.1} parent=1 // pred_fallthru
      _
    // Predicated region
    $region34: #{tpu_custom_call.1} parent=1 // pred_check
      _
    $region35: #{tpu_custom_call.1} parent=1 // pred_check_branch
      %105 = sbr.rel (0) target = $region37
    $region36: #{tpu_custom_call.1} parent=1 // pred_region
      %106 = dma.done [#allocation7], 256
    $region37: #{tpu_custom_call.1} parent=1 // pred_fallthru
      _
    // Predicated region
    $region38: #{tpu_custom_call.1} parent=1 // pred_check
      _
    $region39: #{tpu_custom_call.1} parent=1 // pred_check_branch
      %108 = sbr.rel (0) target = $region41
    $region40: #{tpu_custom_call.1} parent=1 // pred_region
      %109 = dma.done [#allocation7], 256
    $region41: #{tpu_custom_call.1} parent=1 // pred_fallthru
      _
    // Predicated region
    $region42: #{tpu_custom_call.1} parent=1 // pred_check
      _
    $region43: #{tpu_custom_call.1} parent=1 // pred_check_branch
      %111 = sbr.rel (0) target = $region45
    $region44: #{tpu_custom_call.1} parent=1 // pred_region
      %112 = dma.done [#allocation10], 256
    $region45: #{tpu_custom_call.1} parent=1 // pred_fallthru
      _
    // Predicated region
    $region46: #{tpu_custom_call.1} parent=1 // pred_check
      _
    $region47: #{tpu_custom_call.1} parent=1 // pred_check_branch
      %114 = sbr.rel (0) target = $region49
    $region48: #{tpu_custom_call.1} parent=1 // pred_region
      %115 = dma.done [#allocation10], 256
    $region49: #{tpu_custom_call.1} parent=1 // pred_fallthru
      _
    // Predicated region
    $region50: #{tpu_custom_call.1} parent=1 // pred_check
      _
    $region51: #{tpu_custom_call.1} parent=1 // pred_check_branch
      %117 = sbr.rel (0) target = $region53
    $region52: #{tpu_custom_call.1} parent=1 // pred_region
      %118 = dma.done [#allocation13], 384
    $region53: #{tpu_custom_call.1} parent=1 // pred_fallthru
      _
    // Predicated region
    $region54: #{tpu_custom_call.1} parent=1 // pred_check
      _
    $region55: #{tpu_custom_call.1} parent=1 // pred_check_branch
      %120 = sbr.rel (0) target = $region57
    $region56: #{tpu_custom_call.1} parent=1 // pred_region
      %121 = dma.done [#allocation13], 512
    $region57: #{tpu_custom_call.1} parent=1 // pred_fallthru
      _
    %v122 = vld [vmem:[#allocation3] sm:$0xff]
    %v123 = vld [vmem:[#allocation3 + $0x8] sm:$0xff]
    %v124 = vld [vmem:[#allocation6] sm:$0xff]
    %v125 = vld [vmem:[#allocation6 + $0x8] sm:$0xff]
    %v126 = vld [vmem:[#allocation8] sm:$0xff]
    %v127 = vld [vmem:[#allocation8 + $0x8] sm:$0xff]
    %v128 = vld [vmem:[#allocation9] sm:$0xff]
    %v129 = vld [vmem:[#allocation9 + $0x8] sm:$0xff]
    %vm130 = vcmask 130048
    %v132 = vsel %vm130, %v122, 0
    %v135 = vsel %vm130, %v123, 0
    %137 = vmatprep.subr.mxu0 0.0
    %138 = vmatpush1.msra.mxu0 %v128
    %139 = vmatprep.subr.mxu0 0.0
    %140 = vmatpush1.msra.mxu0 %v129
    %141 = vmatprep.subr.mxu0 0.0
    %142 = vmatpush1.msra.mxu0 0.0
    %143 = vmatprep.subr.mxu0 0.0
    %144 = vmatpush1.msra.mxu0 0.0
    %145 = vmatprep.subr.mxu0 0.0
    %146 = vmatpush1.msra.mxu0 0.0
    %147 = vmatprep.subr.mxu0 0.0
    %148 = vmatpush1.msra.mxu0 0.0
    %149 = vmatprep.subr.mxu0 0.0
    %150 = vmatpush1.msra.mxu0 0.0
    %151 = vmatprep.subr.mxu0 0.0
    %152 = vmatpush1.msra.mxu0 0.0
    %153 = vmatprep.subr.mxu0 0.0
    %154 = vmatpush1.msra.mxu0 0.0
    %155 = vmatprep.subr.mxu0 0.0
    %156 = vmatpush1.msra.mxu0 0.0
    %157 = vmatprep.subr.mxu0 0.0
    %158 = vmatpush1.msra.mxu0 0.0
    %159 = vmatprep.subr.mxu0 0.0
    %160 = vmatpush1.msra.mxu0 0.0
    %161 = vmatprep.subr.mxu0 0.0
    %162 = vmatpush1.msra.mxu0 0.0
    %163 = vmatprep.subr.mxu0 0.0
    %164 = vmatpush1.msra.mxu0 0.0
    %165 = vmatprep.subr.mxu0 0.0
    %166 = vmatpush1.msra.mxu0 0.0
    %167 = vmatprep.subr.mxu0 0.0
    %168 = vmatpush1.msra.mxu0 0.0
    %169 = vmatprep.subr.mxu0 0.0
    %170 = vmatpush1.msra.mxu0 0.0
    %171 = vmatprep.subr.mxu0 0.0
    %172 = vmatpush1.msra.mxu0 0.0
    %173 = vmatprep.subr.mxu0 0.0
    %174 = vmatpush1.msra.mxu0 0.0
    %175 = vmatprep.subr.mxu0 0.0
    %176 = vmatpush1.msra.mxu0 0.0
    %177 = vmatprep.subr.mxu0 0.0
    %178 = vmatpush1.msra.mxu0 0.0
    %179 = vmatprep.subr.mxu0 0.0
    %180 = vmatpush1.msra.mxu0 0.0
    %181 = vmatprep.subr.mxu0 0.0
    %182 = vmatpush1.msra.mxu0 0.0
    %183 = vmatprep.subr.mxu0 0.0
    %184 = vmatpush1.msra.mxu0 0.0
    %185 = vmatprep.subr.mxu0 0.0
    %186 = vmatpush1.msra.mxu0 0.0
    %187 = vmatprep.subr.mxu0 0.0
    %188 = vmatpush1.msra.mxu0 0.0
    %189 = vmatprep.subr.mxu0 0.0
    %190 = vmatpush1.msra.mxu0 0.0
    %191 = vmatprep.subr.mxu0 0.0
    %192 = vmatpush1.msra.mxu0 0.0
    %193 = vmatprep.subr.mxu0 0.0
    %194 = vmatpush1.msra.mxu0 0.0
    %195 = vmatprep.subr.mxu0 0.0
    %196 = vmatpush1.msra.mxu0 0.0
    %197 = vmatprep.subr.mxu0 0.0
    %198 = vmatpush1.msra.mxu0 0.0
    %199 = vmatprep.subr.mxu0 0.0
    %200 = vmatpush1.msra.mxu0 0.0
    %201 = vmatprep.mubr.f32.mxu0 0.0
    %202 = vmatmul.mubr.f32.gmra.mrb[0].mxu0 %v132
    %v203 = vpop.f32.mrb[0].mxu0
    %v204 = vadd.f32 0.0, %v203
    %v205 = vpop.f32.mrb[0].mxu0
    %206 = vmatprep.mubr.f32.mxu0 0.0
    %207 = vmatmul.mubr.f32.gmra.mrb[0].mxu0 %v135
    %v208 = vpop.f32.mrb[0].mxu0
    %v209 = vadd.f32 0.0, %v208
    %v210 = vpop.f32.mrb[0].mxu0
    %211 = vdwg.mxu0
    %v212 = vld [vmem:[#allocation11] sm:$0xff]
    %v213 = vld [vmem:[#allocation11 + $0x8] sm:$0xff]
    %v215 = vsel %vm130, %v124, 0
    %v218 = vsel %vm130, %v125, 0
    %220 = vmatprep.subr.mxu0 0.0
    %221 = vmatpush1.msra.mxu0 %v212
    %222 = vmatprep.subr.mxu0 0.0
    %223 = vmatpush1.msra.mxu0 %v213
    %224 = vmatprep.subr.mxu0 0.0
    %225 = vmatpush1.msra.mxu0 0.0
    %226 = vmatprep.subr.mxu0 0.0
    %227 = vmatpush1.msra.mxu0 0.0
    %228 = vmatprep.subr.mxu0 0.0
    %229 = vmatpush1.msra.mxu0 0.0
    %230 = vmatprep.subr.mxu0 0.0
    %231 = vmatpush1.msra.mxu0 0.0
    %232 = vmatprep.subr.mxu0 0.0
    %233 = vmatpush1.msra.mxu0 0.0
    %234 = vmatprep.subr.mxu0 0.0
    %235 = vmatpush1.msra.mxu0 0.0
    %236 = vmatprep.subr.mxu0 0.0
    %237 = vmatpush1.msra.mxu0 0.0
    %238 = vmatprep.subr.mxu0 0.0
    %239 = vmatpush1.msra.mxu0 0.0
    %240 = vmatprep.subr.mxu0 0.0
    %241 = vmatpush1.msra.mxu0 0.0
    %242 = vmatprep.subr.mxu0 0.0
    %243 = vmatpush1.msra.mxu0 0.0
    %244 = vmatprep.subr.mxu0 0.0
    %245 = vmatpush1.msra.mxu0 0.0
    %246 = vmatprep.subr.mxu0 0.0
    %247 = vmatpush1.msra.mxu0 0.0
    %248 = vmatprep.subr.mxu0 0.0
    %249 = vmatpush1.msra.mxu0 0.0
    %250 = vmatprep.subr.mxu0 0.0
    %251 = vmatpush1.msra.mxu0 0.0
    %252 = vmatprep.subr.mxu0 0.0
    %253 = vmatpush1.msra.mxu0 0.0
    %254 = vmatprep.subr.mxu0 0.0
    %255 = vmatpush1.msra.mxu0 0.0
    %256 = vmatprep.subr.mxu0 0.0
    %257 = vmatpush1.msra.mxu0 0.0
    %258 = vmatprep.subr.mxu0 0.0
    %259 = vmatpush1.msra.mxu0 0.0
    %260 = vmatprep.subr.mxu0 0.0
    %261 = vmatpush1.msra.mxu0 0.0
    %262 = vmatprep.subr.mxu0 0.0
    %263 = vmatpush1.msra.mxu0 0.0
    %264 = vmatprep.subr.mxu0 0.0
    %265 = vmatpush1.msra.mxu0 0.0
    %266 = vmatprep.subr.mxu0 0.0
    %267 = vmatpush1.msra.mxu0 0.0
    %268 = vmatprep.subr.mxu0 0.0
    %269 = vmatpush1.msra.mxu0 0.0
    %270 = vmatprep.subr.mxu0 0.0
    %271 = vmatpush1.msra.mxu0 0.0
    %272 = vmatprep.subr.mxu0 0.0
    %273 = vmatpush1.msra.mxu0 0.0
    %274 = vmatprep.subr.mxu0 0.0
    %275 = vmatpush1.msra.mxu0 0.0
    %276 = vmatprep.subr.mxu0 0.0
    %277 = vmatpush1.msra.mxu0 0.0
    %278 = vmatprep.subr.mxu0 0.0
    %279 = vmatpush1.msra.mxu0 0.0
    %280 = vmatprep.subr.mxu0 0.0
    %281 = vmatpush1.msra.mxu0 0.0
    %282 = vmatprep.subr.mxu0 0.0
    %283 = vmatpush1.msra.mxu0 0.0
    %284 = vmatprep.mubr.f32.mxu0 0.0
    %285 = vmatmul.mubr.f32.gmra.mrb[0].mxu0 %v215
    %v286 = vpop.f32.mrb[0].mxu0
    %v287 = vadd.f32 0.0, %v286
    %v288 = vpop.f32.mrb[0].mxu0
    %289 = vmatprep.mubr.f32.mxu0 0.0
    %290 = vmatmul.mubr.f32.gmra.mrb[0].mxu0 %v218
    %v291 = vpop.f32.mrb[0].mxu0
    %v292 = vadd.f32 0.0, %v291
    %v293 = vpop.f32.mrb[0].mxu0
    %294 = vdwg.mxu0
    %v295 = vld [vmem:[#allocation12] sm:$0xff]
    %v296 = vld [vmem:[#allocation12 + $0x8] sm:$0xff]
    %v297 = vld [vmem:[#allocation12 + $0x10] sm:$0xff]
    %vm298 = vcmask 195584
    %v300 = vsel %vm298, %v126, 0
    %v303 = vsel %vm298, %v127, 0
    %305 = vmatprep.subr.mxu0 0.0
    %306 = vmatpush1.msra.mxu0 %v295
    %307 = vmatprep.subr.mxu0 0.0
    %308 = vmatpush1.msra.mxu0 %v296
    %309 = vmatprep.subr.mxu0 0.0
    %310 = vmatpush1.msra.mxu0 %v297
    %311 = vmatprep.subr.mxu0 0.0
    %312 = vmatpush1.msra.mxu0 0.0
    %313 = vmatprep.subr.mxu0 0.0
    %314 = vmatpush1.msra.mxu0 0.0
    %315 = vmatprep.subr.mxu0 0.0
    %316 = vmatpush1.msra.mxu0 0.0
    %317 = vmatprep.subr.mxu0 0.0
    %318 = vmatpush1.msra.mxu0 0.0
    %319 = vmatprep.subr.mxu0 0.0
    %320 = vmatpush1.msra.mxu0 0.0
    %321 = vmatprep.subr.mxu0 0.0
    %322 = vmatpush1.msra.mxu0 0.0
    %323 = vmatprep.subr.mxu0 0.0
    %324 = vmatpush1.msra.mxu0 0.0
    %325 = vmatprep.subr.mxu0 0.0
    %326 = vmatpush1.msra.mxu0 0.0
    %327 = vmatprep.subr.mxu0 0.0
    %328 = vmatpush1.msra.mxu0 0.0
    %329 = vmatprep.subr.mxu0 0.0
    %330 = vmatpush1.msra.mxu0 0.0
    %331 = vmatprep.subr.mxu0 0.0
    %332 = vmatpush1.msra.mxu0 0.0
    %333 = vmatprep.subr.mxu0 0.0
    %334 = vmatpush1.msra.mxu0 0.0
    %335 = vmatprep.subr.mxu0 0.0
    %336 = vmatpush1.msra.mxu0 0.0
    %337 = vmatprep.subr.mxu0 0.0
    %338 = vmatpush1.msra.mxu0 0.0
    %339 = vmatprep.subr.mxu0 0.0
    %340 = vmatpush1.msra.mxu0 0.0
    %341 = vmatprep.subr.mxu0 0.0
    %342 = vmatpush1.msra.mxu0 0.0
    %343 = vmatprep.subr.mxu0 0.0
    %344 = vmatpush1.msra.mxu0 0.0
    %345 = vmatprep.subr.mxu0 0.0
    %346 = vmatpush1.msra.mxu0 0.0
    %347 = vmatprep.subr.mxu0 0.0
    %348 = vmatpush1.msra.mxu0 0.0
    %349 = vmatprep.subr.mxu0 0.0
    %350 = vmatpush1.msra.mxu0 0.0
    %351 = vmatprep.subr.mxu0 0.0
    %352 = vmatpush1.msra.mxu0 0.0
    %353 = vmatprep.subr.mxu0 0.0
    %354 = vmatpush1.msra.mxu0 0.0
    %355 = vmatprep.subr.mxu0 0.0
    %356 = vmatpush1.msra.mxu0 0.0
    %357 = vmatprep.subr.mxu0 0.0
    %358 = vmatpush1.msra.mxu0 0.0
    %359 = vmatprep.subr.mxu0 0.0
    %360 = vmatpush1.msra.mxu0 0.0
    %361 = vmatprep.subr.mxu0 0.0
    %362 = vmatpush1.msra.mxu0 0.0
    %363 = vmatprep.subr.mxu0 0.0
    %364 = vmatpush1.msra.mxu0 0.0
    %365 = vmatprep.subr.mxu0 0.0
    %366 = vmatpush1.msra.mxu0 0.0
    %367 = vmatprep.subr.mxu0 0.0
    %368 = vmatpush1.msra.mxu0 0.0
    %369 = vmatprep.mubr.f32.mxu0 0.0
    %370 = vmatmul.mubr.f32.gmra.mrb[0].mxu0 %v300
    %v371 = vpop.f32.mrb[0].mxu0
    %v372 = vadd.f32 0.0, %v371
    %v373 = vpop.f32.mrb[0].mxu0
    %374 = vmatprep.mubr.f32.mxu0 0.0
    %375 = vmatmul.mubr.f32.gmra.mrb[0].mxu0 %v303
    %v376 = vpop.f32.mrb[0].mxu0
    %v377 = vadd.f32 0.0, %v376
    %v378 = vpop.f32.mrb[0].mxu0
    %379 = vdwg.mxu0
    %vm380 = vcmask 64512
    %v382 = vsel %vm380, %v204, 0
    %v385 = vsel %vm380, %v287, 0
    %387 = vmatprep.subr.mxu0 0.0
    %388 = vmatpush1.xpose.msra.mxu0 %v385
    %389 = vmatprep.subr.mxu0 0.0
    %390 = vmatpush1.xpose.msra.mxu0 0.0
    %391 = vmatprep.subr.mxu0 0.0
    %392 = vmatpush1.xpose.msra.mxu0 0.0
    %393 = vmatprep.subr.mxu0 0.0
    %394 = vmatpush1.xpose.msra.mxu0 0.0
    %395 = vmatprep.subr.mxu0 0.0
    %396 = vmatpush1.xpose.msra.mxu0 0.0
    %397 = vmatprep.subr.mxu0 0.0
    %398 = vmatpush1.xpose.msra.mxu0 0.0
    %399 = vmatprep.subr.mxu0 0.0
    %400 = vmatpush1.xpose.msra.mxu0 0.0
    %401 = vmatprep.subr.mxu0 0.0
    %402 = vmatpush1.xpose.msra.mxu0 0.0
    %403 = vmatprep.subr.mxu0 0.0
    %404 = vmatpush1.xpose.msra.mxu0 0.0
    %405 = vmatprep.subr.mxu0 0.0
    %406 = vmatpush1.xpose.msra.mxu0 0.0
    %407 = vmatprep.subr.mxu0 0.0
    %408 = vmatpush1.xpose.msra.mxu0 0.0
    %409 = vmatprep.subr.mxu0 0.0
    %410 = vmatpush1.xpose.msra.mxu0 0.0
    %411 = vmatprep.subr.mxu0 0.0
    %412 = vmatpush1.xpose.msra.mxu0 0.0
    %413 = vmatprep.subr.mxu0 0.0
    %414 = vmatpush1.xpose.msra.mxu0 0.0
    %415 = vmatprep.subr.mxu0 0.0
    %416 = vmatpush1.xpose.msra.mxu0 0.0
    %417 = vmatprep.subr.mxu0 0.0
    %418 = vmatpush1.xpose.msra.mxu0 0.0
    %419 = vmatprep.subr.mxu0 0.0
    %420 = vmatpush1.xpose.msra.mxu0 0.0
    %421 = vmatprep.subr.mxu0 0.0
    %422 = vmatpush1.xpose.msra.mxu0 0.0
    %423 = vmatprep.subr.mxu0 0.0
    %424 = vmatpush1.xpose.msra.mxu0 0.0
    %425 = vmatprep.subr.mxu0 0.0
    %426 = vmatpush1.xpose.msra.mxu0 0.0
    %427 = vmatprep.subr.mxu0 0.0
    %428 = vmatpush1.xpose.msra.mxu0 0.0
    %429 = vmatprep.subr.mxu0 0.0
    %430 = vmatpush1.xpose.msra.mxu0 0.0
    %431 = vmatprep.subr.mxu0 0.0
    %432 = vmatpush1.xpose.msra.mxu0 0.0
    %433 = vmatprep.subr.mxu0 0.0
    %434 = vmatpush1.xpose.msra.mxu0 0.0
    %435 = vmatprep.subr.mxu0 0.0
    %436 = vmatpush1.xpose.msra.mxu0 0.0
    %437 = vmatprep.subr.mxu0 0.0
    %438 = vmatpush1.xpose.msra.mxu0 0.0
    %439 = vmatprep.subr.mxu0 0.0
    %440 = vmatpush1.xpose.msra.mxu0 0.0
    %441 = vmatprep.subr.mxu0 0.0
    %442 = vmatpush1.xpose.msra.mxu0 0.0
    %443 = vmatprep.subr.mxu0 0.0
    %444 = vmatpush1.xpose.msra.mxu0 0.0
    %445 = vmatprep.subr.mxu0 0.0
    %446 = vmatpush1.xpose.msra.mxu0 0.0
    %447 = vmatprep.subr.mxu0 0.0
    %448 = vmatpush1.xpose.msra.mxu0 0.0
    %449 = vmatprep.subr.mxu0 0.0
    %450 = vmatpush1.xpose.msra.mxu0 0.0
    %451 = vmatprep.mubr.f32.mxu0 0.0
    %452 = vmatmul.mubr.f32.gmra.mrb[0].mxu0 %v382
    %v453 = vpop.f32.mrb[0].mxu0
    %v454 = vadd.f32 0.0, %v453
    %v455 = vpop.f32.mrb[0].mxu0
    %456 = vdwg.mxu0
    %v458 = vsel %vm380, %v209, 0
    %v461 = vsel %vm380, %v292, 0
    %463 = vmatprep.subr.mxu0 0.0
    %464 = vmatpush1.xpose.msra.mxu0 %v461
    %465 = vmatprep.subr.mxu0 0.0
    %466 = vmatpush1.xpose.msra.mxu0 0.0
    %467 = vmatprep.subr.mxu0 0.0
    %468 = vmatpush1.xpose.msra.mxu0 0.0
    %469 = vmatprep.subr.mxu0 0.0
    %470 = vmatpush1.xpose.msra.mxu0 0.0
    %471 = vmatprep.subr.mxu0 0.0
    %472 = vmatpush1.xpose.msra.mxu0 0.0
    %473 = vmatprep.subr.mxu0 0.0
    %474 = vmatpush1.xpose.msra.mxu0 0.0
    %475 = vmatprep.subr.mxu0 0.0
    %476 = vmatpush1.xpose.msra.mxu0 0.0
    %477 = vmatprep.subr.mxu0 0.0
    %478 = vmatpush1.xpose.msra.mxu0 0.0
    %479 = vmatprep.subr.mxu0 0.0
    %480 = vmatpush1.xpose.msra.mxu0 0.0
    %481 = vmatprep.subr.mxu0 0.0
    %482 = vmatpush1.xpose.msra.mxu0 0.0
    %483 = vmatprep.subr.mxu0 0.0
    %484 = vmatpush1.xpose.msra.mxu0 0.0
    %485 = vmatprep.subr.mxu0 0.0
    %486 = vmatpush1.xpose.msra.mxu0 0.0
    %487 = vmatprep.subr.mxu0 0.0
    %488 = vmatpush1.xpose.msra.mxu0 0.0
    %489 = vmatprep.subr.mxu0 0.0
    %490 = vmatpush1.xpose.msra.mxu0 0.0
    %491 = vmatprep.subr.mxu0 0.0
    %492 = vmatpush1.xpose.msra.mxu0 0.0
    %493 = vmatprep.subr.mxu0 0.0
    %494 = vmatpush1.xpose.msra.mxu0 0.0
    %495 = vmatprep.subr.mxu0 0.0
    %496 = vmatpush1.xpose.msra.mxu0 0.0
    %497 = vmatprep.subr.mxu0 0.0
    %498 = vmatpush1.xpose.msra.mxu0 0.0
    %499 = vmatprep.subr.mxu0 0.0
    %500 = vmatpush1.xpose.msra.mxu0 0.0
    %501 = vmatprep.subr.mxu0 0.0
    %502 = vmatpush1.xpose.msra.mxu0 0.0
    %503 = vmatprep.subr.mxu0 0.0
    %504 = vmatpush1.xpose.msra.mxu0 0.0
    %505 = vmatprep.subr.mxu0 0.0
    %506 = vmatpush1.xpose.msra.mxu0 0.0
    %507 = vmatprep.subr.mxu0 0.0
    %508 = vmatpush1.xpose.msra.mxu0 0.0
    %509 = vmatprep.subr.mxu0 0.0
    %510 = vmatpush1.xpose.msra.mxu0 0.0
    %511 = vmatprep.subr.mxu0 0.0
    %512 = vmatpush1.xpose.msra.mxu0 0.0
    %513 = vmatprep.subr.mxu0 0.0
    %514 = vmatpush1.xpose.msra.mxu0 0.0
    %515 = vmatprep.subr.mxu0 0.0
    %516 = vmatpush1.xpose.msra.mxu0 0.0
    %517 = vmatprep.subr.mxu0 0.0
    %518 = vmatpush1.xpose.msra.mxu0 0.0
    %519 = vmatprep.subr.mxu0 0.0
    %520 = vmatpush1.xpose.msra.mxu0 0.0
    %521 = vmatprep.subr.mxu0 0.0
    %522 = vmatpush1.xpose.msra.mxu0 0.0
    %523 = vmatprep.subr.mxu0 0.0
    %524 = vmatpush1.xpose.msra.mxu0 0.0
    %525 = vmatprep.subr.mxu0 0.0
    %526 = vmatpush1.xpose.msra.mxu0 0.0
    %527 = vmatprep.mubr.f32.mxu0 0.0
    %528 = vmatmul.mubr.f32.gmra.mrb[0].mxu0 %v458
    %v529 = vpop.f32.mrb[0].mxu0
    %v530 = vadd.f32 0.0, %v529
    %v531 = vpop.f32.mrb[0].mxu0
    %532 = vdwg.mxu0
    %v533 = vsel %vm380, %v454, -inf
    %534 = vmax.xlane.f32.xlu0 %v533
    %v535 = vpop.xlane.xlu0 %534
    %v536 = vsel %vm380, %v530, -inf
    %537 = vmax.xlane.f32.xlu0 %v536
    %v538 = vpop.xlane.xlu0 %537
    %v539 = vsub.f32 %v454, %v535
    %v540 = vsub.f32 %v530, %v538
    %v541 = vmul.f32 %v539, 1.442695
    %v542 = vpow.pop %v541
    %v543 = vmul.f32 %v540, 1.442695
    %v544 = vpow.pop %v543
    %v545 = vsel %vm380, %v542, 0.0
    %546 = vadd.xlane.f32.xlu0 %v545
    %v547 = vpop.xlane.xlu0 %546
    %v548 = vsel %vm380, %v544, 0.0
    %549 = vadd.xlane.f32.xlu0 %v548
    %v550 = vpop.xlane.xlu0 %549
    %v551 = vrcp.pop %v547
    %v552 = vrcp.pop %v550
    %v553 = vmul.f32 %v542, %v551
    %v554 = vmul.f32 %v544, %v552
    %v556 = vsel %vm380, %v553, 0
    %558 = vmatprep.subr.mxu0 0.0
    %559 = vmatpush1.msra.mxu0 %v372
    %560 = vmatprep.subr.mxu0 0.0
    %561 = vmatpush1.msra.mxu0 0.0
    %562 = vmatprep.subr.mxu0 0.0
    %563 = vmatpush1.msra.mxu0 0.0
    %564 = vmatprep.subr.mxu0 0.0
    %565 = vmatpush1.msra.mxu0 0.0
    %566 = vmatprep.subr.mxu0 0.0
    %567 = vmatpush1.msra.mxu0 0.0
    %568 = vmatprep.subr.mxu0 0.0
    %569 = vmatpush1.msra.mxu0 0.0
    %570 = vmatprep.subr.mxu0 0.0
    %571 = vmatpush1.msra.mxu0 0.0
    %572 = vmatprep.subr.mxu0 0.0
    %573 = vmatpush1.msra.mxu0 0.0
    %574 = vmatprep.subr.mxu0 0.0
    %575 = vmatpush1.msra.mxu0 0.0
    %576 = vmatprep.subr.mxu0 0.0
    %577 = vmatpush1.msra.mxu0 0.0
    %578 = vmatprep.subr.mxu0 0.0
    %579 = vmatpush1.msra.mxu0 0.0
    %580 = vmatprep.subr.mxu0 0.0
    %581 = vmatpush1.msra.mxu0 0.0
    %582 = vmatprep.subr.mxu0 0.0
    %583 = vmatpush1.msra.mxu0 0.0
    %584 = vmatprep.subr.mxu0 0.0
    %585 = vmatpush1.msra.mxu0 0.0
    %586 = vmatprep.subr.mxu0 0.0
    %587 = vmatpush1.msra.mxu0 0.0
    %588 = vmatprep.subr.mxu0 0.0
    %589 = vmatpush1.msra.mxu0 0.0
    %590 = vmatprep.subr.mxu0 0.0
    %591 = vmatpush1.msra.mxu0 0.0
    %592 = vmatprep.subr.mxu0 0.0
    %593 = vmatpush1.msra.mxu0 0.0
    %594 = vmatprep.subr.mxu0 0.0
    %595 = vmatpush1.msra.mxu0 0.0
    %596 = vmatprep.subr.mxu0 0.0
    %597 = vmatpush1.msra.mxu0 0.0
    %598 = vmatprep.subr.mxu0 0.0
    %599 = vmatpush1.msra.mxu0 0.0
    %600 = vmatprep.subr.mxu0 0.0
    %601 = vmatpush1.msra.mxu0 0.0
    %602 = vmatprep.subr.mxu0 0.0
    %603 = vmatpush1.msra.mxu0 0.0
    %604 = vmatprep.subr.mxu0 0.0
    %605 = vmatpush1.msra.mxu0 0.0
    %606 = vmatprep.subr.mxu0 0.0
    %607 = vmatpush1.msra.mxu0 0.0
    %608 = vmatprep.subr.mxu0 0.0
    %609 = vmatpush1.msra.mxu0 0.0
    %610 = vmatprep.subr.mxu0 0.0
    %611 = vmatpush1.msra.mxu0 0.0
    %612 = vmatprep.subr.mxu0 0.0
    %613 = vmatpush1.msra.mxu0 0.0
    %614 = vmatprep.subr.mxu0 0.0
    %615 = vmatpush1.msra.mxu0 0.0
    %616 = vmatprep.subr.mxu0 0.0
    %617 = vmatpush1.msra.mxu0 0.0
    %618 = vmatprep.subr.mxu0 0.0
    %619 = vmatpush1.msra.mxu0 0.0
    %620 = vmatprep.subr.mxu0 0.0
    %621 = vmatpush1.msra.mxu0 0.0
    %622 = vmatprep.mubr.f32.mxu0 0.0
    %623 = vmatmul.mubr.f32.gmra.mrb[0].mxu0 %v556
    %v624 = vpop.f32.mrb[0].mxu0
    %v625 = vadd.f32 0.0, %v624
    %v626 = vpop.f32.mrb[0].mxu0
    %627 = vdwg.mxu0
    %v629 = vsel %vm380, %v554, 0
    %631 = vmatprep.subr.mxu0 0.0
    %632 = vmatpush1.msra.mxu0 %v377
    %633 = vmatprep.subr.mxu0 0.0
    %634 = vmatpush1.msra.mxu0 0.0
    %635 = vmatprep.subr.mxu0 0.0
    %636 = vmatpush1.msra.mxu0 0.0
    %637 = vmatprep.subr.mxu0 0.0
    %638 = vmatpush1.msra.mxu0 0.0
    %639 = vmatprep.subr.mxu0 0.0
    %640 = vmatpush1.msra.mxu0 0.0
    %641 = vmatprep.subr.mxu0 0.0
    %642 = vmatpush1.msra.mxu0 0.0
    %643 = vmatprep.subr.mxu0 0.0
    %644 = vmatpush1.msra.mxu0 0.0
    %645 = vmatprep.subr.mxu0 0.0
    %646 = vmatpush1.msra.mxu0 0.0
    %647 = vmatprep.subr.mxu0 0.0
    %648 = vmatpush1.msra.mxu0 0.0
    %649 = vmatprep.subr.mxu0 0.0
    %650 = vmatpush1.msra.mxu0 0.0
    %651 = vmatprep.subr.mxu0 0.0
    %652 = vmatpush1.msra.mxu0 0.0
    %653 = vmatprep.subr.mxu0 0.0
    %654 = vmatpush1.msra.mxu0 0.0
    %655 = vmatprep.subr.mxu0 0.0
    %656 = vmatpush1.msra.mxu0 0.0
    %657 = vmatprep.subr.mxu0 0.0
    %658 = vmatpush1.msra.mxu0 0.0
    %659 = vmatprep.subr.mxu0 0.0
    %660 = vmatpush1.msra.mxu0 0.0
    %661 = vmatprep.subr.mxu0 0.0
    %662 = vmatpush1.msra.mxu0 0.0
    %663 = vmatprep.subr.mxu0 0.0
    %664 = vmatpush1.msra.mxu0 0.0
    %665 = vmatprep.subr.mxu0 0.0
    %666 = vmatpush1.msra.mxu0 0.0
    %667 = vmatprep.subr.mxu0 0.0
    %668 = vmatpush1.msra.mxu0 0.0
    %669 = vmatprep.subr.mxu0 0.0
    %670 = vmatpush1.msra.mxu0 0.0
    %671 = vmatprep.subr.mxu0 0.0
    %672 = vmatpush1.msra.mxu0 0.0
    %673 = vmatprep.subr.mxu0 0.0
    %674 = vmatpush1.msra.mxu0 0.0
    %675 = vmatprep.subr.mxu0 0.0
    %676 = vmatpush1.msra.mxu0 0.0
    %677 = vmatprep.subr.mxu0 0.0
    %678 = vmatpush1.msra.mxu0 0.0
    %679 = vmatprep.subr.mxu0 0.0
    %680 = vmatpush1.msra.mxu0 0.0
    %681 = vmatprep.subr.mxu0 0.0
    %682 = vmatpush1.msra.mxu0 0.0
    %683 = vmatprep.subr.mxu0 0.0
    %684 = vmatpush1.msra.mxu0 0.0
    %685 = vmatprep.subr.mxu0 0.0
    %686 = vmatpush1.msra.mxu0 0.0
    %687 = vmatprep.subr.mxu0 0.0
    %688 = vmatpush1.msra.mxu0 0.0
    %689 = vmatprep.subr.mxu0 0.0
    %690 = vmatpush1.msra.mxu0 0.0
    %691 = vmatprep.subr.mxu0 0.0
    %692 = vmatpush1.msra.mxu0 0.0
    %693 = vmatprep.subr.mxu0 0.0
    %694 = vmatpush1.msra.mxu0 0.0
    %695 = vmatprep.mubr.f32.mxu0 0.0
    %696 = vmatmul.mubr.f32.gmra.mrb[0].mxu0 %v629
    %v697 = vpop.f32.mrb[0].mxu0
    %v698 = vadd.f32 0.0, %v697
    %v699 = vpop.f32.mrb[0].mxu0
    %700 = vdwg.mxu0
    %701 = vst.msk [vmem:[#allocation2] sm:$0xff] %vm380, %v625
    %702 = vst.msk [vmem:[#allocation2 + $0x8] sm:$0xff] %vm380, %v698
    %703 = vrot.lane.b32.xlu0 %v204, 120
    %v704 = vpop.permute.xlu0 %703
    %705 = vrot.lane.b32.xlu0 %v287, 120
    %v706 = vpop.permute.xlu0 %705
    %v707 = vsel %vm380, %v704, 0
    %v709 = vsel %vm380, %v706, 0
    %711 = vmatprep.subr.mxu0 0.0
    %712 = vmatpush1.xpose.msra.mxu0 %v709
    %713 = vmatprep.subr.mxu0 0.0
    %714 = vmatpush1.xpose.msra.mxu0 0.0
    %715 = vmatprep.subr.mxu0 0.0
    %716 = vmatpush1.xpose.msra.mxu0 0.0
    %717 = vmatprep.subr.mxu0 0.0
    %718 = vmatpush1.xpose.msra.mxu0 0.0
    %719 = vmatprep.subr.mxu0 0.0
    %720 = vmatpush1.xpose.msra.mxu0 0.0
    %721 = vmatprep.subr.mxu0 0.0
    %722 = vmatpush1.xpose.msra.mxu0 0.0
    %723 = vmatprep.subr.mxu0 0.0
    %724 = vmatpush1.xpose.msra.mxu0 0.0
    %725 = vmatprep.subr.mxu0 0.0
    %726 = vmatpush1.xpose.msra.mxu0 0.0
    %727 = vmatprep.subr.mxu0 0.0
    %728 = vmatpush1.xpose.msra.mxu0 0.0
    %729 = vmatprep.subr.mxu0 0.0
    %730 = vmatpush1.xpose.msra.mxu0 0.0
    %731 = vmatprep.subr.mxu0 0.0
    %732 = vmatpush1.xpose.msra.mxu0 0.0
    %733 = vmatprep.subr.mxu0 0.0
    %734 = vmatpush1.xpose.msra.mxu0 0.0
    %735 = vmatprep.subr.mxu0 0.0
    %736 = vmatpush1.xpose.msra.mxu0 0.0
    %737 = vmatprep.subr.mxu0 0.0
    %738 = vmatpush1.xpose.msra.mxu0 0.0
    %739 = vmatprep.subr.mxu0 0.0
    %740 = vmatpush1.xpose.msra.mxu0 0.0
    %741 = vmatprep.subr.mxu0 0.0
    %742 = vmatpush1.xpose.msra.mxu0 0.0
    %743 = vmatprep.subr.mxu0 0.0
    %744 = vmatpush1.xpose.msra.mxu0 0.0
    %745 = vmatprep.subr.mxu0 0.0
    %746 = vmatpush1.xpose.msra.mxu0 0.0
    %747 = vmatprep.subr.mxu0 0.0
    %748 = vmatpush1.xpose.msra.mxu0 0.0
    %749 = vmatprep.subr.mxu0 0.0
    %750 = vmatpush1.xpose.msra.mxu0 0.0
    %751 = vmatprep.subr.mxu0 0.0
    %752 = vmatpush1.xpose.msra.mxu0 0.0
    %753 = vmatprep.subr.mxu0 0.0
    %754 = vmatpush1.xpose.msra.mxu0 0.0
    %755 = vmatprep.subr.mxu0 0.0
    %756 = vmatpush1.xpose.msra.mxu0 0.0
    %757 = vmatprep.subr.mxu0 0.0
    %758 = vmatpush1.xpose.msra.mxu0 0.0
    %759 = vmatprep.subr.mxu0 0.0
    %760 = vmatpush1.xpose.msra.mxu0 0.0
    %761 = vmatprep.subr.mxu0 0.0
    %762 = vmatpush1.xpose.msra.mxu0 0.0
    %763 = vmatprep.subr.mxu0 0.0
    %764 = vmatpush1.xpose.msra.mxu0 0.0
    %765 = vmatprep.subr.mxu0 0.0
    %766 = vmatpush1.xpose.msra.mxu0 0.0
    %767 = vmatprep.subr.mxu0 0.0
    %768 = vmatpush1.xpose.msra.mxu0 0.0
    %769 = vmatprep.subr.mxu0 0.0
    %770 = vmatpush1.xpose.msra.mxu0 0.0
    %771 = vmatprep.subr.mxu0 0.0
    %772 = vmatpush1.xpose.msra.mxu0 0.0
    %773 = vmatprep.subr.mxu0 0.0
    %774 = vmatpush1.xpose.msra.mxu0 0.0
    %775 = vmatprep.mubr.f32.mxu0 0.0
    %776 = vmatmul.mubr.f32.gmra.mrb[0].mxu0 %v707
    %v777 = vpop.f32.mrb[0].mxu0
    %v778 = vadd.f32 0.0, %v777
    %v779 = vpop.f32.mrb[0].mxu0
    %780 = vdwg.mxu0
    %781 = vrot.lane.b32.xlu0 %v209, 120
    %v782 = vpop.permute.xlu0 %781
    %783 = vrot.lane.b32.xlu0 %v292, 120
    %v784 = vpop.permute.xlu0 %783
    %v785 = vsel %vm380, %v782, 0
    %v787 = vsel %vm380, %v784, 0
    %789 = vmatprep.subr.mxu0 0.0
    %790 = vmatpush1.xpose.msra.mxu0 %v787
    %791 = vmatprep.subr.mxu0 0.0
    %792 = vmatpush1.xpose.msra.mxu0 0.0
    %793 = vmatprep.subr.mxu0 0.0
    %794 = vmatpush1.xpose.msra.mxu0 0.0
    %795 = vmatprep.subr.mxu0 0.0
    %796 = vmatpush1.xpose.msra.mxu0 0.0
    %797 = vmatprep.subr.mxu0 0.0
    %798 = vmatpush1.xpose.msra.mxu0 0.0
    %799 = vmatprep.subr.mxu0 0.0
    %800 = vmatpush1.xpose.msra.mxu0 0.0
    %801 = vmatprep.subr.mxu0 0.0
    %802 = vmatpush1.xpose.msra.mxu0 0.0
    %803 = vmatprep.subr.mxu0 0.0
    %804 = vmatpush1.xpose.msra.mxu0 0.0
    %805 = vmatprep.subr.mxu0 0.0
    %806 = vmatpush1.xpose.msra.mxu0 0.0
    %807 = vmatprep.subr.mxu0 0.0
    %808 = vmatpush1.xpose.msra.mxu0 0.0
    %809 = vmatprep.subr.mxu0 0.0
    %810 = vmatpush1.xpose.msra.mxu0 0.0
    %811 = vmatprep.subr.mxu0 0.0
    %812 = vmatpush1.xpose.msra.mxu0 0.0
    %813 = vmatprep.subr.mxu0 0.0
    %814 = vmatpush1.xpose.msra.mxu0 0.0
    %815 = vmatprep.subr.mxu0 0.0
    %816 = vmatpush1.xpose.msra.mxu0 0.0
    %817 = vmatprep.subr.mxu0 0.0
    %818 = vmatpush1.xpose.msra.mxu0 0.0
    %819 = vmatprep.subr.mxu0 0.0
    %820 = vmatpush1.xpose.msra.mxu0 0.0
    %821 = vmatprep.subr.mxu0 0.0
    %822 = vmatpush1.xpose.msra.mxu0 0.0
    %823 = vmatprep.subr.mxu0 0.0
    %824 = vmatpush1.xpose.msra.mxu0 0.0
    %825 = vmatprep.subr.mxu0 0.0
    %826 = vmatpush1.xpose.msra.mxu0 0.0
    %827 = vmatprep.subr.mxu0 0.0
    %828 = vmatpush1.xpose.msra.mxu0 0.0
    %829 = vmatprep.subr.mxu0 0.0
    %830 = vmatpush1.xpose.msra.mxu0 0.0
    %831 = vmatprep.subr.mxu0 0.0
    %832 = vmatpush1.xpose.msra.mxu0 0.0
    %833 = vmatprep.subr.mxu0 0.0
    %834 = vmatpush1.xpose.msra.mxu0 0.0
    %835 = vmatprep.subr.mxu0 0.0
    %836 = vmatpush1.xpose.msra.mxu0 0.0
    %837 = vmatprep.subr.mxu0 0.0
    %838 = vmatpush1.xpose.msra.mxu0 0.0
    %839 = vmatprep.subr.mxu0 0.0
    %840 = vmatpush1.xpose.msra.mxu0 0.0
    %841 = vmatprep.subr.mxu0 0.0
    %842 = vmatpush1.xpose.msra.mxu0 0.0
    %843 = vmatprep.subr.mxu0 0.0
    %844 = vmatpush1.xpose.msra.mxu0 0.0
    %845 = vmatprep.subr.mxu0 0.0
    %846 = vmatpush1.xpose.msra.mxu0 0.0
    %847 = vmatprep.subr.mxu0 0.0
    %848 = vmatpush1.xpose.msra.mxu0 0.0
    %849 = vmatprep.subr.mxu0 0.0
    %850 = vmatpush1.xpose.msra.mxu0 0.0
    %851 = vmatprep.subr.mxu0 0.0
    %852 = vmatpush1.xpose.msra.mxu0 0.0
    %853 = vmatprep.mubr.f32.mxu0 0.0
    %854 = vmatmul.mubr.f32.gmra.mrb[0].mxu0 %v785
    %v855 = vpop.f32.mrb[0].mxu0
    %v856 = vadd.f32 0.0, %v855
    %v857 = vpop.f32.mrb[0].mxu0
    %858 = vdwg.mxu0
    %v859 = vsel %vm380, %v778, -inf
    %860 = vmax.xlane.f32.xlu0 %v859
    %v861 = vpop.xlane.xlu0 %860
    %v862 = vsel %vm380, %v856, -inf
    %863 = vmax.xlane.f32.xlu0 %v862
    %v864 = vpop.xlane.xlu0 %863
    %v865 = vsub.f32 %v778, %v861
    %v866 = vsub.f32 %v856, %v864
    %v867 = vmul.f32 %v865, 1.442695
    %v868 = vpow.pop %v867
    %v869 = vmul.f32 %v866, 1.442695
    %v870 = vpow.pop %v869
    %v871 = vsel %vm380, %v868, 0.0
    %872 = vadd.xlane.f32.xlu0 %v871
    %v873 = vpop.xlane.xlu0 %872
    %v874 = vsel %vm380, %v870, 0.0
    %875 = vadd.xlane.f32.xlu0 %v874
    %v876 = vpop.xlane.xlu0 %875
    %v877 = vrcp.pop %v873
    %v878 = vrcp.pop %v876
    %v879 = vmul.f32 %v868, %v877
    %v880 = vmul.f32 %v870, %v878
    %882 = vrot.lane.b32.xlu0 %v372, 120
    %v883 = vpop.permute.xlu0 %882
    %v886 = vsel %vm380, %v879, 0
    %888 = vmatprep.subr.mxu0 0.0
    %889 = vmatpush1.msra.mxu0 %v883
    %890 = vmatprep.subr.mxu0 0.0
    %891 = vmatpush1.msra.mxu0 0.0
    %892 = vmatprep.subr.mxu0 0.0
    %893 = vmatpush1.msra.mxu0 0.0
    %894 = vmatprep.subr.mxu0 0.0
    %895 = vmatpush1.msra.mxu0 0.0
    %896 = vmatprep.subr.mxu0 0.0
    %897 = vmatpush1.msra.mxu0 0.0
    %898 = vmatprep.subr.mxu0 0.0
    %899 = vmatpush1.msra.mxu0 0.0
    %900 = vmatprep.subr.mxu0 0.0
    %901 = vmatpush1.msra.mxu0 0.0
    %902 = vmatprep.subr.mxu0 0.0
    %903 = vmatpush1.msra.mxu0 0.0
    %904 = vmatprep.subr.mxu0 0.0
    %905 = vmatpush1.msra.mxu0 0.0
    %906 = vmatprep.subr.mxu0 0.0
    %907 = vmatpush1.msra.mxu0 0.0
    %908 = vmatprep.subr.mxu0 0.0
    %909 = vmatpush1.msra.mxu0 0.0
    %910 = vmatprep.subr.mxu0 0.0
    %911 = vmatpush1.msra.mxu0 0.0
    %912 = vmatprep.subr.mxu0 0.0
    %913 = vmatpush1.msra.mxu0 0.0
    %914 = vmatprep.subr.mxu0 0.0
    %915 = vmatpush1.msra.mxu0 0.0
    %916 = vmatprep.subr.mxu0 0.0
    %917 = vmatpush1.msra.mxu0 0.0
    %918 = vmatprep.subr.mxu0 0.0
    %919 = vmatpush1.msra.mxu0 0.0
    %920 = vmatprep.subr.mxu0 0.0
    %921 = vmatpush1.msra.mxu0 0.0
    %922 = vmatprep.subr.mxu0 0.0
    %923 = vmatpush1.msra.mxu0 0.0
    %924 = vmatprep.subr.mxu0 0.0
    %925 = vmatpush1.msra.mxu0 0.0
    %926 = vmatprep.subr.mxu0 0.0
    %927 = vmatpush1.msra.mxu0 0.0
    %928 = vmatprep.subr.mxu0 0.0
    %929 = vmatpush1.msra.mxu0 0.0
    %930 = vmatprep.subr.mxu0 0.0
    %931 = vmatpush1.msra.mxu0 0.0
    %932 = vmatprep.subr.mxu0 0.0
    %933 = vmatpush1.msra.mxu0 0.0
    %934 = vmatprep.subr.mxu0 0.0
    %935 = vmatpush1.msra.mxu0 0.0
    %936 = vmatprep.subr.mxu0 0.0
    %937 = vmatpush1.msra.mxu0 0.0
    %938 = vmatprep.subr.mxu0 0.0
    %939 = vmatpush1.msra.mxu0 0.0
    %940 = vmatprep.subr.mxu0 0.0
    %941 = vmatpush1.msra.mxu0 0.0
    %942 = vmatprep.subr.mxu0 0.0
    %943 = vmatpush1.msra.mxu0 0.0
    %944 = vmatprep.subr.mxu0 0.0
    %945 = vmatpush1.msra.mxu0 0.0
    %946 = vmatprep.subr.mxu0 0.0
    %947 = vmatpush1.msra.mxu0 0.0
    %948 = vmatprep.subr.mxu0 0.0
    %949 = vmatpush1.msra.mxu0 0.0
    %950 = vmatprep.subr.mxu0 0.0
    %951 = vmatpush1.msra.mxu0 0.0
    %952 = vmatprep.mubr.f32.mxu0 0.0
    %953 = vmatmul.mubr.f32.gmra.mrb[0].mxu0 %v886
    %v954 = vpop.f32.mrb[0].mxu0
    %v955 = vadd.f32 0.0, %v954
    %v956 = vpop.f32.mrb[0].mxu0
    %957 = vdwg.mxu0
    %959 = vrot.lane.b32.xlu0 %v377, 120
    %v960 = vpop.permute.xlu0 %959
    %v963 = vsel %vm380, %v880, 0
    %965 = vmatprep.subr.mxu0 0.0
    %966 = vmatpush1.msra.mxu0 %v960
    %967 = vmatprep.subr.mxu0 0.0
    %968 = vmatpush1.msra.mxu0 0.0
    %969 = vmatprep.subr.mxu0 0.0
    %970 = vmatpush1.msra.mxu0 0.0
    %971 = vmatprep.subr.mxu0 0.0
    %972 = vmatpush1.msra.mxu0 0.0
    %973 = vmatprep.subr.mxu0 0.0
    %974 = vmatpush1.msra.mxu0 0.0
    %975 = vmatprep.subr.mxu0 0.0
    %976 = vmatpush1.msra.mxu0 0.0
    %977 = vmatprep.subr.mxu0 0.0
    %978 = vmatpush1.msra.mxu0 0.0
    %979 = vmatprep.subr.mxu0 0.0
    %980 = vmatpush1.msra.mxu0 0.0
    %981 = vmatprep.subr.mxu0 0.0
    %982 = vmatpush1.msra.mxu0 0.0
    %983 = vmatprep.subr.mxu0 0.0
    %984 = vmatpush1.msra.mxu0 0.0
    %985 = vmatprep.subr.mxu0 0.0
    %986 = vmatpush1.msra.mxu0 0.0
    %987 = vmatprep.subr.mxu0 0.0
    %988 = vmatpush1.msra.mxu0 0.0
    %989 = vmatprep.subr.mxu0 0.0
    %990 = vmatpush1.msra.mxu0 0.0
    %991 = vmatprep.subr.mxu0 0.0
    %992 = vmatpush1.msra.mxu0 0.0
    %993 = vmatprep.subr.mxu0 0.0
    %994 = vmatpush1.msra.mxu0 0.0
    %995 = vmatprep.subr.mxu0 0.0
    %996 = vmatpush1.msra.mxu0 0.0
    %997 = vmatprep.subr.mxu0 0.0
    %998 = vmatpush1.msra.mxu0 0.0
    %999 = vmatprep.subr.mxu0 0.0
    %1000 = vmatpush1.msra.mxu0 0.0
    %1001 = vmatprep.subr.mxu0 0.0
    %1002 = vmatpush1.msra.mxu0 0.0
    %1003 = vmatprep.subr.mxu0 0.0
    %1004 = vmatpush1.msra.mxu0 0.0
    %1005 = vmatprep.subr.mxu0 0.0
    %1006 = vmatpush1.msra.mxu0 0.0
    %1007 = vmatprep.subr.mxu0 0.0
    %1008 = vmatpush1.msra.mxu0 0.0
    %1009 = vmatprep.subr.mxu0 0.0
    %1010 = vmatpush1.msra.mxu0 0.0
    %1011 = vmatprep.subr.mxu0 0.0
    %1012 = vmatpush1.msra.mxu0 0.0
    %1013 = vmatprep.subr.mxu0 0.0
    %1014 = vmatpush1.msra.mxu0 0.0
    %1015 = vmatprep.subr.mxu0 0.0
    %1016 = vmatpush1.msra.mxu0 0.0
    %1017 = vmatprep.subr.mxu0 0.0
    %1018 = vmatpush1.msra.mxu0 0.0
    %1019 = vmatprep.subr.mxu0 0.0
    %1020 = vmatpush1.msra.mxu0 0.0
    %1021 = vmatprep.subr.mxu0 0.0
    %1022 = vmatpush1.msra.mxu0 0.0
    %1023 = vmatprep.subr.mxu0 0.0
    %1024 = vmatpush1.msra.mxu0 0.0
    %1025 = vmatprep.subr.mxu0 0.0
    %1026 = vmatpush1.msra.mxu0 0.0
    %1027 = vmatprep.subr.mxu0 0.0
    %1028 = vmatpush1.msra.mxu0 0.0
    %1029 = vmatprep.mubr.f32.mxu0 0.0
    %1030 = vmatmul.mubr.f32.gmra.mrb[0].mxu0 %v963
    %v1031 = vpop.f32.mrb[0].mxu0
    %v1032 = vadd.f32 0.0, %v1031
    %v1033 = vpop.f32.mrb[0].mxu0
    %1034 = vdwg.mxu0
    %1037 = vrot.lane.b32.xlu0 %v955, 8
    %v1038 = vpop.permute.xlu0 %1037
    %1039 = vrot.lane.b32.xlu0 %v1032, 8
    %v1040 = vpop.permute.xlu0 %1039
    %vm1043 = vcmask 130112
    %1044 = vst.msk [vmem:[#allocation2] sm:$0xff] %vm1043, %v1038
    %1045 = vst.msk [vmem:[#allocation2 + $0x8] sm:$0xff] %vm1043, %v1040
    %1046 = vrot.lane.b32.xlu0 %v204, 112
    %v1047 = vpop.permute.xlu0 %1046
    %1048 = vrot.lane.b32.xlu0 %v287, 112
    %v1049 = vpop.permute.xlu0 %1048
    %v1050 = vsel %vm380, %v1047, 0
    %v1052 = vsel %vm380, %v1049, 0
    %1054 = vmatprep.subr.mxu0 0.0
    %1055 = vmatpush1.xpose.msra.mxu0 %v1052
    %1056 = vmatprep.subr.mxu0 0.0
    %1057 = vmatpush1.xpose.msra.mxu0 0.0
    %1058 = vmatprep.subr.mxu0 0.0
    %1059 = vmatpush1.xpose.msra.mxu0 0.0
    %1060 = vmatprep.subr.mxu0 0.0
    %1061 = vmatpush1.xpose.msra.mxu0 0.0
    %1062 = vmatprep.subr.mxu0 0.0
    %1063 = vmatpush1.xpose.msra.mxu0 0.0
    %1064 = vmatprep.subr.mxu0 0.0
    %1065 = vmatpush1.xpose.msra.mxu0 0.0
    %1066 = vmatprep.subr.mxu0 0.0
    %1067 = vmatpush1.xpose.msra.mxu0 0.0
    %1068 = vmatprep.subr.mxu0 0.0
    %1069 = vmatpush1.xpose.msra.mxu0 0.0
    %1070 = vmatprep.subr.mxu0 0.0
    %1071 = vmatpush1.xpose.msra.mxu0 0.0
    %1072 = vmatprep.subr.mxu0 0.0
    %1073 = vmatpush1.xpose.msra.mxu0 0.0
    %1074 = vmatprep.subr.mxu0 0.0
    %1075 = vmatpush1.xpose.msra.mxu0 0.0
    %1076 = vmatprep.subr.mxu0 0.0
    %1077 = vmatpush1.xpose.msra.mxu0 0.0
    %1078 = vmatprep.subr.mxu0 0.0
    %1079 = vmatpush1.xpose.msra.mxu0 0.0
    %1080 = vmatprep.subr.mxu0 0.0
    %1081 = vmatpush1.xpose.msra.mxu0 0.0
    %1082 = vmatprep.subr.mxu0 0.0
    %1083 = vmatpush1.xpose.msra.mxu0 0.0
    %1084 = vmatprep.subr.mxu0 0.0
    %1085 = vmatpush1.xpose.msra.mxu0 0.0
    %1086 = vmatprep.subr.mxu0 0.0
    %1087 = vmatpush1.xpose.msra.mxu0 0.0
    %1088 = vmatprep.subr.mxu0 0.0
    %1089 = vmatpush1.xpose.msra.mxu0 0.0
    %1090 = vmatprep.subr.mxu0 0.0
    %1091 = vmatpush1.xpose.msra.mxu0 0.0
    %1092 = vmatprep.subr.mxu0 0.0
    %1093 = vmatpush1.xpose.msra.mxu0 0.0
    %1094 = vmatprep.subr.mxu0 0.0
    %1095 = vmatpush1.xpose.msra.mxu0 0.0
    %1096 = vmatprep.subr.mxu0 0.0
    %1097 = vmatpush1.xpose.msra.mxu0 0.0
    %1098 = vmatprep.subr.mxu0 0.0
    %1099 = vmatpush1.xpose.msra.mxu0 0.0
    %1100 = vmatprep.subr.mxu0 0.0
    %1101 = vmatpush1.xpose.msra.mxu0 0.0
    %1102 = vmatprep.subr.mxu0 0.0
    %1103 = vmatpush1.xpose.msra.mxu0 0.0
    %1104 = vmatprep.subr.mxu0 0.0
    %1105 = vmatpush1.xpose.msra.mxu0 0.0
    %1106 = vmatprep.subr.mxu0 0.0
    %1107 = vmatpush1.xpose.msra.mxu0 0.0
    %1108 = vmatprep.subr.mxu0 0.0
    %1109 = vmatpush1.xpose.msra.mxu0 0.0
    %1110 = vmatprep.subr.mxu0 0.0
    %1111 = vmatpush1.xpose.msra.mxu0 0.0
    %1112 = vmatprep.subr.mxu0 0.0
    %1113 = vmatpush1.xpose.msra.mxu0 0.0
    %1114 = vmatprep.subr.mxu0 0.0
    %1115 = vmatpush1.xpose.msra.mxu0 0.0
    %1116 = vmatprep.subr.mxu0 0.0
    %1117 = vmatpush1.xpose.msra.mxu0 0.0
    %1118 = vmatprep.mubr.f32.mxu0 0.0
    %1119 = vmatmul.mubr.f32.gmra.mrb[0].mxu0 %v1050
    %v1120 = vpop.f32.mrb[0].mxu0
    %v1121 = vadd.f32 0.0, %v1120
    %v1122 = vpop.f32.mrb[0].mxu0
    %1123 = vdwg.mxu0
    %1124 = vrot.lane.b32.xlu0 %v209, 112
    %v1125 = vpop.permute.xlu0 %1124
    %1126 = vrot.lane.b32.xlu0 %v292, 112
    %v1127 = vpop.permute.xlu0 %1126
    %v1128 = vsel %vm380, %v1125, 0
    %v1130 = vsel %vm380, %v1127, 0
    %1132 = vmatprep.subr.mxu0 0.0
    %1133 = vmatpush1.xpose.msra.mxu0 %v1130
    %1134 = vmatprep.subr.mxu0 0.0
    %1135 = vmatpush1.xpose.msra.mxu0 0.0
    %1136 = vmatprep.subr.mxu0 0.0
    %1137 = vmatpush1.xpose.msra.mxu0 0.0
    %1138 = vmatprep.subr.mxu0 0.0
    %1139 = vmatpush1.xpose.msra.mxu0 0.0
    %1140 = vmatprep.subr.mxu0 0.0
    %1141 = vmatpush1.xpose.msra.mxu0 0.0
    %1142 = vmatprep.subr.mxu0 0.0
    %1143 = vmatpush1.xpose.msra.mxu0 0.0
    %1144 = vmatprep.subr.mxu0 0.0
    %1145 = vmatpush1.xpose.msra.mxu0 0.0
    %1146 = vmatprep.subr.mxu0 0.0
    %1147 = vmatpush1.xpose.msra.mxu0 0.0
    %1148 = vmatprep.subr.mxu0 0.0
    %1149 = vmatpush1.xpose.msra.mxu0 0.0
    %1150 = vmatprep.subr.mxu0 0.0
    %1151 = vmatpush1.xpose.msra.mxu0 0.0
    %1152 = vmatprep.subr.mxu0 0.0
    %1153 = vmatpush1.xpose.msra.mxu0 0.0
    %1154 = vmatprep.subr.mxu0 0.0
    %1155 = vmatpush1.xpose.msra.mxu0 0.0
    %1156 = vmatprep.subr.mxu0 0.0
    %1157 = vmatpush1.xpose.msra.mxu0 0.0
    %1158 = vmatprep.subr.mxu0 0.0
    %1159 = vmatpush1.xpose.msra.mxu0 0.0
    %1160 = vmatprep.subr.mxu0 0.0
    %1161 = vmatpush1.xpose.msra.mxu0 0.0
    %1162 = vmatprep.subr.mxu0 0.0
    %1163 = vmatpush1.xpose.msra.mxu0 0.0
    %1164 = vmatprep.subr.mxu0 0.0
    %1165 = vmatpush1.xpose.msra.mxu0 0.0
    %1166 = vmatprep.subr.mxu0 0.0
    %1167 = vmatpush1.xpose.msra.mxu0 0.0
    %1168 = vmatprep.subr.mxu0 0.0
    %1169 = vmatpush1.xpose.msra.mxu0 0.0
    %1170 = vmatprep.subr.mxu0 0.0
    %1171 = vmatpush1.xpose.msra.mxu0 0.0
    %1172 = vmatprep.subr.mxu0 0.0
    %1173 = vmatpush1.xpose.msra.mxu0 0.0
    %1174 = vmatprep.subr.mxu0 0.0
    %1175 = vmatpush1.xpose.msra.mxu0 0.0
    %1176 = vmatprep.subr.mxu0 0.0
    %1177 = vmatpush1.xpose.msra.mxu0 0.0
    %1178 = vmatprep.subr.mxu0 0.0
    %1179 = vmatpush1.xpose.msra.mxu0 0.0
    %1180 = vmatprep.subr.mxu0 0.0
    %1181 = vmatpush1.xpose.msra.mxu0 0.0
    %1182 = vmatprep.subr.mxu0 0.0
    %1183 = vmatpush1.xpose.msra.mxu0 0.0
    %1184 = vmatprep.subr.mxu0 0.0
    %1185 = vmatpush1.xpose.msra.mxu0 0.0
    %1186 = vmatprep.subr.mxu0 0.0
    %1187 = vmatpush1.xpose.msra.mxu0 0.0
    %1188 = vmatprep.subr.mxu0 0.0
    %1189 = vmatpush1.xpose.msra.mxu0 0.0
    %1190 = vmatprep.subr.mxu0 0.0
    %1191 = vmatpush1.xpose.msra.mxu0 0.0
    %1192 = vmatprep.subr.mxu0 0.0
    %1193 = vmatpush1.xpose.msra.mxu0 0.0
    %1194 = vmatprep.subr.mxu0 0.0
    %1195 = vmatpush1.xpose.msra.mxu0 0.0
    %1196 = vmatprep.mubr.f32.mxu0 0.0
    %1197 = vmatmul.mubr.f32.gmra.mrb[0].mxu0 %v1128
    %v1198 = vpop.f32.mrb[0].mxu0
    %v1199 = vadd.f32 0.0, %v1198
    %v1200 = vpop.f32.mrb[0].mxu0
    %1201 = vdwg.mxu0
    %v1202 = vsel %vm380, %v1121, -inf
    %1203 = vmax.xlane.f32.xlu0 %v1202
    %v1204 = vpop.xlane.xlu0 %1203
    %v1205 = vsel %vm380, %v1199, -inf
    %1206 = vmax.xlane.f32.xlu0 %v1205
    %v1207 = vpop.xlane.xlu0 %1206
    %v1208 = vsub.f32 %v1121, %v1204
    %v1209 = vsub.f32 %v1199, %v1207
    %v1210 = vmul.f32 %v1208, 1.442695
    %v1211 = vpow.pop %v1210
    %v1212 = vmul.f32 %v1209, 1.442695
    %v1213 = vpow.pop %v1212
    %v1214 = vsel %vm380, %v1211, 0.0
    %1215 = vadd.xlane.f32.xlu0 %v1214
    %v1216 = vpop.xlane.xlu0 %1215
    %v1217 = vsel %vm380, %v1213, 0.0
    %1218 = vadd.xlane.f32.xlu0 %v1217
    %v1219 = vpop.xlane.xlu0 %1218
    %v1220 = vrcp.pop %v1216
    %v1221 = vrcp.pop %v1219
    %v1222 = vmul.f32 %v1211, %v1220
    %v1223 = vmul.f32 %v1213, %v1221
    %1224 = vrot.lane.b32.xlu0 %v372, 112
    %v1225 = vpop.permute.xlu0 %1224
    %v1228 = vsel %vm380, %v1222, 0
    %1230 = vmatprep.subr.mxu0 0.0
    %1231 = vmatpush1.msra.mxu0 %v1225
    %1232 = vmatprep.subr.mxu0 0.0
    %1233 = vmatpush1.msra.mxu0 0.0
    %1234 = vmatprep.subr.mxu0 0.0
    %1235 = vmatpush1.msra.mxu0 0.0
    %1236 = vmatprep.subr.mxu0 0.0
    %1237 = vmatpush1.msra.mxu0 0.0
    %1238 = vmatprep.subr.mxu0 0.0
    %1239 = vmatpush1.msra.mxu0 0.0
    %1240 = vmatprep.subr.mxu0 0.0
    %1241 = vmatpush1.msra.mxu0 0.0
    %1242 = vmatprep.subr.mxu0 0.0
    %1243 = vmatpush1.msra.mxu0 0.0
    %1244 = vmatprep.subr.mxu0 0.0
    %1245 = vmatpush1.msra.mxu0 0.0
    %1246 = vmatprep.subr.mxu0 0.0
    %1247 = vmatpush1.msra.mxu0 0.0
    %1248 = vmatprep.subr.mxu0 0.0
    %1249 = vmatpush1.msra.mxu0 0.0
    %1250 = vmatprep.subr.mxu0 0.0
    %1251 = vmatpush1.msra.mxu0 0.0
    %1252 = vmatprep.subr.mxu0 0.0
    %1253 = vmatpush1.msra.mxu0 0.0
    %1254 = vmatprep.subr.mxu0 0.0
    %1255 = vmatpush1.msra.mxu0 0.0
    %1256 = vmatprep.subr.mxu0 0.0
    %1257 = vmatpush1.msra.mxu0 0.0
    %1258 = vmatprep.subr.mxu0 0.0
    %1259 = vmatpush1.msra.mxu0 0.0
    %1260 = vmatprep.subr.mxu0 0.0
    %1261 = vmatpush1.msra.mxu0 0.0
    %1262 = vmatprep.subr.mxu0 0.0
    %1263 = vmatpush1.msra.mxu0 0.0
    %1264 = vmatprep.subr.mxu0 0.0
    %1265 = vmatpush1.msra.mxu0 0.0
    %1266 = vmatprep.subr.mxu0 0.0
    %1267 = vmatpush1.msra.mxu0 0.0
    %1268 = vmatprep.subr.mxu0 0.0
    %1269 = vmatpush1.msra.mxu0 0.0
    %1270 = vmatprep.subr.mxu0 0.0
    %1271 = vmatpush1.msra.mxu0 0.0
    %1272 = vmatprep.subr.mxu0 0.0
    %1273 = vmatpush1.msra.mxu0 0.0
    %1274 = vmatprep.subr.mxu0 0.0
    %1275 = vmatpush1.msra.mxu0 0.0
    %1276 = vmatprep.subr.mxu0 0.0
    %1277 = vmatpush1.msra.mxu0 0.0
    %1278 = vmatprep.subr.mxu0 0.0
    %1279 = vmatpush1.msra.mxu0 0.0
    %1280 = vmatprep.subr.mxu0 0.0
    %1281 = vmatpush1.msra.mxu0 0.0
    %1282 = vmatprep.subr.mxu0 0.0
    %1283 = vmatpush1.msra.mxu0 0.0
    %1284 = vmatprep.subr.mxu0 0.0
    %1285 = vmatpush1.msra.mxu0 0.0
    %1286 = vmatprep.subr.mxu0 0.0
    %1287 = vmatpush1.msra.mxu0 0.0
    %1288 = vmatprep.subr.mxu0 0.0
    %1289 = vmatpush1.msra.mxu0 0.0
    %1290 = vmatprep.subr.mxu0 0.0
    %1291 = vmatpush1.msra.mxu0 0.0
    %1292 = vmatprep.subr.mxu0 0.0
    %1293 = vmatpush1.msra.mxu0 0.0
    %1294 = vmatprep.mubr.f32.mxu0 0.0
    %1295 = vmatmul.mubr.f32.gmra.mrb[0].mxu0 %v1228
    %v1296 = vpop.f32.mrb[0].mxu0
    %v1297 = vadd.f32 0.0, %v1296
    %v1298 = vpop.f32.mrb[0].mxu0
    %1299 = vdwg.mxu0
    %1300 = vrot.lane.b32.xlu0 %v377, 112
    %v1301 = vpop.permute.xlu0 %1300
    %v1304 = vsel %vm380, %v1223, 0
    %1306 = vmatprep.subr.mxu0 0.0
    %1307 = vmatpush1.msra.mxu0 %v1301
    %1308 = vmatprep.subr.mxu0 0.0
    %1309 = vmatpush1.msra.mxu0 0.0
    %1310 = vmatprep.subr.mxu0 0.0
    %1311 = vmatpush1.msra.mxu0 0.0
    %1312 = vmatprep.subr.mxu0 0.0
    %1313 = vmatpush1.msra.mxu0 0.0
    %1314 = vmatprep.subr.mxu0 0.0
    %1315 = vmatpush1.msra.mxu0 0.0
    %1316 = vmatprep.subr.mxu0 0.0
    %1317 = vmatpush1.msra.mxu0 0.0
    %1318 = vmatprep.subr.mxu0 0.0
    %1319 = vmatpush1.msra.mxu0 0.0
    %1320 = vmatprep.subr.mxu0 0.0
    %1321 = vmatpush1.msra.mxu0 0.0
    %1322 = vmatprep.subr.mxu0 0.0
    %1323 = vmatpush1.msra.mxu0 0.0
    %1324 = vmatprep.subr.mxu0 0.0
    %1325 = vmatpush1.msra.mxu0 0.0
    %1326 = vmatprep.subr.mxu0 0.0
    %1327 = vmatpush1.msra.mxu0 0.0
    %1328 = vmatprep.subr.mxu0 0.0
    %1329 = vmatpush1.msra.mxu0 0.0
    %1330 = vmatprep.subr.mxu0 0.0
    %1331 = vmatpush1.msra.mxu0 0.0
    %1332 = vmatprep.subr.mxu0 0.0
    %1333 = vmatpush1.msra.mxu0 0.0
    %1334 = vmatprep.subr.mxu0 0.0
    %1335 = vmatpush1.msra.mxu0 0.0
    %1336 = vmatprep.subr.mxu0 0.0
    %1337 = vmatpush1.msra.mxu0 0.0
    %1338 = vmatprep.subr.mxu0 0.0
    %1339 = vmatpush1.msra.mxu0 0.0
    %1340 = vmatprep.subr.mxu0 0.0
    %1341 = vmatpush1.msra.mxu0 0.0
    %1342 = vmatprep.subr.mxu0 0.0
    %1343 = vmatpush1.msra.mxu0 0.0
    %1344 = vmatprep.subr.mxu0 0.0
    %1345 = vmatpush1.msra.mxu0 0.0
    %1346 = vmatprep.subr.mxu0 0.0
    %1347 = vmatpush1.msra.mxu0 0.0
    %1348 = vmatprep.subr.mxu0 0.0
    %1349 = vmatpush1.msra.mxu0 0.0
    %1350 = vmatprep.subr.mxu0 0.0
    %1351 = vmatpush1.msra.mxu0 0.0
    %1352 = vmatprep.subr.mxu0 0.0
    %1353 = vmatpush1.msra.mxu0 0.0
    %1354 = vmatprep.subr.mxu0 0.0
    %1355 = vmatpush1.msra.mxu0 0.0
    %1356 = vmatprep.subr.mxu0 0.0
    %1357 = vmatpush1.msra.mxu0 0.0
    %1358 = vmatprep.subr.mxu0 0.0
    %1359 = vmatpush1.msra.mxu0 0.0
    %1360 = vmatprep.subr.mxu0 0.0
    %1361 = vmatpush1.msra.mxu0 0.0
    %1362 = vmatprep.subr.mxu0 0.0
    %1363 = vmatpush1.msra.mxu0 0.0
    %1364 = vmatprep.subr.mxu0 0.0
    %1365 = vmatpush1.msra.mxu0 0.0
    %1366 = vmatprep.subr.mxu0 0.0
    %1367 = vmatpush1.msra.mxu0 0.0
    %1368 = vmatprep.subr.mxu0 0.0
    %1369 = vmatpush1.msra.mxu0 0.0
    %1370 = vmatprep.mubr.f32.mxu0 0.0
    %1371 = vmatmul.mubr.f32.gmra.mrb[0].mxu0 %v1304
    %v1372 = vpop.f32.mrb[0].mxu0
    %v1373 = vadd.f32 0.0, %v1372
    %v1374 = vpop.f32.mrb[0].mxu0
    %1375 = vdwg.mxu0
    %1378 = vrot.lane.b32.xlu0 %v1297, 16
    %v1379 = vpop.permute.xlu0 %1378
    %1380 = vrot.lane.b32.xlu0 %v1373, 16
    %v1381 = vpop.permute.xlu0 %1380
    %vm1384 = vcmask 195712
    %1385 = vst.msk [vmem:[#allocation2] sm:$0xff] %vm1384, %v1379
    %1386 = vst.msk [vmem:[#allocation2 + $0x8] sm:$0xff] %vm1384, %v1381
    %1387 = vrot.lane.b32.xlu0 %v204, 104
    %v1388 = vpop.permute.xlu0 %1387
    %1389 = vrot.lane.b32.xlu0 %v287, 104
    %v1390 = vpop.permute.xlu0 %1389
    %v1391 = vsel %vm380, %v1388, 0
    %v1393 = vsel %vm380, %v1390, 0
    %1395 = vmatprep.subr.mxu0 0.0
    %1396 = vmatpush1.xpose.msra.mxu0 %v1393
    %1397 = vmatprep.subr.mxu0 0.0
    %1398 = vmatpush1.xpose.msra.mxu0 0.0
    %1399 = vmatprep.subr.mxu0 0.0
    %1400 = vmatpush1.xpose.msra.mxu0 0.0
    %1401 = vmatprep.subr.mxu0 0.0
    %1402 = vmatpush1.xpose.msra.mxu0 0.0
    %1403 = vmatprep.subr.mxu0 0.0
    %1404 = vmatpush1.xpose.msra.mxu0 0.0
    %1405 = vmatprep.subr.mxu0 0.0
    %1406 = vmatpush1.xpose.msra.mxu0 0.0
    %1407 = vmatprep.subr.mxu0 0.0
    %1408 = vmatpush1.xpose.msra.mxu0 0.0
    %1409 = vmatprep.subr.mxu0 0.0
    %1410 = vmatpush1.xpose.msra.mxu0 0.0
    %1411 = vmatprep.subr.mxu0 0.0
    %1412 = vmatpush1.xpose.msra.mxu0 0.0
    %1413 = vmatprep.subr.mxu0 0.0
    %1414 = vmatpush1.xpose.msra.mxu0 0.0
    %1415 = vmatprep.subr.mxu0 0.0
    %1416 = vmatpush1.xpose.msra.mxu0 0.0
    %1417 = vmatprep.subr.mxu0 0.0
    %1418 = vmatpush1.xpose.msra.mxu0 0.0
    %1419 = vmatprep.subr.mxu0 0.0
    %1420 = vmatpush1.xpose.msra.mxu0 0.0
    %1421 = vmatprep.subr.mxu0 0.0
    %1422 = vmatpush1.xpose.msra.mxu0 0.0
    %1423 = vmatprep.subr.mxu0 0.0
    %1424 = vmatpush1.xpose.msra.mxu0 0.0
    %1425 = vmatprep.subr.mxu0 0.0
    %1426 = vmatpush1.xpose.msra.mxu0 0.0
    %1427 = vmatprep.subr.mxu0 0.0
    %1428 = vmatpush1.xpose.msra.mxu0 0.0
    %1429 = vmatprep.subr.mxu0 0.0
    %1430 = vmatpush1.xpose.msra.mxu0 0.0
    %1431 = vmatprep.subr.mxu0 0.0
    %1432 = vmatpush1.xpose.msra.mxu0 0.0
    %1433 = vmatprep.subr.mxu0 0.0
    %1434 = vmatpush1.xpose.msra.mxu0 0.0
    %1435 = vmatprep.subr.mxu0 0.0
    %1436 = vmatpush1.xpose.msra.mxu0 0.0
    %1437 = vmatprep.subr.mxu0 0.0
    %1438 = vmatpush1.xpose.msra.mxu0 0.0
    %1439 = vmatprep.subr.mxu0 0.0
    %1440 = vmatpush1.xpose.msra.mxu0 0.0
    %1441 = vmatprep.subr.mxu0 0.0
    %1442 = vmatpush1.xpose.msra.mxu0 0.0
    %1443 = vmatprep.subr.mxu0 0.0
    %1444 = vmatpush1.xpose.msra.mxu0 0.0
    %1445 = vmatprep.subr.mxu0 0.0
    %1446 = vmatpush1.xpose.msra.mxu0 0.0
    %1447 = vmatprep.subr.mxu0 0.0
    %1448 = vmatpush1.xpose.msra.mxu0 0.0
    %1449 = vmatprep.subr.mxu0 0.0
    %1450 = vmatpush1.xpose.msra.mxu0 0.0
    %1451 = vmatprep.subr.mxu0 0.0
    %1452 = vmatpush1.xpose.msra.mxu0 0.0
    %1453 = vmatprep.subr.mxu0 0.0
    %1454 = vmatpush1.xpose.msra.mxu0 0.0
    %1455 = vmatprep.subr.mxu0 0.0
    %1456 = vmatpush1.xpose.msra.mxu0 0.0
    %1457 = vmatprep.subr.mxu0 0.0
    %1458 = vmatpush1.xpose.msra.mxu0 0.0
    %1459 = vmatprep.mubr.f32.mxu0 0.0
    %1460 = vmatmul.mubr.f32.gmra.mrb[0].mxu0 %v1391
    %v1461 = vpop.f32.mrb[0].mxu0
    %v1462 = vadd.f32 0.0, %v1461
    %v1463 = vpop.f32.mrb[0].mxu0
    %1464 = vdwg.mxu0
    %1465 = vrot.lane.b32.xlu0 %v209, 104
    %v1466 = vpop.permute.xlu0 %1465
    %1467 = vrot.lane.b32.xlu0 %v292, 104
    %v1468 = vpop.permute.xlu0 %1467
    %v1469 = vsel %vm380, %v1466, 0
    %v1471 = vsel %vm380, %v1468, 0
    %1473 = vmatprep.subr.mxu0 0.0
    %1474 = vmatpush1.xpose.msra.mxu0 %v1471
    %1475 = vmatprep.subr.mxu0 0.0
    %1476 = vmatpush1.xpose.msra.mxu0 0.0
    %1477 = vmatprep.subr.mxu0 0.0
    %1478 = vmatpush1.xpose.msra.mxu0 0.0
    %1479 = vmatprep.subr.mxu0 0.0
    %1480 = vmatpush1.xpose.msra.mxu0 0.0
    %1481 = vmatprep.subr.mxu0 0.0
    %1482 = vmatpush1.xpose.msra.mxu0 0.0
    %1483 = vmatprep.subr.mxu0 0.0
    %1484 = vmatpush1.xpose.msra.mxu0 0.0
    %1485 = vmatprep.subr.mxu0 0.0
    %1486 = vmatpush1.xpose.msra.mxu0 0.0
    %1487 = vmatprep.subr.mxu0 0.0
    %1488 = vmatpush1.xpose.msra.mxu0 0.0
    %1489 = vmatprep.subr.mxu0 0.0
    %1490 = vmatpush1.xpose.msra.mxu0 0.0
    %1491 = vmatprep.subr.mxu0 0.0
    %1492 = vmatpush1.xpose.msra.mxu0 0.0
    %1493 = vmatprep.subr.mxu0 0.0
    %1494 = vmatpush1.xpose.msra.mxu0 0.0
    %1495 = vmatprep.subr.mxu0 0.0
    %1496 = vmatpush1.xpose.msra.mxu0 0.0
    %1497 = vmatprep.subr.mxu0 0.0
    %1498 = vmatpush1.xpose.msra.mxu0 0.0
    %1499 = vmatprep.subr.mxu0 0.0
    %1500 = vmatpush1.xpose.msra.mxu0 0.0
    %1501 = vmatprep.subr.mxu0 0.0
    %1502 = vmatpush1.xpose.msra.mxu0 0.0
    %1503 = vmatprep.subr.mxu0 0.0
    %1504 = vmatpush1.xpose.msra.mxu0 0.0
    %1505 = vmatprep.subr.mxu0 0.0
    %1506 = vmatpush1.xpose.msra.mxu0 0.0
    %1507 = vmatprep.subr.mxu0 0.0
    %1508 = vmatpush1.xpose.msra.mxu0 0.0
    %1509 = vmatprep.subr.mxu0 0.0
    %1510 = vmatpush1.xpose.msra.mxu0 0.0
    %1511 = vmatprep.subr.mxu0 0.0
    %1512 = vmatpush1.xpose.msra.mxu0 0.0
    %1513 = vmatprep.subr.mxu0 0.0
    %1514 = vmatpush1.xpose.msra.mxu0 0.0
    %1515 = vmatprep.subr.mxu0 0.0
    %1516 = vmatpush1.xpose.msra.mxu0 0.0
    %1517 = vmatprep.subr.mxu0 0.0
    %1518 = vmatpush1.xpose.msra.mxu0 0.0
    %1519 = vmatprep.subr.mxu0 0.0
    %1520 = vmatpush1.xpose.msra.mxu0 0.0
    %1521 = vmatprep.subr.mxu0 0.0
    %1522 = vmatpush1.xpose.msra.mxu0 0.0
    %1523 = vmatprep.subr.mxu0 0.0
    %1524 = vmatpush1.xpose.msra.mxu0 0.0
    %1525 = vmatprep.subr.mxu0 0.0
    %1526 = vmatpush1.xpose.msra.mxu0 0.0
    %1527 = vmatprep.subr.mxu0 0.0
    %1528 = vmatpush1.xpose.msra.mxu0 0.0
    %1529 = vmatprep.subr.mxu0 0.0
    %1530 = vmatpush1.xpose.msra.mxu0 0.0
    %1531 = vmatprep.subr.mxu0 0.0
    %1532 = vmatpush1.xpose.msra.mxu0 0.0
    %1533 = vmatprep.subr.mxu0 0.0
    %1534 = vmatpush1.xpose.msra.mxu0 0.0
    %1535 = vmatprep.subr.mxu0 0.0
    %1536 = vmatpush1.xpose.msra.mxu0 0.0
    %1537 = vmatprep.mubr.f32.mxu0 0.0
    %1538 = vmatmul.mubr.f32.gmra.mrb[0].mxu0 %v1469
    %v1539 = vpop.f32.mrb[0].mxu0
    %v1540 = vadd.f32 0.0, %v1539
    %v1541 = vpop.f32.mrb[0].mxu0
    %1542 = vdwg.mxu0
    %v1543 = vsel %vm380, %v1462, -inf
    %1544 = vmax.xlane.f32.xlu0 %v1543
    %v1545 = vpop.xlane.xlu0 %1544
    %v1546 = vsel %vm380, %v1540, -inf
    %1547 = vmax.xlane.f32.xlu0 %v1546
    %v1548 = vpop.xlane.xlu0 %1547
    %v1549 = vsub.f32 %v1462, %v1545
    %v1550 = vsub.f32 %v1540, %v1548
    %v1551 = vmul.f32 %v1549, 1.442695
    %v1552 = vpow.pop %v1551
    %v1553 = vmul.f32 %v1550, 1.442695
    %v1554 = vpow.pop %v1553
    %v1555 = vsel %vm380, %v1552, 0.0
    %1556 = vadd.xlane.f32.xlu0 %v1555
    %v1557 = vpop.xlane.xlu0 %1556
    %v1558 = vsel %vm380, %v1554, 0.0
    %1559 = vadd.xlane.f32.xlu0 %v1558
    %v1560 = vpop.xlane.xlu0 %1559
    %v1561 = vrcp.pop %v1557
    %v1562 = vrcp.pop %v1560
    %v1563 = vmul.f32 %v1552, %v1561
    %v1564 = vmul.f32 %v1554, %v1562
    %1565 = vrot.lane.b32.xlu0 %v372, 104
    %v1566 = vpop.permute.xlu0 %1565
    %v1569 = vsel %vm380, %v1563, 0
    %1571 = vmatprep.subr.mxu0 0.0
    %1572 = vmatpush1.msra.mxu0 %v1566
    %1573 = vmatprep.subr.mxu0 0.0
    %1574 = vmatpush1.msra.mxu0 0.0
    %1575 = vmatprep.subr.mxu0 0.0
    %1576 = vmatpush1.msra.mxu0 0.0
    %1577 = vmatprep.subr.mxu0 0.0
    %1578 = vmatpush1.msra.mxu0 0.0
    %1579 = vmatprep.subr.mxu0 0.0
    %1580 = vmatpush1.msra.mxu0 0.0
    %1581 = vmatprep.subr.mxu0 0.0
    %1582 = vmatpush1.msra.mxu0 0.0
    %1583 = vmatprep.subr.mxu0 0.0
    %1584 = vmatpush1.msra.mxu0 0.0
    %1585 = vmatprep.subr.mxu0 0.0
    %1586 = vmatpush1.msra.mxu0 0.0
    %1587 = vmatprep.subr.mxu0 0.0
    %1588 = vmatpush1.msra.mxu0 0.0
    %1589 = vmatprep.subr.mxu0 0.0
    %1590 = vmatpush1.msra.mxu0 0.0
    %1591 = vmatprep.subr.mxu0 0.0
    %1592 = vmatpush1.msra.mxu0 0.0
    %1593 = vmatprep.subr.mxu0 0.0
    %1594 = vmatpush1.msra.mxu0 0.0
    %1595 = vmatprep.subr.mxu0 0.0
    %1596 = vmatpush1.msra.mxu0 0.0
    %1597 = vmatprep.subr.mxu0 0.0
    %1598 = vmatpush1.msra.mxu0 0.0
    %1599 = vmatprep.subr.mxu0 0.0
    %1600 = vmatpush1.msra.mxu0 0.0
    %1601 = vmatprep.subr.mxu0 0.0
    %1602 = vmatpush1.msra.mxu0 0.0
    %1603 = vmatprep.subr.mxu0 0.0
    %1604 = vmatpush1.msra.mxu0 0.0
    %1605 = vmatprep.subr.mxu0 0.0
    %1606 = vmatpush1.msra.mxu0 0.0
    %1607 = vmatprep.subr.mxu0 0.0
    %1608 = vmatpush1.msra.mxu0 0.0
    %1609 = vmatprep.subr.mxu0 0.0
    %1610 = vmatpush1.msra.mxu0 0.0
    %1611 = vmatprep.subr.mxu0 0.0
    %1612 = vmatpush1.msra.mxu0 0.0
    %1613 = vmatprep.subr.mxu0 0.0
    %1614 = vmatpush1.msra.mxu0 0.0
    %1615 = vmatprep.subr.mxu0 0.0
    %1616 = vmatpush1.msra.mxu0 0.0
    %1617 = vmatprep.subr.mxu0 0.0
    %1618 = vmatpush1.msra.mxu0 0.0
    %1619 = vmatprep.subr.mxu0 0.0
    %1620 = vmatpush1.msra.mxu0 0.0
    %1621 = vmatprep.subr.mxu0 0.0
    %1622 = vmatpush1.msra.mxu0 0.0
    %1623 = vmatprep.subr.mxu0 0.0
    %1624 = vmatpush1.msra.mxu0 0.0
    %1625 = vmatprep.subr.mxu0 0.0
    %1626 = vmatpush1.msra.mxu0 0.0
    %1627 = vmatprep.subr.mxu0 0.0
    %1628 = vmatpush1.msra.mxu0 0.0
    %1629 = vmatprep.subr.mxu0 0.0
    %1630 = vmatpush1.msra.mxu0 0.0
    %1631 = vmatprep.subr.mxu0 0.0
    %1632 = vmatpush1.msra.mxu0 0.0
    %1633 = vmatprep.subr.mxu0 0.0
    %1634 = vmatpush1.msra.mxu0 0.0
    %1635 = vmatprep.mubr.f32.mxu0 0.0
    %1636 = vmatmul.mubr.f32.gmra.mrb[0].mxu0 %v1569
    %v1637 = vpop.f32.mrb[0].mxu0
    %v1638 = vadd.f32 0.0, %v1637
    %v1639 = vpop.f32.mrb[0].mxu0
    %1640 = vdwg.mxu0
    %1641 = vrot.lane.b32.xlu0 %v377, 104
    %v1642 = vpop.permute.xlu0 %1641
    %v1645 = vsel %vm380, %v1564, 0
    %1647 = vmatprep.subr.mxu0 0.0
    %1648 = vmatpush1.msra.mxu0 %v1642
    %1649 = vmatprep.subr.mxu0 0.0
    %1650 = vmatpush1.msra.mxu0 0.0
    %1651 = vmatprep.subr.mxu0 0.0
    %1652 = vmatpush1.msra.mxu0 0.0
    %1653 = vmatprep.subr.mxu0 0.0
    %1654 = vmatpush1.msra.mxu0 0.0
    %1655 = vmatprep.subr.mxu0 0.0
    %1656 = vmatpush1.msra.mxu0 0.0
    %1657 = vmatprep.subr.mxu0 0.0
    %1658 = vmatpush1.msra.mxu0 0.0
    %1659 = vmatprep.subr.mxu0 0.0
    %1660 = vmatpush1.msra.mxu0 0.0
    %1661 = vmatprep.subr.mxu0 0.0
    %1662 = vmatpush1.msra.mxu0 0.0
    %1663 = vmatprep.subr.mxu0 0.0
    %1664 = vmatpush1.msra.mxu0 0.0
    %1665 = vmatprep.subr.mxu0 0.0
    %1666 = vmatpush1.msra.mxu0 0.0
    %1667 = vmatprep.subr.mxu0 0.0
    %1668 = vmatpush1.msra.mxu0 0.0
    %1669 = vmatprep.subr.mxu0 0.0
    %1670 = vmatpush1.msra.mxu0 0.0
    %1671 = vmatprep.subr.mxu0 0.0
    %1672 = vmatpush1.msra.mxu0 0.0
    %1673 = vmatprep.subr.mxu0 0.0
    %1674 = vmatpush1.msra.mxu0 0.0
    %1675 = vmatprep.subr.mxu0 0.0
    %1676 = vmatpush1.msra.mxu0 0.0
    %1677 = vmatprep.subr.mxu0 0.0
    %1678 = vmatpush1.msra.mxu0 0.0
    %1679 = vmatprep.subr.mxu0 0.0
    %1680 = vmatpush1.msra.mxu0 0.0
    %1681 = vmatprep.subr.mxu0 0.0
    %1682 = vmatpush1.msra.mxu0 0.0
    %1683 = vmatprep.subr.mxu0 0.0
    %1684 = vmatpush1.msra.mxu0 0.0
    %1685 = vmatprep.subr.mxu0 0.0
    %1686 = vmatpush1.msra.mxu0 0.0
    %1687 = vmatprep.subr.mxu0 0.0
    %1688 = vmatpush1.msra.mxu0 0.0
    %1689 = vmatprep.subr.mxu0 0.0
    %1690 = vmatpush1.msra.mxu0 0.0
    %1691 = vmatprep.subr.mxu0 0.0
    %1692 = vmatpush1.msra.mxu0 0.0
    %1693 = vmatprep.subr.mxu0 0.0
    %1694 = vmatpush1.msra.mxu0 0.0
    %1695 = vmatprep.subr.mxu0 0.0
    %1696 = vmatpush1.msra.mxu0 0.0
    %1697 = vmatprep.subr.mxu0 0.0
    %1698 = vmatpush1.msra.mxu0 0.0
    %1699 = vmatprep.subr.mxu0 0.0
    %1700 = vmatpush1.msra.mxu0 0.0
    %1701 = vmatprep.subr.mxu0 0.0
    %1702 = vmatpush1.msra.mxu0 0.0
    %1703 = vmatprep.subr.mxu0 0.0
    %1704 = vmatpush1.msra.mxu0 0.0
    %1705 = vmatprep.subr.mxu0 0.0
    %1706 = vmatpush1.msra.mxu0 0.0
    %1707 = vmatprep.subr.mxu0 0.0
    %1708 = vmatpush1.msra.mxu0 0.0
    %1709 = vmatprep.subr.mxu0 0.0
    %1710 = vmatpush1.msra.mxu0 0.0
    %1711 = vmatprep.mubr.f32.mxu0 0.0
    %1712 = vmatmul.mubr.f32.gmra.mrb[0].mxu0 %v1645
    %v1713 = vpop.f32.mrb[0].mxu0
    %v1714 = vadd.f32 0.0, %v1713
    %v1715 = vpop.f32.mrb[0].mxu0
    %1716 = vdwg.mxu0
    %1719 = vrot.lane.b32.xlu0 %v1638, 24
    %v1720 = vpop.permute.xlu0 %1719
    %1721 = vrot.lane.b32.xlu0 %v1714, 24
    %v1722 = vpop.permute.xlu0 %1721
    %vm1725 = vcmask 261312
    %1726 = vst.msk [vmem:[#allocation2] sm:$0xff] %vm1725, %v1720
    %1727 = vst.msk [vmem:[#allocation2 + $0x8] sm:$0xff] %vm1725, %v1722
    %v1728 = vld [vmem:[#allocation2] sm:$0xff]
    %v1729 = vld [vmem:[#allocation2 + $0x8] sm:$0xff]
    %v1730 = vld [vmem:[#allocation14] sm:$0xff]
    %v1731 = vld [vmem:[#allocation14 + $0x8] sm:$0xff]
    %v1732 = vld [vmem:[#allocation14 + $0x10] sm:$0xff]
    %v1733 = vld [vmem:[#allocation14 + $0x18] sm:$0xff]
    %vm1734 = vcmask 261120
    %v1736 = vsel %vm1734, %v1728, 0
    %v1739 = vsel %vm1734, %v1729, 0
    %1741 = vmatprep.subr.mxu0 0.0
    %1742 = vmatpush1.msra.mxu0 %v1730
    %1743 = vmatprep.subr.mxu0 0.0
    %1744 = vmatpush1.msra.mxu0 %v1731
    %1745 = vmatprep.subr.mxu0 0.0
    %1746 = vmatpush1.msra.mxu0 %v1732
    %1747 = vmatprep.subr.mxu0 0.0
    %1748 = vmatpush1.msra.mxu0 %v1733
    %1749 = vmatprep.subr.mxu0 0.0
    %1750 = vmatpush1.msra.mxu0 0.0
    %1751 = vmatprep.subr.mxu0 0.0
    %1752 = vmatpush1.msra.mxu0 0.0
    %1753 = vmatprep.subr.mxu0 0.0
    %1754 = vmatpush1.msra.mxu0 0.0
    %1755 = vmatprep.subr.mxu0 0.0
    %1756 = vmatpush1.msra.mxu0 0.0
    %1757 = vmatprep.subr.mxu0 0.0
    %1758 = vmatpush1.msra.mxu0 0.0
    %1759 = vmatprep.subr.mxu0 0.0
    %1760 = vmatpush1.msra.mxu0 0.0
    %1761 = vmatprep.subr.mxu0 0.0
    %1762 = vmatpush1.msra.mxu0 0.0
    %1763 = vmatprep.subr.mxu0 0.0
    %1764 = vmatpush1.msra.mxu0 0.0
    %1765 = vmatprep.subr.mxu0 0.0
    %1766 = vmatpush1.msra.mxu0 0.0
    %1767 = vmatprep.subr.mxu0 0.0
    %1768 = vmatpush1.msra.mxu0 0.0
    %1769 = vmatprep.subr.mxu0 0.0
    %1770 = vmatpush1.msra.mxu0 0.0
    %1771 = vmatprep.subr.mxu0 0.0
    %1772 = vmatpush1.msra.mxu0 0.0
    %1773 = vmatprep.subr.mxu0 0.0
    %1774 = vmatpush1.msra.mxu0 0.0
    %1775 = vmatprep.subr.mxu0 0.0
    %1776 = vmatpush1.msra.mxu0 0.0
    %1777 = vmatprep.subr.mxu0 0.0
    %1778 = vmatpush1.msra.mxu0 0.0
    %1779 = vmatprep.subr.mxu0 0.0
    %1780 = vmatpush1.msra.mxu0 0.0
    %1781 = vmatprep.subr.mxu0 0.0
    %1782 = vmatpush1.msra.mxu0 0.0
    %1783 = vmatprep.subr.mxu0 0.0
    %1784 = vmatpush1.msra.mxu0 0.0
    %1785 = vmatprep.subr.mxu0 0.0
    %1786 = vmatpush1.msra.mxu0 0.0
    %1787 = vmatprep.subr.mxu0 0.0
    %1788 = vmatpush1.msra.mxu0 0.0
    %1789 = vmatprep.subr.mxu0 0.0
    %1790 = vmatpush1.msra.mxu0 0.0
    %1791 = vmatprep.subr.mxu0 0.0
    %1792 = vmatpush1.msra.mxu0 0.0
    %1793 = vmatprep.subr.mxu0 0.0
    %1794 = vmatpush1.msra.mxu0 0.0
    %1795 = vmatprep.subr.mxu0 0.0
    %1796 = vmatpush1.msra.mxu0 0.0
    %1797 = vmatprep.subr.mxu0 0.0
    %1798 = vmatpush1.msra.mxu0 0.0
    %1799 = vmatprep.subr.mxu0 0.0
    %1800 = vmatpush1.msra.mxu0 0.0
    %1801 = vmatprep.subr.mxu0 0.0
    %1802 = vmatpush1.msra.mxu0 0.0
    %1803 = vmatprep.subr.mxu0 0.0
    %1804 = vmatpush1.msra.mxu0 0.0
    %1805 = vmatprep.mubr.f32.mxu0 0.0
    %1806 = vmatmul.mubr.f32.gmra.mrb[0].mxu0 %v1736
    %v1807 = vpop.f32.mrb[0].mxu0
    %v1808 = vadd.f32 0.0, %v1807
    %v1809 = vpop.f32.mrb[0].mxu0
    %1810 = vmatprep.mubr.f32.mxu0 0.0
    %1811 = vmatmul.mubr.f32.gmra.mrb[0].mxu0 %v1739
    %v1812 = vpop.f32.mrb[0].mxu0
    %v1813 = vadd.f32 0.0, %v1812
    %v1814 = vpop.f32.mrb[0].mxu0
    %1815 = vdwg.mxu0
    %1816 = vst.msk [vmem:[#allocation15] sm:$0xff] %vm1734, %v1808
    %1817 = vst.msk [vmem:[#allocation15 + $0x8] sm:$0xff] %vm1734, %v1813
    // Predicated region
    $region58: #{tpu_custom_call.1} parent=1 // pred_check
      _
    $region59: #{tpu_custom_call.1} parent=1 // pred_check_branch
      %1819 = sbr.rel (0) target = $region61
    $region60: #{tpu_custom_call.1} parent=1 // pred_region
      %s1821 = ssub.s32 256, 256
      %1822 = vsyncadd [#allocation5], %s1821
      %s1823 = sshll.u32 [#allocation15], 4
      %s1824 = int_to_ptr.vmem [resolvable:$true] %s1823
      %1829 = dma.vmem_to_hbm [thread:$0]  %s1824, 256, %s7, [#allocation5], 128, 128, 8
    $region61: #{tpu_custom_call.1} parent=1 // pred_fallthru
      _
    // Predicated region
    $region62: #{tpu_custom_call.1} parent=1 // pred_check
      _
    $region63: #{tpu_custom_call.1} parent=1 // pred_check_branch
      %1831 = sbr.rel (0) target = $region65
    $region64: #{tpu_custom_call.1} parent=1 // pred_region
      %1832 = dma.done [#allocation5], 256
    $region65: #{tpu_custom_call.1} parent=1 // pred_fallthru
      _
    %1833 = vsyncpa [#allocation4], 1
    %1834 = vsyncpa [#allocation7], 1
    %1835 = vsyncpa [#allocation10], 1
    %1836 = vsyncpa [#allocation13], 1
    %1837 = vsyncpa [#allocation5], 1

</llo_original>
